<compile_context>
chip_gen: v5e
topology: v5e:2x2
jax: 0.10.0
libtpu: 0.0.40
codegen_flags: <defaults>
</compile_context>

<pallas_src>
import math
from functools import partial

import jax
import jax.numpy as jnp
from jax import lax
from jax.experimental import pallas as pl
from jax.experimental.pallas import tpu as pltpu

_LANE = 128
_NEG_INF = -1e30   # finite "-inf": avoids inf-inf NaNs; exp() underflows to 0


# --------------------------------------------------------------------------- #
# helpers
# --------------------------------------------------------------------------- #
def _round_up(n, m):
    return ((n + m - 1) // m) * m


def _pad2(a, rows, cols):
    pr, pc = rows - a.shape[0], cols - a.shape[1]
    if pr == 0 and pc == 0:
        return a
    return jnp.pad(a, ((0, pr), (0, pc)))


def _vmem_limit(requested_bytes):
    """Clamp a requested VMEM budget to this chip's physical VMEM (v7x: 64 MiB)."""
    try:
        cap = int(pltpu.get_tpu_info().vmem_capacity_bytes)
    except Exception:
        cap = 64 * 2 ** 20            # conservative default (v7x physical VMEM)
    cap = (cap * 7) // 8              # headroom for Mosaic-internal scratch
    return int(max(min(int(requested_bytes), cap), min(32 * 2 ** 20, cap)))


# --------------------------------------------------------------------------- #
# kernel 1: fused Q|K|V projection (scale pre-folded into wq/bq)
# --------------------------------------------------------------------------- #
def _qkv_proj_kernel(x_ref, wqkv_ref, bqkv_ref, q_ref, k_ref, v_ref, *,
                     d_q, d_k, compute_dtype):
    qkv = jnp.dot(x_ref[...].astype(compute_dtype), wqkv_ref[...],
                  preferred_element_type=jnp.float32) + bqkv_ref[...]
    q_ref[...] = qkv[:, :d_q].astype(q_ref.dtype)
    k_ref[...] = qkv[:, d_q:d_q + d_k].astype(k_ref.dtype)
    v_ref[...] = qkv[:, d_q + d_k:].astype(v_ref.dtype)


# --------------------------------------------------------------------------- #
# kernel 2: flash attention (online softmax) + residual
# --------------------------------------------------------------------------- #
def _flash_attn_kernel(*refs, emit_attn, has_kbias, compute_dtype):
    it = iter(refs)
    q_ref = next(it)
    k_ref = next(it)
    v_ref = next(it)
    x_ref = next(it)
    kbias_ref = next(it) if has_kbias else None
    res_ref = next(it)
    attn_ref = next(it) if emit_attn else None
    m_scr = next(it)
    l_scr = next(it)
    acc_scr = next(it)
    p_scr = next(it) if emit_attn else None
    ms_scr = next(it) if emit_attn else None

    ki = pl.program_id(1)
    nk = pl.num_programs(1)
    tkv = k_ref.shape[0]

    @pl.when(ki == 0)
    def _init():
        m_scr[...] = jnp.full(m_scr.shape, _NEG_INF, m_scr.dtype)
        l_scr[...] = jnp.zeros(l_scr.shape, l_scr.dtype)
        acc_scr[...] = jnp.zeros(acc_scr.shape, acc_scr.dtype)

    # scores: contract last dims directly (no explicit k.T through the XLU);
    # the 1/sqrt(d_internal) scale is already folded into Q.
    s = lax.dot_general(q_ref[...], k_ref[...], (((1,), (1,)), ((), ())),
                        preferred_element_type=jnp.float32)
    if has_kbias:                      # additive -inf bias on padded key cols
        s = s + kbias_ref[...]

    # online softmax accumulation
    m_prev = m_scr[...]
    m_new = jnp.maximum(m_prev, jnp.max(s, axis=-1, keepdims=True))
    alpha = jnp.exp(m_prev - m_new)
    p = jnp.exp(s - m_new)             # unnormalized probabilities (<= 1)
    l_new = alpha * l_scr[...] + jnp.sum(p, axis=-1, keepdims=True)
    acc_new = alpha * acc_scr[...] + jnp.dot(
        p.astype(compute_dtype), v_ref[...], preferred_element_type=jnp.float32)
    m_scr[...] = m_new
    l_scr[...] = l_new
    acc_scr[...] = acc_new

    if emit_attn:
        # stash p (compute dtype) + the running max of this step; finalize only
        # needs a rescale, never a second exp pass over the (tq, T) strip.
        p_scr[ki] = p.astype(p_scr.dtype)
        ms_scr[ki] = m_new

    @pl.when(ki == nk - 1)
    def _finalize():
        r = pl.reciprocal(l_new, approx=True)     # EUP slot
        inv_l = r * (2.0 - l_new * r)             # one Newton step -> ~f32 exact
        res_ref[...] = (x_ref[...] + acc_new * inv_l).astype(res_ref.dtype)

        if emit_attn:
            # static unroll over kv tiles: exp over (tq,1) + one multiply/store
            # per tile (lane-dense static slices of the resident attn block).
            for j in range(p_scr.shape[0]):
                corr = jnp.exp(ms_scr[j] - m_new) * inv_l
                attn_ref[:, j * tkv:(j + 1) * tkv] = (
                    p_scr[j].astype(jnp.float32) * corr).astype(attn_ref.dtype)


# --------------------------------------------------------------------------- #
# kernel 3: feed-forward (w1 -> GELU -> w2) + residual, Di contraction tiled
# --------------------------------------------------------------------------- #
def _ffn_kernel(res_ref, w1_ref, b1_ref, w2_ref, b2_ref, z_ref, acc_ref, *,
                compute_dtype):
    j = pl.program_id(1)
    nj = pl.num_programs(1)

    @pl.when(j == 0)
    def _init():
        acc_ref[...] = jnp.zeros_like(acc_ref)

    res = res_ref[...]
    h = jnp.dot(res.astype(compute_dtype), w1_ref[...],
                preferred_element_type=jnp.float32) + b1_ref[...]
    # exact (erf-based) GELU, matching nn.GELU() default
    h = 0.5 * h * (1.0 + lax.erf(h * (1.0 / math.sqrt(2.0))))
    acc_ref[...] += jnp.dot(h.astype(compute_dtype), w2_ref[...],
                            preferred_element_type=jnp.float32)

    @pl.when(j == nj - 1)
    def _final():
        z_ref[...] = (acc_ref[...] + b2_ref[...] + res).astype(z_ref.dtype)


# --------------------------------------------------------------------------- #
# wrapper
# --------------------------------------------------------------------------- #
@partial(jax.jit, static_argnums=(2,),
         static_argnames=("tq", "tkv", "compute_dtype", "return_attn",
                          "attn_dtype"))
def transformer_layer(x, params, d_internal, *, tq=None, tkv=None,
                      compute_dtype=jnp.bfloat16, return_attn=True,
                      attn_dtype=jnp.float32):
    """x: (T, d_model) f32. Returns (z, attn) like the PyTorch module
    (or just z when return_attn=False).

    compute_dtype only affects MXU operands; accumulation, softmax, GELU and
    residual math stay f32. attn_dtype=bfloat16 halves the O(T^2) writeback."""
    T, d_model = x.shape

    # 256-wide tiles fill the 256x256 MXU on v6e/v7x once T is large; 128 keeps
    # padding small for short sequences (and nq>=2 spans both v7x TensorCores).
    if tq is None:
        tq = 256 if T > 512 else 128
    if tkv is None:
        tkv = tq
    assert tq % _LANE == 0 and tkv % _LANE == 0

    Dm = _round_up(d_model, _LANE)
    Di = _round_up(d_internal, _LANE)
    T_pad = _round_up(T, math.lcm(tq, tkv))
    nq, nk = T_pad // tq, T_pad // tkv
    scale = 1.0 / math.sqrt(d_internal)
    wbytes = jnp.dtype(compute_dtype).itemsize
    abytes = jnp.dtype(attn_dtype).itemsize

    # ---- zero-pad to 128-aligned lane dims; fold the score scale into wq/bq
    x_p = _pad2(x.astype(jnp.float32), T_pad, Dm)
    wqkv = jnp.concatenate(
        [_pad2(params["wq"] * scale, Dm, Di),
         _pad2(params["wk"], Dm, Di),
         _pad2(params["wv"], Dm, Dm)], axis=1).astype(compute_dtype)
    bqkv = jnp.concatenate(
        [_pad2(params["bq"] * scale, 1, Di),
         _pad2(params["bk"], 1, Di),
         _pad2(params["bv"], 1, Dm)], axis=1).astype(jnp.float32)
    w1 = _pad2(params["w1"], Dm, Di).astype(compute_dtype)
    b1 = _pad2(params["b1"], 1, Di).astype(jnp.float32)
    w2 = _pad2(params["w2"], Di, Dm).astype(compute_dtype)
    b2 = _pad2(params["b2"], 1, Dm).astype(jnp.float32)

    tr = tq
    nr = T_pad // tr
    Dqkv = 2 * Di + Dm

    # ----------------------------------------------------------------- #
    # 1) Q|K|V projection (hoisted out of the (query, kv) grid)
    # ----------------------------------------------------------------- #
    # NOTE: wqkv/bqkv have constant index maps so they are DMA'd only once;
    # they could additionally be single-buffered via pipeline_mode, but they
    # are no longer resident in the attention kernel at all, which was the
    # dominant VMEM issue.
    qkv_est = (2 * tr * Dm * 4 + 2 * tr * Dqkv * wbytes
               + 2 * (Dm * Dqkv * wbytes + Dqkv * 4))
    q_p, k_p, v_p = pl.pallas_call(
        partial(_qkv_proj_kernel, d_q=Di, d_k=Di, compute_dtype=compute_dtype),
        grid_spec=pltpu.PrefetchScalarGridSpec(
            num_scalar_prefetch=0,
            grid=(nr,),
            in_specs=[
                pl.BlockSpec((tr, Dm), lambda i: (i, 0)),
                pl.BlockSpec((Dm, Dqkv), lambda i: (0, 0)),
                pl.BlockSpec((1, Dqkv), lambda i: (0, 0)),
            ],
            out_specs=[
                pl.BlockSpec((tr, Di), lambda i: (i, 0)),
                pl.BlockSpec((tr, Di), lambda i: (i, 0)),
                pl.BlockSpec((tr, Dm), lambda i: (i, 0)),
            ],
        ),
        out_shape=[
            jax.ShapeDtypeStruct((T_pad, Di), compute_dtype),
            jax.ShapeDtypeStruct((T_pad, Di), compute_dtype),
            jax.ShapeDtypeStruct((T_pad, Dm), compute_dtype),
        ],
        compiler_params=pltpu.CompilerParams(
            dimension_semantics=("parallel",),
            vmem_limit_bytes=_vmem_limit(2 * qkv_est),
        ),
    )(x_p, wqkv, bqkv)

    # ----------------------------------------------------------------- #
    # 2) flash attention + residual
    # ----------------------------------------------------------------- #
    flash_inputs = [q_p, k_p, v_p, x_p]
    in_specs = [
        pl.BlockSpec((tq, Di), lambda qi, ki: (qi, 0)),    # Q (pre-scaled)
        pl.BlockSpec((tkv, Di), lambda qi, ki: (ki, 0)),   # K
        pl.BlockSpec((tkv, Dm), lambda qi, ki: (ki, 0)),   # V
        pl.BlockSpec((tq, Dm), lambda qi, ki: (qi, 0)),    # x (residual)
    ]
    has_kbias = T_pad > T
    if has_kbias:
        kbias = jnp.where(jnp.arange(T_pad) < T, 0.0, _NEG_INF)
        kbias = kbias.reshape(1, T_pad).astype(jnp.float32)
        flash_inputs.append(kbias)
        in_specs.append(pl.BlockSpec((1, tkv), lambda qi, ki: (0, ki)))

    out_shape = [jax.ShapeDtypeStruct((T_pad, Dm), jnp.float32)]
    out_specs = [pl.BlockSpec((tq, Dm), lambda qi, ki: (qi, 0))]
    scratch = [
        pltpu.VMEM((tq, 1), jnp.float32),    # running max
        pltpu.VMEM((tq, 1), jnp.float32),    # running denom
        pltpu.VMEM((tq, Dm), jnp.float32),   # attention-output accumulator
    ]
    if return_attn:
        out_shape.append(jax.ShapeDtypeStruct((T_pad, T_pad), attn_dtype))
        out_specs.append(pl.BlockSpec((tq, T_pad), lambda qi, ki: (qi, 0)))
        scratch += [
            pltpu.VMEM((nk, tq, tkv), compute_dtype),  # per-step unnormalized p
            pltpu.VMEM((nk, tq, 1), jnp.float32),      # per-step running max
        ]

    flash_est = (2 * tq * Di * wbytes + 2 * tkv * Di * wbytes
                 + 2 * tkv * Dm * wbytes + 2 * tq * Dm * 4
                 + (2 * tkv * 4 if has_kbias else 0)
                 + 2 * tq * Dm * 4
                 + (tq * Dm + 2 * tq) * 4)
    if return_attn:
        flash_est += (2 * tq * T_pad * abytes
                      + nk * tq * tkv * wbytes + nk * tq * _LANE * 4)

    flash_out = pl.pallas_call(
        partial(_flash_attn_kernel, emit_attn=return_attn,
                has_kbias=has_kbias, compute_dtype=compute_dtype),
        grid_spec=pltpu.PrefetchScalarGridSpec(
            num_scalar_prefetch=0,
            grid=(nq, nk),
            in_specs=in_specs,
            out_specs=out_specs,
            scratch_shapes=scratch,
        ),
        out_shape=out_shape,
        compiler_params=pltpu.CompilerParams(
            dimension_semantics=("parallel", "arbitrary"),
            vmem_limit_bytes=_vmem_limit(2 * flash_est),
        ),
    )(*flash_inputs)
    if return_attn:
        res_p, attn_p = flash_out
    else:
        res_p = flash_out[0]

    # ----------------------------------------------------------------- #
    # 3) feed-forward + residual (w1/w2 streamed over the Di contraction)
    # ----------------------------------------------------------------- #
    if Di % 512 == 0:
        tdi = 512
    elif Di % 256 == 0:
        tdi = 256
    else:
        tdi = 128
    ndi = Di // tdi

    ffn_est = (2 * tr * Dm * 4
               + 2 * (Dm * tdi + tdi * Dm) * wbytes + 2 * (tdi + Dm) * 4
               + 2 * tr * Dm * 4 + tr * Dm * 4)
    z_p = pl.pallas_call(
        partial(_ffn_kernel, compute_dtype=compute_dtype),
        grid_spec=pltpu.PrefetchScalarGridSpec(
            num_scalar_prefetch=0,
            grid=(nr, ndi),
            in_specs=[
                pl.BlockSpec((tr, Dm), lambda i, j: (i, 0)),   # res
                pl.BlockSpec((Dm, tdi), lambda i, j: (0, j)),  # w1 tile
                pl.BlockSpec((1, tdi), lambda i, j: (0, j)),   # b1 tile
                pl.BlockSpec((tdi, Dm), lambda i, j: (j, 0)),  # w2 tile
                pl.BlockSpec((1, Dm), lambda i, j: (0, 0)),    # b2
            ],
            out_specs=pl.BlockSpec((tr, Dm), lambda i, j: (i, 0)),
            scratch_shapes=[pltpu.VMEM((tr, Dm), jnp.float32)],
        ),
        out_shape=jax.ShapeDtypeStruct((T_pad, Dm), jnp.float32),
        compiler_params=pltpu.CompilerParams(
            dimension_semantics=("parallel", "arbitrary"),
            vmem_limit_bytes=_vmem_limit(2 * ffn_est),
        ),
    )(res_p, w1, b1, w2, b2)

    z = z_p[:T, :d_model]
    if return_attn:
        return z, attn_p[:T, :T]
    return z


# --------------------------------------------------------------------------- #
# parameters / pure-JAX reference
# --------------------------------------------------------------------------- #
def init_params(key, d_model, d_internal):
    """Mirrors the PyTorch module: xavier_uniform_ weights, default Linear bias.
    Weights stored as [in, out] for x @ W."""
    def xavier(k, fan_in, fan_out):
        bound = math.sqrt(6.0 / (fan_in + fan_out))
        return jax.random.uniform(k, (fan_in, fan_out), jnp.float32, -bound, bound)

    def bias(k, fan_in, fan_out):
        bound = 1.0 / math.sqrt(fan_in)
        return jax.random.uniform(k, (1, fan_out), jnp.float32, -bound, bound)

    ks = jax.random.split(key, 10)
    return {
        "wq": xavier(ks[0], d_model, d_internal), "bq": bias(ks[1], d_model, d_internal),
        "wk": xavier(ks[2], d_model, d_internal), "bk": bias(ks[3], d_model, d_internal),
        "wv": xavier(ks[4], d_model, d_model),    "bv": bias(ks[5], d_model, d_model),
        "w1": xavier(ks[6], d_model, d_internal), "b1": bias(ks[7], d_model, d_internal),
        "w2": xavier(ks[8], d_internal, d_model), "b2": bias(ks[9], d_internal, d_model),
    }


def reference_forward(x, params, d_internal):
    """Pure-JAX reference of the PyTorch forward."""
    q = x @ params["wq"] + params["bq"]
    k = x @ params["wk"] + params["bk"]
    v = x @ params["wv"] + params["bv"]
    scores = (q @ k.T) / math.sqrt(d_internal)
    attn = jax.nn.softmax(scores, axis=-1)
    res = x + attn @ v
    h = res @ params["w1"] + params["b1"]
    h = jax.nn.gelu(h, approximate=False)
    feed = h @ params["w2"] + params["b2"]
    return feed + res, attn


# --------------------------------------------------------------------------- #
# self-test
# --------------------------------------------------------------------------- #
if __name__ == "__main__":
    key = jax.random.PRNGKey(0)
    kx, kp, kx2, kp2 = jax.random.split(key, 4)

    # --- small shape from the module docstring (seq=8, d_model=32, d_internal=16)
    T, d_model, d_internal = 8, 32, 16
    x = jax.random.normal(kx, (T, d_model), jnp.float32)
    params = init_params(kp, d_model, d_internal)
    z_ref, attn_ref = reference_forward(x, params, d_internal)

    # default path: bf16 MXU operands, f32 accumulation / elementwise
    z, attn = transformer_layer(x, params, d_internal)
    jax.block_until_ready((z, attn))
    assert z.shape == (T, d_model) and attn.shape == (T, T)
    assert bool(jnp.all(jnp.isfinite(z))) and bool(jnp.all(jnp.isfinite(attn)))
    assert jnp.allclose(z, z_ref, atol=2e-1, rtol=1e-1)
    assert jnp.allclose(attn, attn_ref, atol=5e-2, rtol=5e-2)

    # strict f32 MXU-operand path
    z32, attn32 = transformer_layer(x, params, d_internal,
                                    compute_dtype=jnp.float32)
    jax.block_until_ready((z32, attn32))
    assert jnp.allclose(z32, z_ref, atol=1e-4, rtol=1e-4)
    assert jnp.allclose(attn32, attn_ref, atol=1e-4, rtol=1e-4)

    # z-only path (drops the O(T^2) attention writeback entirely)
    z_only = transformer_layer(x, params, d_internal,
                               compute_dtype=jnp.float32, return_attn=False)
    jax.block_until_ready(z_only)
    assert jnp.allclose(z_only, z_ref, atol=1e-4, rtol=1e-4)

    # --- non-aligned, multi-tile shape: exercises the (query, kv) grid,
    #     padding, key masking and the FFN accumulator (T_pad=256 -> grid (2,2))
    T2, dm2, di2 = 200, 48, 40
    x2 = jax.random.normal(kx2, (T2, dm2), jnp.float32)
    params2 = init_params(kp2, dm2, di2)
    z2_ref, attn2_ref = reference_forward(x2, params2, di2)
    z2, attn2 = transformer_layer(x2, params2, di2, compute_dtype=jnp.float32)
    jax.block_until_ready((z2, attn2))
    assert z2.shape == (T2, dm2) and attn2.shape == (T2, T2)
    assert jnp.allclose(z2, z2_ref, atol=1e-4, rtol=1e-4)
    assert jnp.allclose(attn2, attn2_ref, atol=1e-4, rtol=1e-4)

    print("KERNEL_OK")
</pallas_src>

<mosaic_0001>
module attributes {stable_mosaic.version = 11 : i64} {
  func.func @_qkv_proj_kernel(%arg0: i32, %arg1: memref<128x128xf32, #tpu.memory_space<vmem>>, %arg2: memref<128x384xbf16, #tpu.memory_space<vmem>>, %arg3: memref<1x384xf32, #tpu.memory_space<vmem>>, %arg4: memref<128x128xbf16, #tpu.memory_space<vmem>>, %arg5: memref<128x128xbf16, #tpu.memory_space<vmem>>, %arg6: memref<128x128xbf16, #tpu.memory_space<vmem>>) attributes {dimension_semantics = [#tpu.dimension_semantics<parallel>], iteration_bounds = array<i64: 1>, scalar_prefetch = 0 : i64, scratch_operands = 0 : i64, tpu.core_type = #tpu.core_type<tc>, window_params = [{transform_indices = @transform_0, window_bounds = array<i64: 128, 128>}, {pipeline_mode = #tpu.pipeline_mode<synchronous>, transform_indices = @transform_1, window_bounds = array<i64: 128, 384>}, {pipeline_mode = #tpu.pipeline_mode<synchronous>, transform_indices = @transform_2, window_bounds = array<i64: 1, 384>}, {transform_indices = @transform_3, window_bounds = array<i64: 128, 128>}, {transform_indices = @transform_4, window_bounds = array<i64: 128, 128>}, {transform_indices = @transform_5, window_bounds = array<i64: 128, 128>}]} {
    %c0 = arith.constant 0 : index
    %c0_0 = arith.constant 0 : index
    %0 = vector.load %arg1[%c0, %c0_0] : memref<128x128xf32, #tpu.memory_space<vmem>>, vector<128x128xf32>
    %1 = arith.truncf %0 : vector<128x128xf32> to vector<128x128xbf16>
    %c0_1 = arith.constant 0 : index
    %c0_2 = arith.constant 0 : index
    %2 = vector.load %arg2[%c0_1, %c0_2] : memref<128x384xbf16, #tpu.memory_space<vmem>>, vector<128x384xbf16>
    %cst = arith.constant dense<0.000000e+00> : vector<128x384xf32>
    %3 = tpu.matmul %1, %2, %cst {dimension_numbers = #tpu.dot_dimension_numbers<[1], [0], [0], [1], [0, 0, 1, 1], [], []>} : vector<128x128xbf16>, vector<128x384xbf16>, vector<128x384xf32> -> vector<128x384xf32>
    %c0_3 = arith.constant 0 : index
    %c0_4 = arith.constant 0 : index
    %4 = vector.load %arg3[%c0_3, %c0_4] : memref<1x384xf32, #tpu.memory_space<vmem>>, vector<1x384xf32>
    %5 = vector.broadcast %4 : vector<1x384xf32> to vector<128x384xf32>
    %6 = arith.addf %3, %5 : vector<128x384xf32>
    %7 = vector.extract_strided_slice %6 {offsets = [0, 0], sizes = [128, 128], strides = [1, 1]} : vector<128x384xf32> to vector<128x128xf32>
    %8 = arith.truncf %7 : vector<128x128xf32> to vector<128x128xbf16>
    %c0_5 = arith.constant 0 : index
    %c0_6 = arith.constant 0 : index
    %9 = vector.load %arg4[%c0_5, %c0_6] : memref<128x128xbf16, #tpu.memory_space<vmem>>, vector<128x128xbf16>
    tpu.vector_store %arg4[%c0_5, %c0_6], %8 {strides = array<i32>} : memref<128x128xbf16, #tpu.memory_space<vmem>>, vector<128x128xbf16>,
    %10 = vector.extract_strided_slice %6 {offsets = [0, 128], sizes = [128, 128], strides = [1, 1]} : vector<128x384xf32> to vector<128x128xf32>
    %11 = arith.truncf %10 : vector<128x128xf32> to vector<128x128xbf16>
    %c0_7 = arith.constant 0 : index
    %c0_8 = arith.constant 0 : index
    %12 = vector.load %arg5[%c0_7, %c0_8] : memref<128x128xbf16, #tpu.memory_space<vmem>>, vector<128x128xbf16>
    tpu.vector_store %arg5[%c0_7, %c0_8], %11 {strides = array<i32>} : memref<128x128xbf16, #tpu.memory_space<vmem>>, vector<128x128xbf16>,
    %13 = vector.extract_strided_slice %6 {offsets = [0, 256], sizes = [128, 128], strides = [1, 1]} : vector<128x384xf32> to vector<128x128xf32>
    %14 = arith.truncf %13 : vector<128x128xf32> to vector<128x128xbf16>
    %c0_9 = arith.constant 0 : index
    %c0_10 = arith.constant 0 : index
    %15 = vector.load %arg6[%c0_9, %c0_10] : memref<128x128xbf16, #tpu.memory_space<vmem>>, vector<128x128xbf16>
    tpu.vector_store %arg6[%c0_9, %c0_10], %14 {strides = array<i32>} : memref<128x128xbf16, #tpu.memory_space<vmem>>, vector<128x128xbf16>,
    return
  }
  func.func @transform_0(%arg0: i32) -> (i32, i32) {
    %c0_i32 = arith.constant 0 : i32
    %c0_i32_0 = arith.constant 0 : i32
    return %arg0, %c0_i32 : i32, i32
  }
  func.func @transform_1(%arg0: i32) -> (i32, i32) {
    %c0_i32 = arith.constant 0 : i32
    %c0_i32_0 = arith.constant 0 : i32
    %c0_i32_1 = arith.constant 0 : i32
    return %c0_i32, %c0_i32_0 : i32, i32
  }
  func.func @transform_2(%arg0: i32) -> (i32, i32) {
    %c0_i32 = arith.constant 0 : i32
    %c0_i32_0 = arith.constant 0 : i32
    %c0_i32_1 = arith.constant 0 : i32
    return %c0_i32, %c0_i32_0 : i32, i32
  }
  func.func @transform_3(%arg0: i32) -> (i32, i32) {
    %c0_i32 = arith.constant 0 : i32
    %c0_i32_0 = arith.constant 0 : i32
    return %arg0, %c0_i32 : i32, i32
  }
  func.func @transform_4(%arg0: i32) -> (i32, i32) {
    %c0_i32 = arith.constant 0 : i32
    %c0_i32_0 = arith.constant 0 : i32
    return %arg0, %c0_i32 : i32, i32
  }
  func.func @transform_5(%arg0: i32) -> (i32, i32) {
    %c0_i32 = arith.constant 0 : i32
    %c0_i32_0 = arith.constant 0 : i32
    return %arg0, %c0_i32 : i32, i32
  }
}

module attributes {stable_mosaic.version = 11 : i64} {
  func.func @_flash_attn_kernel(%arg0: i32, %arg1: i32, %arg2: memref<128x128xbf16, #tpu.memory_space<vmem>>, %arg3: memref<128x128xbf16, #tpu.memory_space<vmem>>, %arg4: memref<128x128xbf16, #tpu.memory_space<vmem>>, %arg5: memref<128x128xf32, #tpu.memory_space<vmem>>, %arg6: memref<1x128xf32, #tpu.memory_space<vmem>>, %arg7: memref<128x128xf32, #tpu.memory_space<vmem>>, %arg8: memref<128x128xf32, #tpu.memory_space<vmem>>, %arg9: memref<128x1xf32, #tpu.memory_space<vmem>>, %arg10: memref<128x1xf32, #tpu.memory_space<vmem>>, %arg11: memref<128x128xf32, #tpu.memory_space<vmem>>, %arg12: memref<1x128x128xbf16, #tpu.memory_space<vmem>>, %arg13: memref<1x128x1xf32, #tpu.memory_space<vmem>>) attributes {dimension_semantics = [#tpu.dimension_semantics<parallel>, #tpu.dimension_semantics<arbitrary>], iteration_bounds = array<i64: 1, 1>, scalar_prefetch = 0 : i64, scratch_operands = 5 : i64, tpu.core_type = #tpu.core_type<tc>, window_params = [{transform_indices = @transform_0, window_bounds = array<i64: 128, 128>}, {transform_indices = @transform_1, window_bounds = array<i64: 128, 128>}, {transform_indices = @transform_2, window_bounds = array<i64: 128, 128>}, {transform_indices = @transform_3, window_bounds = array<i64: 128, 128>}, {transform_indices = @transform_4, window_bounds = array<i64: 1, 128>}, {transform_indices = @transform_5, window_bounds = array<i64: 128, 128>}, {transform_indices = @transform_6, window_bounds = array<i64: 128, 128>}]} {
    %c0_i32 = arith.constant 0 : i32
    %0 = arith.cmpi eq, %arg1, %c0_i32 : i32
    %1 = arith.extui %0 : i1 to i32
    %c0_i32_0 = arith.constant 0 : i32
    %2 = arith.cmpi ne, %1, %c0_i32_0 : i32
    scf.if %2 {
      %cst_29 = arith.constant -1.000000e+30 : f32
      %45 = vector.broadcast %cst_29 : f32 to vector<128x1xf32>
      %c0_30 = arith.constant 0 : index
      %c0_31 = arith.constant 0 : index
      %46 = vector.load %arg9[%c0_30, %c0_31] : memref<128x1xf32, #tpu.memory_space<vmem>>, vector<128x1xf32>
      tpu.vector_store %arg9[%c0_30, %c0_31], %45 {strides = array<i32>} : memref<128x1xf32, #tpu.memory_space<vmem>>, vector<128x1xf32>,
      %cst_32 = arith.constant 0.000000e+00 : f32
      %47 = vector.broadcast %cst_32 : f32 to vector<128x1xf32>
      %c0_33 = arith.constant 0 : index
      %c0_34 = arith.constant 0 : index
      %48 = vector.load %arg10[%c0_33, %c0_34] : memref<128x1xf32, #tpu.memory_space<vmem>>, vector<128x1xf32>
      tpu.vector_store %arg10[%c0_33, %c0_34], %47 {strides = array<i32>} : memref<128x1xf32, #tpu.memory_space<vmem>>, vector<128x1xf32>,
      %cst_35 = arith.constant 0.000000e+00 : f32
      %49 = vector.broadcast %cst_35 : f32 to vector<128x128xf32>
      %c0_36 = arith.constant 0 : index
      %c0_37 = arith.constant 0 : index
      %50 = vector.load %arg11[%c0_36, %c0_37] : memref<128x128xf32, #tpu.memory_space<vmem>>, vector<128x128xf32>
      tpu.vector_store %arg11[%c0_36, %c0_37], %49 {strides = array<i32>} : memref<128x128xf32, #tpu.memory_space<vmem>>, vector<128x128xf32>,
    } else {
    }
    %c0 = arith.constant 0 : index
    %c0_1 = arith.constant 0 : index
    %3 = vector.load %arg2[%c0, %c0_1] : memref<128x128xbf16, #tpu.memory_space<vmem>>, vector<128x128xbf16>
    %c0_2 = arith.constant 0 : index
    %c0_3 = arith.constant 0 : index
    %4 = vector.load %arg3[%c0_2, %c0_3] : memref<128x128xbf16, #tpu.memory_space<vmem>>, vector<128x128xbf16>
    %cst = arith.constant dense<0.000000e+00> : vector<128x128xf32>
    %5 = tpu.matmul %3, %4, %cst {dimension_numbers = #tpu.dot_dimension_numbers<[1], [1], [0], [0], [0, 0, 1, 0], [], []>} : vector<128x128xbf16>, vector<128x128xbf16>, vector<128x128xf32> -> vector<128x128xf32>
    %c0_4 = arith.constant 0 : index
    %c0_5 = arith.constant 0 : index
    %6 = vector.load %arg6[%c0_4, %c0_5] : memref<1x128xf32, #tpu.memory_space<vmem>>, vector<1x128xf32>
    %7 = vector.broadcast %6 : vector<1x128xf32> to vector<128x128xf32>
    %8 = arith.addf %5, %7 : vector<128x128xf32>
    %c0_6 = arith.constant 0 : index
    %c0_7 = arith.constant 0 : index
    %9 = vector.load %arg9[%c0_6, %c0_7] : memref<128x1xf32, #tpu.memory_space<vmem>>, vector<128x1xf32>
    %cst_8 = arith.constant dense<0xFF800000> : vector<128xf32>
    %10 = vector.multi_reduction <maximumf>, %8, %cst_8 [1] : vector<128x128xf32> to vector<128xf32>
    %11 = vector.shape_cast %10 : vector<128xf32> to vector<128x1xf32>
    %12 = arith.maximumf %9, %11 : vector<128x1xf32>
    %13 = arith.subf %9, %12 : vector<128x1xf32>
    %14 = math.exp %13 : vector<128x1xf32>
    %15 = vector.broadcast %12 : vector<128x1xf32> to vector<128x128xf32>
    %16 = arith.subf %8, %15 : vector<128x128xf32>
    %17 = math.exp %16 : vector<128x128xf32>
    %c0_9 = arith.constant 0 : index
    %c0_10 = arith.constant 0 : index
    %18 = vector.load %arg10[%c0_9, %c0_10] : memref<128x1xf32, #tpu.memory_space<vmem>>, vector<128x1xf32>
    %19 = arith.mulf %14, %18 : vector<128x1xf32>
    %cst_11 = arith.constant dense<0.000000e+00> : vector<128xf32>
    %20 = vector.multi_reduction <add>, %17, %cst_11 [1] : vector<128x128xf32> to vector<128xf32>
    %21 = vector.shape_cast %20 : vector<128xf32> to vector<128x1xf32>
    %22 = arith.addf %19, %21 : vector<128x1xf32>
    %c0_12 = arith.constant 0 : index
    %c0_13 = arith.constant 0 : index
    %23 = vector.load %arg11[%c0_12, %c0_13] : memref<128x128xf32, #tpu.memory_space<vmem>>, vector<128x128xf32>
    %24 = vector.broadcast %14 : vector<128x1xf32> to vector<128x128xf32>
    %25 = arith.mulf %24, %23 : vector<128x128xf32>
    %26 = arith.truncf %17 : vector<128x128xf32> to vector<128x128xbf16>
    %c0_14 = arith.constant 0 : index
    %c0_15 = arith.constant 0 : index
    %27 = vector.load %arg4[%c0_14, %c0_15] : memref<128x128xbf16, #tpu.memory_space<vmem>>, vector<128x128xbf16>
    %cst_16 = arith.constant dense<0.000000e+00> : vector<128x128xf32>
    %28 = tpu.matmul %26, %27, %cst_16 {dimension_numbers = #tpu.dot_dimension_numbers<[1], [0], [0], [1], [0, 0, 1, 1], [], []>} : vector<128x128xbf16>, vector<128x128xbf16>, vector<128x128xf32> -> vector<128x128xf32>
    %29 = arith.addf %25, %28 : vector<128x128xf32>
    %c0_17 = arith.constant 0 : index
    %c0_18 = arith.constant 0 : index
    %30 = vector.load %arg9[%c0_17, %c0_18] : memref<128x1xf32, #tpu.memory_space<vmem>>, vector<128x1xf32>
    tpu.vector_store %arg9[%c0_17, %c0_18], %12 {strides = array<i32>} : memref<128x1xf32, #tpu.memory_space<vmem>>, vector<128x1xf32>,
    %c0_19 = arith.constant 0 : index
    %c0_20 = arith.constant 0 : index
    %31 = vector.load %arg10[%c0_19, %c0_20] : memref<128x1xf32, #tpu.memory_space<vmem>>, vector<128x1xf32>
    tpu.vector_store %arg10[%c0_19, %c0_20], %22 {strides = array<i32>} : memref<128x1xf32, #tpu.memory_space<vmem>>, vector<128x1xf32>,
    %c0_21 = arith.constant 0 : index
    %c0_22 = arith.constant 0 : index
    %32 = vector.load %arg11[%c0_21, %c0_22] : memref<128x128xf32, #tpu.memory_space<vmem>>, vector<128x128xf32>
    tpu.vector_store %arg11[%c0_21, %c0_22], %29 {strides = array<i32>} : memref<128x128xf32, #tpu.memory_space<vmem>>, vector<128x128xf32>,
    %33 = arith.truncf %17 : vector<128x128xf32> to vector<128x128xbf16>
    %34 = arith.index_cast %arg1 : i32 to index
    %c0_23 = arith.constant 0 : index
    %c0_24 = arith.constant 0 : index
    %35 = vector.load %arg12[%34, %c0_23, %c0_24] : memref<1x128x128xbf16, #tpu.memory_space<vmem>>, vector<1x128x128xbf16>
    %36 = vector.shape_cast %35 : vector<1x128x128xbf16> to vector<128x128xbf16>
    %37 = vector.shape_cast %33 : vector<128x128xbf16> to vector<1x128x128xbf16>
    tpu.vector_store %arg12[%34, %c0_23, %c0_24], %37 {strides = array<i32>} : memref<1x128x128xbf16, #tpu.memory_space<vmem>>, vector<1x128x128xbf16>,
    %38 = arith.index_cast %arg1 : i32 to index
    %c0_25 = arith.constant 0 : index
    %c0_26 = arith.constant 0 : index
    %39 = vector.load %arg13[%38, %c0_25, %c0_26] : memref<1x128x1xf32, #tpu.memory_space<vmem>>, vector<1x128x1xf32>
    %40 = vector.shape_cast %39 : vector<1x128x1xf32> to vector<128x1xf32>
    %41 = vector.shape_cast %12 : vector<128x1xf32> to vector<1x128x1xf32>
    tpu.vector_store %arg13[%38, %c0_25, %c0_26], %41 {strides = array<i32>} : memref<1x128x1xf32, #tpu.memory_space<vmem>>, vector<1x128x1xf32>,
    %c0_i32_27 = arith.constant 0 : i32
    %42 = arith.cmpi eq, %arg1, %c0_i32_27 : i32
    %43 = arith.extui %42 : i1 to i32
    %c0_i32_28 = arith.constant 0 : i32
    %44 = arith.cmpi ne, %43, %c0_i32_28 : i32
    scf.if %44 {
      %45 = tpu.reciprocal %22 {approx = true} : vector<128x1xf32> -> vector<128x1xf32>
      %46 = arith.mulf %22, %45 : vector<128x1xf32>
      %cst_29 = arith.constant 2.000000e+00 : f32
      %47 = vector.broadcast %cst_29 : f32 to vector<128x1xf32>
      %48 = arith.subf %47, %46 : vector<128x1xf32>
      %49 = arith.mulf %45, %48 : vector<128x1xf32>
      %c0_30 = arith.constant 0 : index
      %c0_31 = arith.constant 0 : index
      %50 = vector.load %arg5[%c0_30, %c0_31] : memref<128x128xf32, #tpu.memory_space<vmem>>, vector<128x128xf32>
      %51 = vector.broadcast %49 : vector<128x1xf32> to vector<128x128xf32>
      %52 = arith.mulf %29, %51 : vector<128x128xf32>
      %53 = arith.addf %50, %52 : vector<128x128xf32>
      %c0_32 = arith.constant 0 : index
      %c0_33 = arith.constant 0 : index
      %54 = vector.load %arg7[%c0_32, %c0_33] : memref<128x128xf32, #tpu.memory_space<vmem>>, vector<128x128xf32>
      tpu.vector_store %arg7[%c0_32, %c0_33], %53 {strides = array<i32>} : memref<128x128xf32, #tpu.memory_space<vmem>>, vector<128x128xf32>,
      %c0_34 = arith.constant 0 : index
      %c0_35 = arith.constant 0 : index
      %c0_36 = arith.constant 0 : index
      %55 = vector.load %arg13[%c0_34, %c0_35, %c0_36] : memref<1x128x1xf32, #tpu.memory_space<vmem>>, vector<1x128x1xf32>
      %56 = vector.shape_cast %55 : vector<1x128x1xf32> to vector<128x1xf32>
      %57 = arith.subf %56, %12 : vector<128x1xf32>
      %58 = math.exp %57 : vector<128x1xf32>
      %59 = arith.mulf %58, %49 : vector<128x1xf32>
      %c0_37 = arith.constant 0 : index
      %c0_38 = arith.constant 0 : index
      %c0_39 = arith.constant 0 : index
      %60 = vector.load %arg12[%c0_37, %c0_38, %c0_39] : memref<1x128x128xbf16, #tpu.memory_space<vmem>>, vector<1x128x128xbf16>
      %61 = vector.shape_cast %60 : vector<1x128x128xbf16> to vector<128x128xbf16>
      %62 = arith.extf %61 : vector<128x128xbf16> to vector<128x128xf32>
      %63 = vector.broadcast %59 : vector<128x1xf32> to vector<128x128xf32>
      %64 = arith.mulf %62, %63 : vector<128x128xf32>
      %c0_40 = arith.constant 0 : index
      %c0_41 = arith.constant 0 : index
      %65 = vector.load %arg8[%c0_40, %c0_41] : memref<128x128xf32, #tpu.memory_space<vmem>>, vector<128x128xf32>
      tpu.vector_store %arg8[%c0_40, %c0_41], %64 {strides = array<i32>} : memref<128x128xf32, #tpu.memory_space<vmem>>, vector<128x128xf32>,
    } else {
    }
    return
  }
  func.func @transform_0(%arg0: i32, %arg1: i32) -> (i32, i32) {
    %c0_i32 = arith.constant 0 : i32
    %c0_i32_0 = arith.constant 0 : i32
    return %arg0, %c0_i32 : i32, i32
  }
  func.func @transform_1(%arg0: i32, %arg1: i32) -> (i32, i32) {
    %c0_i32 = arith.constant 0 : i32
    %c0_i32_0 = arith.constant 0 : i32
    return %arg1, %c0_i32 : i32, i32
  }
  func.func @transform_2(%arg0: i32, %arg1: i32) -> (i32, i32) {
    %c0_i32 = arith.constant 0 : i32
    %c0_i32_0 = arith.constant 0 : i32
    return %arg1, %c0_i32 : i32, i32
  }
  func.func @transform_3(%arg0: i32, %arg1: i32) -> (i32, i32) {
    %c0_i32 = arith.constant 0 : i32
    %c0_i32_0 = arith.constant 0 : i32
    return %arg0, %c0_i32 : i32, i32
  }
  func.func @transform_4(%arg0: i32, %arg1: i32) -> (i32, i32) {
    %c0_i32 = arith.constant 0 : i32
    %c0_i32_0 = arith.constant 0 : i32
    return %c0_i32, %arg1 : i32, i32
  }
  func.func @transform_5(%arg0: i32, %arg1: i32) -> (i32, i32) {
    %c0_i32 = arith.constant 0 : i32
    %c0_i32_0 = arith.constant 0 : i32
    return %arg0, %c0_i32 : i32, i32
  }
  func.func @transform_6(%arg0: i32, %arg1: i32) -> (i32, i32) {
    %c0_i32 = arith.constant 0 : i32
    %c0_i32_0 = arith.constant 0 : i32
    return %arg0, %c0_i32 : i32, i32
  }
}

module attributes {stable_mosaic.version = 11 : i64} {
  func.func @_ffn_kernel(%arg0: i32, %arg1: i32, %arg2: memref<128x128xf32, #tpu.memory_space<vmem>>, %arg3: memref<128x128xbf16, #tpu.memory_space<vmem>>, %arg4: memref<1x128xf32, #tpu.memory_space<vmem>>, %arg5: memref<128x128xbf16, #tpu.memory_space<vmem>>, %arg6: memref<1x128xf32, #tpu.memory_space<vmem>>, %arg7: memref<128x128xf32, #tpu.memory_space<vmem>>, %arg8: memref<128x128xf32, #tpu.memory_space<vmem>>) attributes {dimension_semantics = [#tpu.dimension_semantics<parallel>, #tpu.dimension_semantics<arbitrary>], iteration_bounds = array<i64: 1, 1>, scalar_prefetch = 0 : i64, scratch_operands = 1 : i64, tpu.core_type = #tpu.core_type<tc>, window_params = [{transform_indices = @transform_0, window_bounds = array<i64: 128, 128>}, {transform_indices = @transform_1, window_bounds = array<i64: 128, 128>}, {transform_indices = @transform_2, window_bounds = array<i64: 1, 128>}, {transform_indices = @transform_3, window_bounds = array<i64: 128, 128>}, {pipeline_mode = #tpu.pipeline_mode<synchronous>, transform_indices = @transform_4, window_bounds = array<i64: 1, 128>}, {transform_indices = @transform_5, window_bounds = array<i64: 128, 128>}]} {
    %c0_i32 = arith.constant 0 : i32
    %0 = arith.cmpi eq, %arg1, %c0_i32 : i32
    %1 = arith.extui %0 : i1 to i32
    %c0_i32_0 = arith.constant 0 : i32
    %2 = arith.cmpi ne, %1, %c0_i32_0 : i32
    scf.if %2 {
      %cst_18 = arith.constant 0.000000e+00 : f32
      %27 = vector.broadcast %cst_18 : f32 to vector<128x128xf32>
      %c0_19 = arith.constant 0 : index
      %c0_20 = arith.constant 0 : index
      %28 = vector.load %arg8[%c0_19, %c0_20] : memref<128x128xf32, #tpu.memory_space<vmem>>, vector<128x128xf32>
      tpu.vector_store %arg8[%c0_19, %c0_20], %27 {strides = array<i32>} : memref<128x128xf32, #tpu.memory_space<vmem>>, vector<128x128xf32>,
    } else {
    }
    %c0 = arith.constant 0 : index
    %c0_1 = arith.constant 0 : index
    %3 = vector.load %arg2[%c0, %c0_1] : memref<128x128xf32, #tpu.memory_space<vmem>>, vector<128x128xf32>
    %4 = arith.truncf %3 : vector<128x128xf32> to vector<128x128xbf16>
    %c0_2 = arith.constant 0 : index
    %c0_3 = arith.constant 0 : index
    %5 = vector.load %arg3[%c0_2, %c0_3] : memref<128x128xbf16, #tpu.memory_space<vmem>>, vector<128x128xbf16>
    %cst = arith.constant dense<0.000000e+00> : vector<128x128xf32>
    %6 = tpu.matmul %4, %5, %cst {dimension_numbers = #tpu.dot_dimension_numbers<[1], [0], [0], [1], [0, 0, 1, 1], [], []>} : vector<128x128xbf16>, vector<128x128xbf16>, vector<128x128xf32> -> vector<128x128xf32>
    %c0_4 = arith.constant 0 : index
    %c0_5 = arith.constant 0 : index
    %7 = vector.load %arg4[%c0_4, %c0_5] : memref<1x128xf32, #tpu.memory_space<vmem>>, vector<1x128xf32>
    %8 = vector.broadcast %7 : vector<1x128xf32> to vector<128x128xf32>
    %9 = arith.addf %6, %8 : vector<128x128xf32>
    %cst_6 = arith.constant 5.000000e-01 : f32
    %10 = vector.broadcast %cst_6 : f32 to vector<128x128xf32>
    %11 = arith.mulf %10, %9 : vector<128x128xf32>
    %cst_7 = arith.constant 0.707106769 : f32
    %12 = vector.broadcast %cst_7 : f32 to vector<128x128xf32>
    %13 = arith.mulf %9, %12 : vector<128x128xf32>
    %14 = math.erf %13 : vector<128x128xf32>
    %cst_8 = arith.constant 1.000000e+00 : f32
    %15 = vector.broadcast %cst_8 : f32 to vector<128x128xf32>
    %16 = arith.addf %15, %14 : vector<128x128xf32>
    %17 = arith.mulf %11, %16 : vector<128x128xf32>
    %c0_9 = arith.constant 0 : index
    %c0_10 = arith.constant 0 : index
    %18 = vector.load %arg8[%c0_9, %c0_10] : memref<128x128xf32, #tpu.memory_space<vmem>>, vector<128x128xf32>
    %19 = arith.truncf %17 : vector<128x128xf32> to vector<128x128xbf16>
    %c0_11 = arith.constant 0 : index
    %c0_12 = arith.constant 0 : index
    %20 = vector.load %arg5[%c0_11, %c0_12] : memref<128x128xbf16, #tpu.memory_space<vmem>>, vector<128x128xbf16>
    %cst_13 = arith.constant dense<0.000000e+00> : vector<128x128xf32>
    %21 = tpu.matmul %19, %20, %cst_13 {dimension_numbers = #tpu.dot_dimension_numbers<[1], [0], [0], [1], [0, 0, 1, 1], [], []>} : vector<128x128xbf16>, vector<128x128xbf16>, vector<128x128xf32> -> vector<128x128xf32>
    %22 = arith.addf %18, %21 : vector<128x128xf32>
    %c0_14 = arith.constant 0 : index
    %c0_15 = arith.constant 0 : index
    %23 = vector.load %arg8[%c0_14, %c0_15] : memref<128x128xf32, #tpu.memory_space<vmem>>, vector<128x128xf32>
    tpu.vector_store %arg8[%c0_14, %c0_15], %22 {strides = array<i32>} : memref<128x128xf32, #tpu.memory_space<vmem>>, vector<128x128xf32>,
    %c0_i32_16 = arith.constant 0 : i32
    %24 = arith.cmpi eq, %arg1, %c0_i32_16 : i32
    %25 = arith.extui %24 : i1 to i32
    %c0_i32_17 = arith.constant 0 : i32
    %26 = arith.cmpi ne, %25, %c0_i32_17 : i32
    scf.if %26 {
      %c0_18 = arith.constant 0 : index
      %c0_19 = arith.constant 0 : index
      %27 = vector.load %arg8[%c0_18, %c0_19] : memref<128x128xf32, #tpu.memory_space<vmem>>, vector<128x128xf32>
      %c0_20 = arith.constant 0 : index
      %c0_21 = arith.constant 0 : index
      %28 = vector.load %arg6[%c0_20, %c0_21] : memref<1x128xf32, #tpu.memory_space<vmem>>, vector<1x128xf32>
      %29 = vector.broadcast %28 : vector<1x128xf32> to vector<128x128xf32>
      %30 = arith.addf %27, %29 : vector<128x128xf32>
      %31 = arith.addf %30, %3 : vector<128x128xf32>
      %c0_22 = arith.constant 0 : index
      %c0_23 = arith.constant 0 : index
      %32 = vector.load %arg7[%c0_22, %c0_23] : memref<128x128xf32, #tpu.memory_space<vmem>>, vector<128x128xf32>
      tpu.vector_store %arg7[%c0_22, %c0_23], %31 {strides = array<i32>} : memref<128x128xf32, #tpu.memory_space<vmem>>, vector<128x128xf32>,
    } else {
    }
    return
  }
  func.func @transform_0(%arg0: i32, %arg1: i32) -> (i32, i32) {
    %c0_i32 = arith.constant 0 : i32
    %c0_i32_0 = arith.constant 0 : i32
    return %arg0, %c0_i32 : i32, i32
  }
  func.func @transform_1(%arg0: i32, %arg1: i32) -> (i32, i32) {
    %c0_i32 = arith.constant 0 : i32
    %c0_i32_0 = arith.constant 0 : i32
    return %c0_i32, %arg1 : i32, i32
  }
  func.func @transform_2(%arg0: i32, %arg1: i32) -> (i32, i32) {
    %c0_i32 = arith.constant 0 : i32
    %c0_i32_0 = arith.constant 0 : i32
    return %c0_i32, %arg1 : i32, i32
  }
  func.func @transform_3(%arg0: i32, %arg1: i32) -> (i32, i32) {
    %c0_i32 = arith.constant 0 : i32
    %c0_i32_0 = arith.constant 0 : i32
    return %arg1, %c0_i32 : i32, i32
  }
  func.func @transform_4(%arg0: i32, %arg1: i32) -> (i32, i32) {
    %c0_i32 = arith.constant 0 : i32
    %c0_i32_0 = arith.constant 0 : i32
    %c0_i32_1 = arith.constant 0 : i32
    return %c0_i32, %c0_i32_0 : i32, i32
  }
  func.func @transform_5(%arg0: i32, %arg1: i32) -> (i32, i32) {
    %c0_i32 = arith.constant 0 : i32
    %c0_i32_0 = arith.constant 0 : i32
    return %arg0, %c0_i32 : i32, i32
  }
}

</mosaic_0001>

<llo_original>
// kernel: transformer_layer.3
$region0: #{transformer_layer.3}
  #allocation0 [shape = 'u32[]', space=smem, size = 0x4, offset = 0x4, fixed_abs, tag = 'smem constant byte address 0x4 - core index']
  #allocation1 [shape = 'u32[72,128]{1,0:T(1,128)}', space=vmem, size = 0x9000, scoped, tag = 'internal scratch']
  %s0 = inlined_call_operand.vmem [shape: f32[128,128], index: 0, kind: input, shape index: {}]
  %s1 = inlined_call_operand.vmem [shape: bf16[128,384], index: 1, kind: input, shape index: {}]
  %s2 = inlined_call_operand.vmem [shape: f32[1,384], index: 2, kind: input, shape index: {}]
  %s3 = inlined_call_operand.vmem [shape: bf16[128,128], index: 3, kind: output, shape index: {0}]
  %s4 = inlined_call_operand.vmem [shape: bf16[128,128], index: 4, kind: output, shape index: {1}]
  %s5 = inlined_call_operand.vmem [shape: bf16[128,128], index: 5, kind: output, shape index: {2}]
  %6 = xla_tuple %s3, %s4, %s5
  %s7 = sld [smem:[#allocation0]]
  $region38: #{transformer_layer.3} parent=0
    _
  %s9 = ssub.s32 1, %s7
  %s10 = scalar_select 0, %s9, %s7
  // Predicated region
  $region2: #{transformer_layer.3} parent=0 // pred_check
    _
  $region3: #{transformer_layer.3} parent=0 // pred_check_branch
    %12 = sbr.rel (0) target = $region5
  $region4: #{transformer_layer.3} parent=0 // pred_region
    _
  $region5: #{transformer_layer.3} parent=0 // pred_fallthru
    _
  // Predicated region
  $region6: #{transformer_layer.3} parent=0 // pred_check
    _
  $region7: #{transformer_layer.3} parent=0 // pred_check_branch
    %14 = sbr.rel (0) target = $region9
  $region8: #{transformer_layer.3} parent=0 // pred_region
    _
  $region9: #{transformer_layer.3} parent=0 // pred_fallthru
    _
  // Predicated region
  $region10: #{transformer_layer.3} parent=0 // pred_check
    _
  $region11: #{transformer_layer.3} parent=0 // pred_check_branch
    %16 = sbr.rel (0) target = $region13
  $region12: #{transformer_layer.3} parent=0 // pred_region
    _
  $region13: #{transformer_layer.3} parent=0 // pred_fallthru
    _
  %v17 = vld [vmem:[%s0] sm:$0xff]
  %v18 = vld [vmem:[%s0 + $0x8] sm:$0xff]
  %v19 = vld [vmem:[%s0 + $0x10] sm:$0xff]
  %v20 = vld [vmem:[%s0 + $0x18] sm:$0xff]
  %v21 = vld [vmem:[%s0 + $0x20] sm:$0xff]
  %v22 = vld [vmem:[%s0 + $0x28] sm:$0xff]
  %v23 = vld [vmem:[%s0 + $0x30] sm:$0xff]
  %v24 = vld [vmem:[%s0 + $0x38] sm:$0xff]
  %v25 = vld [vmem:[%s0 + $0x40] sm:$0xff]
  %v26 = vld [vmem:[%s0 + $0x48] sm:$0xff]
  %v27 = vld [vmem:[%s0 + $0x50] sm:$0xff]
  %v28 = vld [vmem:[%s0 + $0x58] sm:$0xff]
  %v29 = vld [vmem:[%s0 + $0x60] sm:$0xff]
  %v30 = vld [vmem:[%s0 + $0x68] sm:$0xff]
  %v31 = vld [vmem:[%s0 + $0x70] sm:$0xff]
  %v32 = vld [vmem:[%s0 + $0x78] sm:$0xff]
  %v33 = vpack.c.bf16 %v18, %v17
  %v34 = vpack.c.bf16 %v20, %v19
  %v35 = vpack.c.bf16 %v22, %v21
  %v36 = vpack.c.bf16 %v24, %v23
  %v37 = vpack.c.bf16 %v26, %v25
  %v38 = vpack.c.bf16 %v28, %v27
  %v39 = vpack.c.bf16 %v30, %v29
  %v40 = vpack.c.bf16 %v32, %v31
  %v41 = vld [vmem:[%s1] sm:$0xff]
  %v42 = vld [vmem:[%s1 + $0x8] sm:$0xf]
  %v43 = vld [vmem:[%s1 + $0xc] sm:$0xff]
  %v44 = vld [vmem:[%s1 + $0x14] sm:$0xf]
  %v45 = vld [vmem:[%s1 + $0x18] sm:$0xff]
  %v46 = vld [vmem:[%s1 + $0x20] sm:$0xf]
  %v47 = vld [vmem:[%s1 + $0x24] sm:$0xff]
  %v48 = vld [vmem:[%s1 + $0x2c] sm:$0xf]
  %v49 = vld [vmem:[%s1 + $0x30] sm:$0xff]
  %v50 = vld [vmem:[%s1 + $0x38] sm:$0xf]
  %v51 = vld [vmem:[%s1 + $0x3c] sm:$0xff]
  %v52 = vld [vmem:[%s1 + $0x44] sm:$0xf]
  %v53 = vld [vmem:[%s1 + $0x48] sm:$0xff]
  %v54 = vld [vmem:[%s1 + $0x50] sm:$0xf]
  %v55 = vld [vmem:[%s1 + $0x54] sm:$0xff]
  %v56 = vld [vmem:[%s1 + $0x5c] sm:$0xf]
  %v57 = vld [vmem:[%s1 + $0x60] sm:$0xff]
  %v58 = vld [vmem:[%s1 + $0x68] sm:$0xf]
  %v59 = vld [vmem:[%s1 + $0x6c] sm:$0xff]
  %v60 = vld [vmem:[%s1 + $0x74] sm:$0xf]
  %v61 = vld [vmem:[%s1 + $0x78] sm:$0xff]
  %v62 = vld [vmem:[%s1 + $0x80] sm:$0xf]
  %v63 = vld [vmem:[%s1 + $0x84] sm:$0xff]
  %v64 = vld [vmem:[%s1 + $0x8c] sm:$0xf]
  %v65 = vld [vmem:[%s1 + $0x90] sm:$0xff]
  %v66 = vld [vmem:[%s1 + $0x98] sm:$0xf]
  %v67 = vld [vmem:[%s1 + $0x9c] sm:$0xff]
  %v68 = vld [vmem:[%s1 + $0xa4] sm:$0xf]
  %v69 = vld [vmem:[%s1 + $0xa8] sm:$0xff]
  %v70 = vld [vmem:[%s1 + $0xb0] sm:$0xf]
  %v71 = vld [vmem:[%s1 + $0xb4] sm:$0xff]
  %v72 = vld [vmem:[%s1 + $0xbc] sm:$0xf]
  %v73 = vld [vmem:[%s2] sm:$0x7]
  %v75 = vperm.slane %v73, 0
  %v76 = vperm.slane %v73, 1
  %v77 = vperm.slane %v73, 2
  %v113 = vunpack.c.l.b16 %v41
  %v114 = vunpack.c.h.b16 %v41
  %v115 = vunpack.c.l.b16 %v42
  %v116 = vunpack.c.l.b16 %v43
  %v117 = vunpack.c.h.b16 %v43
  %v118 = vunpack.c.l.b16 %v44
  %v119 = vunpack.c.l.b16 %v45
  %v120 = vunpack.c.h.b16 %v45
  %v121 = vunpack.c.l.b16 %v46
  %v122 = vunpack.c.l.b16 %v47
  %v123 = vunpack.c.h.b16 %v47
  %v124 = vunpack.c.l.b16 %v48
  %v125 = vunpack.c.l.b16 %v49
  %v126 = vunpack.c.h.b16 %v49
  %v127 = vunpack.c.l.b16 %v50
  %v128 = vunpack.c.l.b16 %v51
  %v129 = vunpack.c.h.b16 %v51
  %v130 = vunpack.c.l.b16 %v52
  %v131 = vunpack.c.l.b16 %v53
  %v132 = vunpack.c.h.b16 %v53
  %v133 = vunpack.c.l.b16 %v54
  %v134 = vunpack.c.l.b16 %v55
  %v135 = vunpack.c.h.b16 %v55
  %v136 = vunpack.c.l.b16 %v56
  %v137 = vunpack.c.l.b16 %v57
  %v138 = vunpack.c.h.b16 %v57
  %v139 = vunpack.c.l.b16 %v58
  %v140 = vunpack.c.l.b16 %v59
  %v141 = vunpack.c.h.b16 %v59
  %v142 = vunpack.c.l.b16 %v60
  %v143 = vunpack.c.l.b16 %v61
  %v144 = vunpack.c.h.b16 %v61
  %v145 = vunpack.c.l.b16 %v62
  %v146 = vunpack.c.l.b16 %v63
  %v147 = vunpack.c.h.b16 %v63
  %v148 = vunpack.c.l.b16 %v64
  %v149 = vunpack.c.l.b16 %v65
  %v150 = vunpack.c.h.b16 %v65
  %v151 = vunpack.c.l.b16 %v66
  %v152 = vunpack.c.l.b16 %v67
  %v153 = vunpack.c.h.b16 %v67
  %v154 = vunpack.c.l.b16 %v68
  %v155 = vunpack.c.l.b16 %v69
  %v156 = vunpack.c.h.b16 %v69
  %v157 = vunpack.c.l.b16 %v70
  %v158 = vunpack.c.l.b16 %v71
  %v159 = vunpack.c.h.b16 %v71
  %v160 = vunpack.c.l.b16 %v72
  %v161 = vpack.c.b16 %v116, %v113
  %v162 = vpack.c.b16 %v117, %v114
  %v163 = vpack.c.b16 %v118, %v115
  %v164 = vpack.c.b16 %v122, %v119
  %v165 = vpack.c.b16 %v123, %v120
  %v166 = vpack.c.b16 %v124, %v121
  %v167 = vpack.c.b16 %v128, %v125
  %v168 = vpack.c.b16 %v129, %v126
  %v169 = vpack.c.b16 %v130, %v127
  %v170 = vpack.c.b16 %v134, %v131
  %v171 = vpack.c.b16 %v135, %v132
  %v172 = vpack.c.b16 %v136, %v133
  %v173 = vpack.c.b16 %v140, %v137
  %v174 = vpack.c.b16 %v141, %v138
  %v175 = vpack.c.b16 %v142, %v139
  %v176 = vpack.c.b16 %v146, %v143
  %v177 = vpack.c.b16 %v147, %v144
  %v178 = vpack.c.b16 %v148, %v145
  %v179 = vpack.c.b16 %v152, %v149
  %v180 = vpack.c.b16 %v153, %v150
  %v181 = vpack.c.b16 %v154, %v151
  %v182 = vpack.c.b16 %v158, %v155
  %v183 = vpack.c.b16 %v159, %v156
  %v184 = vpack.c.b16 %v160, %v157
  %209 = vmatpush.bf16.msra.mxu0 %v182
  %210 = vmatpush.bf16.msra.mxu0 %v179
  %211 = vmatpush.bf16.msra.mxu0 %v176
  %212 = vmatpush.bf16.msra.mxu0 %v173
  %213 = vmatpush.bf16.msra.mxu0 %v170
  %214 = vmatpush.bf16.msra.mxu0 %v167
  %215 = vmatpush.bf16.msra.mxu0 %v164
  %216 = vmatpush.bf16.msra.mxu0 %v161
  %217 = vmatmul.bf16.gmra.mxu0 %v33
  %v218 = vpop.f32.mrf.mxu0
  %v219 = vadd.f32 %v75, %v218
  %v220 = vpop.f32.mrf.mxu0
  %v221 = vadd.f32 %v75, %v220
  %222 = vmatmul.bf16.gmra.mxu0 %v34
  %v223 = vpop.f32.mrf.mxu0
  %v224 = vadd.f32 %v75, %v223
  %v225 = vpop.f32.mrf.mxu0
  %v226 = vadd.f32 %v75, %v225
  %227 = vmatmul.bf16.gmra.mxu0 %v35
  %v228 = vpop.f32.mrf.mxu0
  %v229 = vadd.f32 %v75, %v228
  %v230 = vpop.f32.mrf.mxu0
  %v231 = vadd.f32 %v75, %v230
  %232 = vmatmul.bf16.gmra.mxu0 %v36
  %v233 = vpop.f32.mrf.mxu0
  %v234 = vadd.f32 %v75, %v233
  %v235 = vpop.f32.mrf.mxu0
  %v236 = vadd.f32 %v75, %v235
  %237 = vmatmul.bf16.gmra.mxu0 %v37
  %v238 = vpop.f32.mrf.mxu0
  %v239 = vadd.f32 %v75, %v238
  %v240 = vpop.f32.mrf.mxu0
  %v241 = vadd.f32 %v75, %v240
  %242 = vmatmul.bf16.gmra.mxu0 %v38
  %v243 = vpop.f32.mrf.mxu0
  %v244 = vadd.f32 %v75, %v243
  %v245 = vpop.f32.mrf.mxu0
  %v246 = vadd.f32 %v75, %v245
  %247 = vmatmul.bf16.gmra.mxu0 %v39
  %v248 = vpop.f32.mrf.mxu0
  %v249 = vadd.f32 %v75, %v248
  %v250 = vpop.f32.mrf.mxu0
  %v251 = vadd.f32 %v75, %v250
  %252 = vmatmul.bf16.gmra.mxu0 %v40
  %v253 = vpop.f32.mrf.mxu0
  %v254 = vadd.f32 %v75, %v253
  %v255 = vpop.f32.mrf.mxu0
  %v256 = vadd.f32 %v75, %v255
  %257 = vdwg.mxu0
  %258 = vmatpush.bf16.msra.mxu0 %v183
  %259 = vmatpush.bf16.msra.mxu0 %v180
  %260 = vmatpush.bf16.msra.mxu0 %v177
  %261 = vmatpush.bf16.msra.mxu0 %v174
  %262 = vmatpush.bf16.msra.mxu0 %v171
  %263 = vmatpush.bf16.msra.mxu0 %v168
  %264 = vmatpush.bf16.msra.mxu0 %v165
  %265 = vmatpush.bf16.msra.mxu0 %v162
  %266 = vmatmul.bf16.gmra.mxu0 %v33
  %v267 = vpop.f32.mrf.mxu0
  %v268 = vadd.f32 %v76, %v267
  %v269 = vpop.f32.mrf.mxu0
  %v270 = vadd.f32 %v76, %v269
  %271 = vmatmul.bf16.gmra.mxu0 %v34
  %v272 = vpop.f32.mrf.mxu0
  %v273 = vadd.f32 %v76, %v272
  %v274 = vpop.f32.mrf.mxu0
  %v275 = vadd.f32 %v76, %v274
  %276 = vmatmul.bf16.gmra.mxu0 %v35
  %v277 = vpop.f32.mrf.mxu0
  %v278 = vadd.f32 %v76, %v277
  %v279 = vpop.f32.mrf.mxu0
  %v280 = vadd.f32 %v76, %v279
  %281 = vmatmul.bf16.gmra.mxu0 %v36
  %v282 = vpop.f32.mrf.mxu0
  %v283 = vadd.f32 %v76, %v282
  %v284 = vpop.f32.mrf.mxu0
  %v285 = vadd.f32 %v76, %v284
  %286 = vmatmul.bf16.gmra.mxu0 %v37
  %v287 = vpop.f32.mrf.mxu0
  %v288 = vadd.f32 %v76, %v287
  %v289 = vpop.f32.mrf.mxu0
  %v290 = vadd.f32 %v76, %v289
  %291 = vmatmul.bf16.gmra.mxu0 %v38
  %v292 = vpop.f32.mrf.mxu0
  %v293 = vadd.f32 %v76, %v292
  %v294 = vpop.f32.mrf.mxu0
  %v295 = vadd.f32 %v76, %v294
  %296 = vmatmul.bf16.gmra.mxu0 %v39
  %v297 = vpop.f32.mrf.mxu0
  %v298 = vadd.f32 %v76, %v297
  %v299 = vpop.f32.mrf.mxu0
  %v300 = vadd.f32 %v76, %v299
  %301 = vmatmul.bf16.gmra.mxu0 %v40
  %v302 = vpop.f32.mrf.mxu0
  %v303 = vadd.f32 %v76, %v302
  %v304 = vpop.f32.mrf.mxu0
  %v305 = vadd.f32 %v76, %v304
  %306 = vdwg.mxu0
  %307 = vmatpush.bf16.msra.mxu0 %v184
  %308 = vmatpush.bf16.msra.mxu0 %v181
  %309 = vmatpush.bf16.msra.mxu0 %v178
  %310 = vmatpush.bf16.msra.mxu0 %v175
  %311 = vmatpush.bf16.msra.mxu0 %v172
  %312 = vmatpush.bf16.msra.mxu0 %v169
  %313 = vmatpush.bf16.msra.mxu0 %v166
  %314 = vmatpush.bf16.msra.mxu0 %v163
  %315 = vmatmul.bf16.gmra.mxu0 %v33
  %v316 = vpop.f32.mrf.mxu0
  %v317 = vadd.f32 %v77, %v316
  %v318 = vpop.f32.mrf.mxu0
  %v319 = vadd.f32 %v77, %v318
  %320 = vmatmul.bf16.gmra.mxu0 %v34
  %v321 = vpop.f32.mrf.mxu0
  %v322 = vadd.f32 %v77, %v321
  %v323 = vpop.f32.mrf.mxu0
  %v324 = vadd.f32 %v77, %v323
  %325 = vmatmul.bf16.gmra.mxu0 %v35
  %v326 = vpop.f32.mrf.mxu0
  %v327 = vadd.f32 %v77, %v326
  %v328 = vpop.f32.mrf.mxu0
  %v329 = vadd.f32 %v77, %v328
  %330 = vmatmul.bf16.gmra.mxu0 %v36
  %v331 = vpop.f32.mrf.mxu0
  %v332 = vadd.f32 %v77, %v331
  %v333 = vpop.f32.mrf.mxu0
  %v334 = vadd.f32 %v77, %v333
  %335 = vmatmul.bf16.gmra.mxu0 %v37
  %v336 = vpop.f32.mrf.mxu0
  %v337 = vadd.f32 %v77, %v336
  %v338 = vpop.f32.mrf.mxu0
  %v339 = vadd.f32 %v77, %v338
  %340 = vmatmul.bf16.gmra.mxu0 %v38
  %v341 = vpop.f32.mrf.mxu0
  %v342 = vadd.f32 %v77, %v341
  %v343 = vpop.f32.mrf.mxu0
  %v344 = vadd.f32 %v77, %v343
  %345 = vmatmul.bf16.gmra.mxu0 %v39
  %v346 = vpop.f32.mrf.mxu0
  %v347 = vadd.f32 %v77, %v346
  %v348 = vpop.f32.mrf.mxu0
  %v349 = vadd.f32 %v77, %v348
  %350 = vmatmul.bf16.gmra.mxu0 %v40
  %v351 = vpop.f32.mrf.mxu0
  %v352 = vadd.f32 %v77, %v351
  %v353 = vpop.f32.mrf.mxu0
  %v354 = vadd.f32 %v77, %v353
  %355 = vdwg.mxu0
  %v356 = vpack.c.bf16 %v219, %v219
  %v357 = vpack.c.bf16 %v221, %v221
  %v358 = vpack.c.bf16 %v224, %v224
  %v359 = vpack.c.bf16 %v226, %v226
  %v360 = vpack.c.bf16 %v229, %v229
  %v361 = vpack.c.bf16 %v231, %v231
  %v362 = vpack.c.bf16 %v234, %v234
  %v363 = vpack.c.bf16 %v236, %v236
  %v364 = vpack.c.bf16 %v239, %v239
  %v365 = vpack.c.bf16 %v241, %v241
  %v366 = vpack.c.bf16 %v244, %v244
  %v367 = vpack.c.bf16 %v246, %v246
  %v368 = vpack.c.bf16 %v249, %v249
  %v369 = vpack.c.bf16 %v251, %v251
  %v370 = vpack.c.bf16 %v254, %v254
  %v371 = vpack.c.bf16 %v256, %v256
  %372 = vst [vmem:[%s3] sm:$0xf] %v356
  %373 = vst [vmem:[%s3 + $0x4] sm:$0xf] %v357
  %374 = vst [vmem:[%s3 + $0x8] sm:$0xf] %v358
  %375 = vst [vmem:[%s3 + $0xc] sm:$0xf] %v359
  %376 = vst [vmem:[%s3 + $0x10] sm:$0xf] %v360
  %377 = vst [vmem:[%s3 + $0x14] sm:$0xf] %v361
  %378 = vst [vmem:[%s3 + $0x18] sm:$0xf] %v362
  %379 = vst [vmem:[%s3 + $0x1c] sm:$0xf] %v363
  %380 = vst [vmem:[%s3 + $0x20] sm:$0xf] %v364
  %381 = vst [vmem:[%s3 + $0x24] sm:$0xf] %v365
  %382 = vst [vmem:[%s3 + $0x28] sm:$0xf] %v366
  %383 = vst [vmem:[%s3 + $0x2c] sm:$0xf] %v367
  %384 = vst [vmem:[%s3 + $0x30] sm:$0xf] %v368
  %385 = vst [vmem:[%s3 + $0x34] sm:$0xf] %v369
  %386 = vst [vmem:[%s3 + $0x38] sm:$0xf] %v370
  %387 = vst [vmem:[%s3 + $0x3c] sm:$0xf] %v371
  %v388 = vpack.c.bf16 %v268, %v268
  %v389 = vpack.c.bf16 %v270, %v270
  %v390 = vpack.c.bf16 %v273, %v273
  %v391 = vpack.c.bf16 %v275, %v275
  %v392 = vpack.c.bf16 %v278, %v278
  %v393 = vpack.c.bf16 %v280, %v280
  %v394 = vpack.c.bf16 %v283, %v283
  %v395 = vpack.c.bf16 %v285, %v285
  %v396 = vpack.c.bf16 %v288, %v288
  %v397 = vpack.c.bf16 %v290, %v290
  %v398 = vpack.c.bf16 %v293, %v293
  %v399 = vpack.c.bf16 %v295, %v295
  %v400 = vpack.c.bf16 %v298, %v298
  %v401 = vpack.c.bf16 %v300, %v300
  %v402 = vpack.c.bf16 %v303, %v303
  %v403 = vpack.c.bf16 %v305, %v305
  %404 = vst [vmem:[%s4] sm:$0xf] %v388
  %405 = vst [vmem:[%s4 + $0x4] sm:$0xf] %v389
  %406 = vst [vmem:[%s4 + $0x8] sm:$0xf] %v390
  %407 = vst [vmem:[%s4 + $0xc] sm:$0xf] %v391
  %408 = vst [vmem:[%s4 + $0x10] sm:$0xf] %v392
  %409 = vst [vmem:[%s4 + $0x14] sm:$0xf] %v393
  %410 = vst [vmem:[%s4 + $0x18] sm:$0xf] %v394
  %411 = vst [vmem:[%s4 + $0x1c] sm:$0xf] %v395
  %412 = vst [vmem:[%s4 + $0x20] sm:$0xf] %v396
  %413 = vst [vmem:[%s4 + $0x24] sm:$0xf] %v397
  %414 = vst [vmem:[%s4 + $0x28] sm:$0xf] %v398
  %415 = vst [vmem:[%s4 + $0x2c] sm:$0xf] %v399
  %416 = vst [vmem:[%s4 + $0x30] sm:$0xf] %v400
  %417 = vst [vmem:[%s4 + $0x34] sm:$0xf] %v401
  %418 = vst [vmem:[%s4 + $0x38] sm:$0xf] %v402
  %419 = vst [vmem:[%s4 + $0x3c] sm:$0xf] %v403
  %v420 = vpack.c.bf16 %v317, %v317
  %v421 = vpack.c.bf16 %v319, %v319
  %v422 = vpack.c.bf16 %v322, %v322
  %v423 = vpack.c.bf16 %v324, %v324
  %v424 = vpack.c.bf16 %v327, %v327
  %v425 = vpack.c.bf16 %v329, %v329
  %v426 = vpack.c.bf16 %v332, %v332
  %v427 = vpack.c.bf16 %v334, %v334
  %v428 = vpack.c.bf16 %v337, %v337
  %v429 = vpack.c.bf16 %v339, %v339
  %v430 = vpack.c.bf16 %v342, %v342
  %v431 = vpack.c.bf16 %v344, %v344
  %v432 = vpack.c.bf16 %v347, %v347
  %v433 = vpack.c.bf16 %v349, %v349
  %v434 = vpack.c.bf16 %v352, %v352
  %v435 = vpack.c.bf16 %v354, %v354
  %436 = vst [vmem:[%s5] sm:$0xf] %v420
  %437 = vst [vmem:[%s5 + $0x4] sm:$0xf] %v421
  %438 = vst [vmem:[%s5 + $0x8] sm:$0xf] %v422
  %439 = vst [vmem:[%s5 + $0xc] sm:$0xf] %v423
  %440 = vst [vmem:[%s5 + $0x10] sm:$0xf] %v424
  %441 = vst [vmem:[%s5 + $0x14] sm:$0xf] %v425
  %442 = vst [vmem:[%s5 + $0x18] sm:$0xf] %v426
  %443 = vst [vmem:[%s5 + $0x1c] sm:$0xf] %v427
  %444 = vst [vmem:[%s5 + $0x20] sm:$0xf] %v428
  %445 = vst [vmem:[%s5 + $0x24] sm:$0xf] %v429
  %446 = vst [vmem:[%s5 + $0x28] sm:$0xf] %v430
  %447 = vst [vmem:[%s5 + $0x2c] sm:$0xf] %v431
  %448 = vst [vmem:[%s5 + $0x30] sm:$0xf] %v432
  %449 = vst [vmem:[%s5 + $0x34] sm:$0xf] %v433
  %450 = vst [vmem:[%s5 + $0x38] sm:$0xf] %v434
  %451 = vst [vmem:[%s5 + $0x3c] sm:$0xf] %v435
  // Predicated region
  $region14: #{transformer_layer.3} parent=0 // pred_check
    _
  $region15: #{transformer_layer.3} parent=0 // pred_check_branch
    %453 = sbr.rel (0) target = $region17
  $region16: #{transformer_layer.3} parent=0 // pred_region
    _
  $region17: #{transformer_layer.3} parent=0 // pred_fallthru
    _
  // Predicated region
  $region18: #{transformer_layer.3} parent=0 // pred_check
    _
  $region19: #{transformer_layer.3} parent=0 // pred_check_branch
    %455 = sbr.rel (0) target = $region21
  $region20: #{transformer_layer.3} parent=0 // pred_region
    _
  $region21: #{transformer_layer.3} parent=0 // pred_fallthru
    _
  // Predicated region
  $region22: #{transformer_layer.3} parent=0 // pred_check
    _
  $region23: #{transformer_layer.3} parent=0 // pred_check_branch
    %457 = sbr.rel (0) target = $region25
  $region24: #{transformer_layer.3} parent=0 // pred_region
    _
  $region25: #{transformer_layer.3} parent=0 // pred_fallthru
    _
  // Predicated region
  $region26: #{transformer_layer.3} parent=0 // pred_check
    _
  $region27: #{transformer_layer.3} parent=0 // pred_check_branch
    %459 = sbr.rel (0) target = $region29
  $region28: #{transformer_layer.3} parent=0 // pred_region
    _
  $region29: #{transformer_layer.3} parent=0 // pred_fallthru
    _
  // Predicated region
  $region30: #{transformer_layer.3} parent=0 // pred_check
    _
  $region31: #{transformer_layer.3} parent=0 // pred_check_branch
    %461 = sbr.rel (0) target = $region33
  $region32: #{transformer_layer.3} parent=0 // pred_region
    _
  $region33: #{transformer_layer.3} parent=0 // pred_fallthru
    _
  // Predicated region
  $region34: #{transformer_layer.3} parent=0 // pred_check
    _
  $region35: #{transformer_layer.3} parent=0 // pred_check_branch
    %463 = sbr.rel (0) target = $region37
  $region36: #{transformer_layer.3} parent=0 // pred_region
    _
  $region37: #{transformer_layer.3} parent=0 // pred_fallthru
    _

// kernel: transformer_layer.5
$region0: #{transformer_layer.5}
  #allocation0 [shape = 'u32[]', space=smem, size = 0x4, offset = 0x4, fixed_abs, tag = 'smem constant byte address 0x4 - core index']
  #allocation1 [shape = 'u32[72,128]{1,0:T(1,128)}', space=vmem, size = 0x9000, scoped, tag = 'internal scratch']
  #allocation2 [shape = 'f32[128,128]{1,0:T(8,128)}', space=vmem, size = 0x10000, scoped, tag = 'scratch operand']
  %s0 = inlined_call_operand.vmem [shape: f32[128,128], index: 0, kind: input, shape index: {}]
  %s1 = inlined_call_operand.vmem [shape: bf16[128,128], index: 1, kind: input, shape index: {}]
  %s2 = inlined_call_operand.vmem [shape: f32[1,128], index: 2, kind: input, shape index: {}]
  %s3 = inlined_call_operand.vmem [shape: bf16[128,128], index: 3, kind: input, shape index: {}]
  %s4 = inlined_call_operand.vmem [shape: f32[1,128], index: 4, kind: input, shape index: {}]
  %s5 = inlined_call_operand.vmem [shape: f32[128,128], index: 5, kind: output, shape index: {}]
  %s6 = sld [smem:[#allocation0]]
  $region38: #{transformer_layer.5} parent=0
    _
  %s8 = ssub.s32 1, %s6
  %s9 = scalar_select 0, %s8, %s6
  // Predicated region
  $region2: #{transformer_layer.5} parent=0 // pred_check
    _
  $region3: #{transformer_layer.5} parent=0 // pred_check_branch
    %11 = sbr.rel (0) target = $region5
  $region4: #{transformer_layer.5} parent=0 // pred_region
    _
  $region5: #{transformer_layer.5} parent=0 // pred_fallthru
    _
  // Predicated region
  $region6: #{transformer_layer.5} parent=0 // pred_check
    _
  $region7: #{transformer_layer.5} parent=0 // pred_check_branch
    %13 = sbr.rel (0) target = $region9
  $region8: #{transformer_layer.5} parent=0 // pred_region
    _
  $region9: #{transformer_layer.5} parent=0 // pred_fallthru
    _
  // Predicated region
  $region10: #{transformer_layer.5} parent=0 // pred_check
    _
  $region11: #{transformer_layer.5} parent=0 // pred_check_branch
    %15 = sbr.rel (0) target = $region13
  $region12: #{transformer_layer.5} parent=0 // pred_region
    _
  $region13: #{transformer_layer.5} parent=0 // pred_fallthru
    _
  // Predicated region
  $region14: #{transformer_layer.5} parent=0 // pred_check
    _
  $region15: #{transformer_layer.5} parent=0 // pred_check_branch
    %17 = sbr.rel (0) target = $region17
  $region16: #{transformer_layer.5} parent=0 // pred_region
    _
  $region17: #{transformer_layer.5} parent=0 // pred_fallthru
    _
  // Predicated region
  $region18: #{transformer_layer.5} parent=0 // pred_check
    _
  $region19: #{transformer_layer.5} parent=0 // pred_check_branch
    %19 = sbr.rel (0) target = $region21
  $region20: #{transformer_layer.5} parent=0 // pred_region
    _
  $region21: #{transformer_layer.5} parent=0 // pred_fallthru
    _
  %p20 = scmp.eq.s32.totalorder 0, 0
  // Predicated region
  $region22: #{transformer_layer.5} parent=0 // pred_check
    %p21 = pneg %p20
  $region23: #{transformer_layer.5} parent=0 // pred_check_branch
    %23 = sbr.rel (%p21) target = $region25
  $region24: #{transformer_layer.5} parent=0 // pred_region
    %24 = vst [vmem:[#allocation2] sm:$0xff] 0.0
    %25 = vst [vmem:[#allocation2 + $0x8] sm:$0xff] 0.0
    %26 = vst [vmem:[#allocation2 + $0x10] sm:$0xff] 0.0
    %27 = vst [vmem:[#allocation2 + $0x18] sm:$0xff] 0.0
    %28 = vst [vmem:[#allocation2 + $0x20] sm:$0xff] 0.0
    %29 = vst [vmem:[#allocation2 + $0x28] sm:$0xff] 0.0
    %30 = vst [vmem:[#allocation2 + $0x30] sm:$0xff] 0.0
    %31 = vst [vmem:[#allocation2 + $0x38] sm:$0xff] 0.0
    %32 = vst [vmem:[#allocation2 + $0x40] sm:$0xff] 0.0
    %33 = vst [vmem:[#allocation2 + $0x48] sm:$0xff] 0.0
    %34 = vst [vmem:[#allocation2 + $0x50] sm:$0xff] 0.0
    %35 = vst [vmem:[#allocation2 + $0x58] sm:$0xff] 0.0
    %36 = vst [vmem:[#allocation2 + $0x60] sm:$0xff] 0.0
    %37 = vst [vmem:[#allocation2 + $0x68] sm:$0xff] 0.0
    %38 = vst [vmem:[#allocation2 + $0x70] sm:$0xff] 0.0
    %39 = vst [vmem:[#allocation2 + $0x78] sm:$0xff] 0.0
  $region25: #{transformer_layer.5} parent=0 // pred_fallthru
    _
  %v40 = vld [vmem:[%s0] sm:$0xff]
  %v41 = vld [vmem:[%s0 + $0x8] sm:$0xff]
  %v42 = vld [vmem:[%s0 + $0x10] sm:$0xff]
  %v43 = vld [vmem:[%s0 + $0x18] sm:$0xff]
  %v44 = vld [vmem:[%s0 + $0x20] sm:$0xff]
  %v45 = vld [vmem:[%s0 + $0x28] sm:$0xff]
  %v46 = vld [vmem:[%s0 + $0x30] sm:$0xff]
  %v47 = vld [vmem:[%s0 + $0x38] sm:$0xff]
  %v48 = vld [vmem:[%s0 + $0x40] sm:$0xff]
  %v49 = vld [vmem:[%s0 + $0x48] sm:$0xff]
  %v50 = vld [vmem:[%s0 + $0x50] sm:$0xff]
  %v51 = vld [vmem:[%s0 + $0x58] sm:$0xff]
  %v52 = vld [vmem:[%s0 + $0x60] sm:$0xff]
  %v53 = vld [vmem:[%s0 + $0x68] sm:$0xff]
  %v54 = vld [vmem:[%s0 + $0x70] sm:$0xff]
  %v55 = vld [vmem:[%s0 + $0x78] sm:$0xff]
  %v56 = vpack.c.bf16 %v41, %v40
  %v57 = vpack.c.bf16 %v43, %v42
  %v58 = vpack.c.bf16 %v45, %v44
  %v59 = vpack.c.bf16 %v47, %v46
  %v60 = vpack.c.bf16 %v49, %v48
  %v61 = vpack.c.bf16 %v51, %v50
  %v62 = vpack.c.bf16 %v53, %v52
  %v63 = vpack.c.bf16 %v55, %v54
  %v64 = vld [vmem:[%s1] sm:$0xf]
  %v65 = vld [vmem:[%s1 + $0x4] sm:$0xf]
  %v66 = vld [vmem:[%s1 + $0x8] sm:$0xf]
  %v67 = vld [vmem:[%s1 + $0xc] sm:$0xf]
  %v68 = vld [vmem:[%s1 + $0x10] sm:$0xf]
  %v69 = vld [vmem:[%s1 + $0x14] sm:$0xf]
  %v70 = vld [vmem:[%s1 + $0x18] sm:$0xf]
  %v71 = vld [vmem:[%s1 + $0x1c] sm:$0xf]
  %v72 = vld [vmem:[%s1 + $0x20] sm:$0xf]
  %v73 = vld [vmem:[%s1 + $0x24] sm:$0xf]
  %v74 = vld [vmem:[%s1 + $0x28] sm:$0xf]
  %v75 = vld [vmem:[%s1 + $0x2c] sm:$0xf]
  %v76 = vld [vmem:[%s1 + $0x30] sm:$0xf]
  %v77 = vld [vmem:[%s1 + $0x34] sm:$0xf]
  %v78 = vld [vmem:[%s1 + $0x38] sm:$0xf]
  %v79 = vld [vmem:[%s1 + $0x3c] sm:$0xf]
  %v80 = vld [vmem:[%s2] sm:$0x1]
  %v82 = vperm.slane %v80, 0
  %v100 = vunpack.c.l.b16 %v64
  %v101 = vunpack.c.l.b16 %v65
  %v102 = vunpack.c.l.b16 %v66
  %v103 = vunpack.c.l.b16 %v67
  %v104 = vunpack.c.l.b16 %v68
  %v105 = vunpack.c.l.b16 %v69
  %v106 = vunpack.c.l.b16 %v70
  %v107 = vunpack.c.l.b16 %v71
  %v108 = vunpack.c.l.b16 %v72
  %v109 = vunpack.c.l.b16 %v73
  %v110 = vunpack.c.l.b16 %v74
  %v111 = vunpack.c.l.b16 %v75
  %v112 = vunpack.c.l.b16 %v76
  %v113 = vunpack.c.l.b16 %v77
  %v114 = vunpack.c.l.b16 %v78
  %v115 = vunpack.c.l.b16 %v79
  %v116 = vpack.c.b16 %v101, %v100
  %v117 = vpack.c.b16 %v103, %v102
  %v118 = vpack.c.b16 %v105, %v104
  %v119 = vpack.c.b16 %v107, %v106
  %v120 = vpack.c.b16 %v109, %v108
  %v121 = vpack.c.b16 %v111, %v110
  %v122 = vpack.c.b16 %v113, %v112
  %v123 = vpack.c.b16 %v115, %v114
  %132 = vmatpush.bf16.msra.mxu0 %v123
  %133 = vmatpush.bf16.msra.mxu0 %v122
  %134 = vmatpush.bf16.msra.mxu0 %v121
  %135 = vmatpush.bf16.msra.mxu0 %v120
  %136 = vmatpush.bf16.msra.mxu0 %v119
  %137 = vmatpush.bf16.msra.mxu0 %v118
  %138 = vmatpush.bf16.msra.mxu0 %v117
  %139 = vmatpush.bf16.msra.mxu0 %v116
  %140 = vmatmul.bf16.gmra.mxu0 %v56
  %v141 = vpop.f32.mrf.mxu0
  %v142 = vadd.f32 %v82, %v141
  %v143 = vpop.f32.mrf.mxu0
  %v144 = vadd.f32 %v82, %v143
  %145 = vmatmul.bf16.gmra.mxu0 %v57
  %v146 = vpop.f32.mrf.mxu0
  %v147 = vadd.f32 %v82, %v146
  %v148 = vpop.f32.mrf.mxu0
  %v149 = vadd.f32 %v82, %v148
  %150 = vmatmul.bf16.gmra.mxu0 %v58
  %v151 = vpop.f32.mrf.mxu0
  %v152 = vadd.f32 %v82, %v151
  %v153 = vpop.f32.mrf.mxu0
  %v154 = vadd.f32 %v82, %v153
  %155 = vmatmul.bf16.gmra.mxu0 %v59
  %v156 = vpop.f32.mrf.mxu0
  %v157 = vadd.f32 %v82, %v156
  %v158 = vpop.f32.mrf.mxu0
  %v159 = vadd.f32 %v82, %v158
  %160 = vmatmul.bf16.gmra.mxu0 %v60
  %v161 = vpop.f32.mrf.mxu0
  %v162 = vadd.f32 %v82, %v161
  %v163 = vpop.f32.mrf.mxu0
  %v164 = vadd.f32 %v82, %v163
  %165 = vmatmul.bf16.gmra.mxu0 %v61
  %v166 = vpop.f32.mrf.mxu0
  %v167 = vadd.f32 %v82, %v166
  %v168 = vpop.f32.mrf.mxu0
  %v169 = vadd.f32 %v82, %v168
  %170 = vmatmul.bf16.gmra.mxu0 %v62
  %v171 = vpop.f32.mrf.mxu0
  %v172 = vadd.f32 %v82, %v171
  %v173 = vpop.f32.mrf.mxu0
  %v174 = vadd.f32 %v82, %v173
  %175 = vmatmul.bf16.gmra.mxu0 %v63
  %v176 = vpop.f32.mrf.mxu0
  %v177 = vadd.f32 %v82, %v176
  %v178 = vpop.f32.mrf.mxu0
  %v179 = vadd.f32 %v82, %v178
  %180 = vdwg.mxu0
  %v181 = vmul.f32 %v142, 0.5
  %v182 = vmul.f32 %v144, 0.5
  %v183 = vmul.f32 %v147, 0.5
  %v184 = vmul.f32 %v149, 0.5
  %v185 = vmul.f32 %v152, 0.5
  %v186 = vmul.f32 %v154, 0.5
  %v187 = vmul.f32 %v157, 0.5
  %v188 = vmul.f32 %v159, 0.5
  %v189 = vmul.f32 %v162, 0.5
  %v190 = vmul.f32 %v164, 0.5
  %v191 = vmul.f32 %v167, 0.5
  %v192 = vmul.f32 %v169, 0.5
  %v193 = vmul.f32 %v172, 0.5
  %v194 = vmul.f32 %v174, 0.5
  %v195 = vmul.f32 %v177, 0.5
  %v196 = vmul.f32 %v179, 0.5
  %v197 = vmul.f32 %v142, 0.70710677
  %v198 = vmul.f32 %v144, 0.70710677
  %v199 = vmul.f32 %v147, 0.70710677
  %v200 = vmul.f32 %v149, 0.70710677
  %v201 = vmul.f32 %v152, 0.70710677
  %v202 = vmul.f32 %v154, 0.70710677
  %v203 = vmul.f32 %v157, 0.70710677
  %v204 = vmul.f32 %v159, 0.70710677
  %v205 = vmul.f32 %v162, 0.70710677
  %v206 = vmul.f32 %v164, 0.70710677
  %v207 = vmul.f32 %v167, 0.70710677
  %v208 = vmul.f32 %v169, 0.70710677
  %v209 = vmul.f32 %v172, 0.70710677
  %v210 = vmul.f32 %v174, 0.70710677
  %v211 = vmul.f32 %v177, 0.70710677
  %v212 = vmul.f32 %v179, 0.70710677
  %v213 = vmul.f32 %v197, %v197
  %v214 = vmin.f32 16.0, %v213
  %v215 = vmul.f32 %v214, 2.1237322e-06
  %v216 = vadd.f32 %v215, 0.00028619796
  %v217 = vmul.f32 %v214, %v216
  %v218 = vadd.f32 %v217, 0.0036580483
  %v219 = vmul.f32 %v214, %v218
  %v220 = vadd.f32 %v219, 0.05243302
  %v221 = vmul.f32 %v214, %v220
  %v222 = vadd.f32 %v221, 0.18741608
  %v223 = vmul.f32 %v214, %v222
  %v224 = vadd.f32 %v223, 1.1283791
  %v225 = vmul.f32 %v197, %v224
  %v226 = vmul.f32 %v214, 3.8918573e-05
  %v227 = vadd.f32 %v226, 0.001143296
  %v228 = vmul.f32 %v214, %v227
  %v229 = vadd.f32 %v228, 0.014752088
  %v230 = vmul.f32 %v214, %v229
  %v231 = vadd.f32 %v230, 0.112945676
  %v232 = vmul.f32 %v214, %v231
  %v233 = vadd.f32 %v232, 0.4994258
  %v234 = vmul.f32 %v214, %v233
  %v235 = vadd.f32 %v234, 1.0
  %v236 = vrcp.pop %v235
  %v237 = vmul.f32 %v235, %v236
  %v238 = vsub.f32 1.0, %v237
  %v239 = vmul.f32 %v236, %v238
  %v240 = vadd.f32 %v236, %v239
  %vm241 = vweird.f32 %v235
  %vm242 = vweird.f32 %v236
  %vm243 = vmor %vm241, %vm242
  %v244 = vsel %vm243, %v236, %v240
  %v245 = vand.u32 2147483647, %v235
  %vm246 = vcmp.eq.f32.partialorder %v245, 8.507059e+37
  %v247 = vand.u32 %v235, 2147483648
  %v248 = vor.u32 1.1754944e-38, %v247
  %v249 = vsel %vm246, %v248, %v244
  %v250 = vmul.f32 %v225, %v249
  %v251 = vmin.f32 %v250, 1.0
  %v252 = vmax.f32 %v251, -1.0
  %v253 = vmul.f32 %v198, %v198
  %v254 = vmin.f32 16.0, %v253
  %v255 = vmul.f32 %v254, 2.1237322e-06
  %v256 = vadd.f32 %v255, 0.00028619796
  %v257 = vmul.f32 %v254, %v256
  %v258 = vadd.f32 %v257, 0.0036580483
  %v259 = vmul.f32 %v254, %v258
  %v260 = vadd.f32 %v259, 0.05243302
  %v261 = vmul.f32 %v254, %v260
  %v262 = vadd.f32 %v261, 0.18741608
  %v263 = vmul.f32 %v254, %v262
  %v264 = vadd.f32 %v263, 1.1283791
  %v265 = vmul.f32 %v198, %v264
  %v266 = vmul.f32 %v254, 3.8918573e-05
  %v267 = vadd.f32 %v266, 0.001143296
  %v268 = vmul.f32 %v254, %v267
  %v269 = vadd.f32 %v268, 0.014752088
  %v270 = vmul.f32 %v254, %v269
  %v271 = vadd.f32 %v270, 0.112945676
  %v272 = vmul.f32 %v254, %v271
  %v273 = vadd.f32 %v272, 0.4994258
  %v274 = vmul.f32 %v254, %v273
  %v275 = vadd.f32 %v274, 1.0
  %v276 = vrcp.pop %v275
  %v277 = vmul.f32 %v275, %v276
  %v278 = vsub.f32 1.0, %v277
  %v279 = vmul.f32 %v276, %v278
  %v280 = vadd.f32 %v276, %v279
  %vm281 = vweird.f32 %v275
  %vm282 = vweird.f32 %v276
  %vm283 = vmor %vm281, %vm282
  %v284 = vsel %vm283, %v276, %v280
  %v285 = vand.u32 2147483647, %v275
  %vm286 = vcmp.eq.f32.partialorder %v285, 8.507059e+37
  %v287 = vand.u32 %v275, 2147483648
  %v288 = vor.u32 1.1754944e-38, %v287
  %v289 = vsel %vm286, %v288, %v284
  %v290 = vmul.f32 %v265, %v289
  %v291 = vmin.f32 %v290, 1.0
  %v292 = vmax.f32 %v291, -1.0
  %v293 = vmul.f32 %v199, %v199
  %v294 = vmin.f32 16.0, %v293
  %v295 = vmul.f32 %v294, 2.1237322e-06
  %v296 = vadd.f32 %v295, 0.00028619796
  %v297 = vmul.f32 %v294, %v296
  %v298 = vadd.f32 %v297, 0.0036580483
  %v299 = vmul.f32 %v294, %v298
  %v300 = vadd.f32 %v299, 0.05243302
  %v301 = vmul.f32 %v294, %v300
  %v302 = vadd.f32 %v301, 0.18741608
  %v303 = vmul.f32 %v294, %v302
  %v304 = vadd.f32 %v303, 1.1283791
  %v305 = vmul.f32 %v199, %v304
  %v306 = vmul.f32 %v294, 3.8918573e-05
  %v307 = vadd.f32 %v306, 0.001143296
  %v308 = vmul.f32 %v294, %v307
  %v309 = vadd.f32 %v308, 0.014752088
  %v310 = vmul.f32 %v294, %v309
  %v311 = vadd.f32 %v310, 0.112945676
  %v312 = vmul.f32 %v294, %v311
  %v313 = vadd.f32 %v312, 0.4994258
  %v314 = vmul.f32 %v294, %v313
  %v315 = vadd.f32 %v314, 1.0
  %v316 = vrcp.pop %v315
  %v317 = vmul.f32 %v315, %v316
  %v318 = vsub.f32 1.0, %v317
  %v319 = vmul.f32 %v316, %v318
  %v320 = vadd.f32 %v316, %v319
  %vm321 = vweird.f32 %v315
  %vm322 = vweird.f32 %v316
  %vm323 = vmor %vm321, %vm322
  %v324 = vsel %vm323, %v316, %v320
  %v325 = vand.u32 2147483647, %v315
  %vm326 = vcmp.eq.f32.partialorder %v325, 8.507059e+37
  %v327 = vand.u32 %v315, 2147483648
  %v328 = vor.u32 1.1754944e-38, %v327
  %v329 = vsel %vm326, %v328, %v324
  %v330 = vmul.f32 %v305, %v329
  %v331 = vmin.f32 %v330, 1.0
  %v332 = vmax.f32 %v331, -1.0
  %v333 = vmul.f32 %v200, %v200
  %v334 = vmin.f32 16.0, %v333
  %v335 = vmul.f32 %v334, 2.1237322e-06
  %v336 = vadd.f32 %v335, 0.00028619796
  %v337 = vmul.f32 %v334, %v336
  %v338 = vadd.f32 %v337, 0.0036580483
  %v339 = vmul.f32 %v334, %v338
  %v340 = vadd.f32 %v339, 0.05243302
  %v341 = vmul.f32 %v334, %v340
  %v342 = vadd.f32 %v341, 0.18741608
  %v343 = vmul.f32 %v334, %v342
  %v344 = vadd.f32 %v343, 1.1283791
  %v345 = vmul.f32 %v200, %v344
  %v346 = vmul.f32 %v334, 3.8918573e-05
  %v347 = vadd.f32 %v346, 0.001143296
  %v348 = vmul.f32 %v334, %v347
  %v349 = vadd.f32 %v348, 0.014752088
  %v350 = vmul.f32 %v334, %v349
  %v351 = vadd.f32 %v350, 0.112945676
  %v352 = vmul.f32 %v334, %v351
  %v353 = vadd.f32 %v352, 0.4994258
  %v354 = vmul.f32 %v334, %v353
  %v355 = vadd.f32 %v354, 1.0
  %v356 = vrcp.pop %v355
  %v357 = vmul.f32 %v355, %v356
  %v358 = vsub.f32 1.0, %v357
  %v359 = vmul.f32 %v356, %v358
  %v360 = vadd.f32 %v356, %v359
  %vm361 = vweird.f32 %v355
  %vm362 = vweird.f32 %v356
  %vm363 = vmor %vm361, %vm362
  %v364 = vsel %vm363, %v356, %v360
  %v365 = vand.u32 2147483647, %v355
  %vm366 = vcmp.eq.f32.partialorder %v365, 8.507059e+37
  %v367 = vand.u32 %v355, 2147483648
  %v368 = vor.u32 1.1754944e-38, %v367
  %v369 = vsel %vm366, %v368, %v364
  %v370 = vmul.f32 %v345, %v369
  %v371 = vmin.f32 %v370, 1.0
  %v372 = vmax.f32 %v371, -1.0
  %v373 = vmul.f32 %v201, %v201
  %v374 = vmin.f32 16.0, %v373
  %v375 = vmul.f32 %v374, 2.1237322e-06
  %v376 = vadd.f32 %v375, 0.00028619796
  %v377 = vmul.f32 %v374, %v376
  %v378 = vadd.f32 %v377, 0.0036580483
  %v379 = vmul.f32 %v374, %v378
  %v380 = vadd.f32 %v379, 0.05243302
  %v381 = vmul.f32 %v374, %v380
  %v382 = vadd.f32 %v381, 0.18741608
  %v383 = vmul.f32 %v374, %v382
  %v384 = vadd.f32 %v383, 1.1283791
  %v385 = vmul.f32 %v201, %v384
  %v386 = vmul.f32 %v374, 3.8918573e-05
  %v387 = vadd.f32 %v386, 0.001143296
  %v388 = vmul.f32 %v374, %v387
  %v389 = vadd.f32 %v388, 0.014752088
  %v390 = vmul.f32 %v374, %v389
  %v391 = vadd.f32 %v390, 0.112945676
  %v392 = vmul.f32 %v374, %v391
  %v393 = vadd.f32 %v392, 0.4994258
  %v394 = vmul.f32 %v374, %v393
  %v395 = vadd.f32 %v394, 1.0
  %v396 = vrcp.pop %v395
  %v397 = vmul.f32 %v395, %v396
  %v398 = vsub.f32 1.0, %v397
  %v399 = vmul.f32 %v396, %v398
  %v400 = vadd.f32 %v396, %v399
  %vm401 = vweird.f32 %v395
  %vm402 = vweird.f32 %v396
  %vm403 = vmor %vm401, %vm402
  %v404 = vsel %vm403, %v396, %v400
  %v405 = vand.u32 2147483647, %v395
  %vm406 = vcmp.eq.f32.partialorder %v405, 8.507059e+37
  %v407 = vand.u32 %v395, 2147483648
  %v408 = vor.u32 1.1754944e-38, %v407
  %v409 = vsel %vm406, %v408, %v404
  %v410 = vmul.f32 %v385, %v409
  %v411 = vmin.f32 %v410, 1.0
  %v412 = vmax.f32 %v411, -1.0
  %v413 = vmul.f32 %v202, %v202
  %v414 = vmin.f32 16.0, %v413
  %v415 = vmul.f32 %v414, 2.1237322e-06
  %v416 = vadd.f32 %v415, 0.00028619796
  %v417 = vmul.f32 %v414, %v416
  %v418 = vadd.f32 %v417, 0.0036580483
  %v419 = vmul.f32 %v414, %v418
  %v420 = vadd.f32 %v419, 0.05243302
  %v421 = vmul.f32 %v414, %v420
  %v422 = vadd.f32 %v421, 0.18741608
  %v423 = vmul.f32 %v414, %v422
  %v424 = vadd.f32 %v423, 1.1283791
  %v425 = vmul.f32 %v202, %v424
  %v426 = vmul.f32 %v414, 3.8918573e-05
  %v427 = vadd.f32 %v426, 0.001143296
  %v428 = vmul.f32 %v414, %v427
  %v429 = vadd.f32 %v428, 0.014752088
  %v430 = vmul.f32 %v414, %v429
  %v431 = vadd.f32 %v430, 0.112945676
  %v432 = vmul.f32 %v414, %v431
  %v433 = vadd.f32 %v432, 0.4994258
  %v434 = vmul.f32 %v414, %v433
  %v435 = vadd.f32 %v434, 1.0
  %v436 = vrcp.pop %v435
  %v437 = vmul.f32 %v435, %v436
  %v438 = vsub.f32 1.0, %v437
  %v439 = vmul.f32 %v436, %v438
  %v440 = vadd.f32 %v436, %v439
  %vm441 = vweird.f32 %v435
  %vm442 = vweird.f32 %v436
  %vm443 = vmor %vm441, %vm442
  %v444 = vsel %vm443, %v436, %v440
  %v445 = vand.u32 2147483647, %v435
  %vm446 = vcmp.eq.f32.partialorder %v445, 8.507059e+37
  %v447 = vand.u32 %v435, 2147483648
  %v448 = vor.u32 1.1754944e-38, %v447
  %v449 = vsel %vm446, %v448, %v444
  %v450 = vmul.f32 %v425, %v449
  %v451 = vmin.f32 %v450, 1.0
  %v452 = vmax.f32 %v451, -1.0
  %v453 = vmul.f32 %v203, %v203
  %v454 = vmin.f32 16.0, %v453
  %v455 = vmul.f32 %v454, 2.1237322e-06
  %v456 = vadd.f32 %v455, 0.00028619796
  %v457 = vmul.f32 %v454, %v456
  %v458 = vadd.f32 %v457, 0.0036580483
  %v459 = vmul.f32 %v454, %v458
  %v460 = vadd.f32 %v459, 0.05243302
  %v461 = vmul.f32 %v454, %v460
  %v462 = vadd.f32 %v461, 0.18741608
  %v463 = vmul.f32 %v454, %v462
  %v464 = vadd.f32 %v463, 1.1283791
  %v465 = vmul.f32 %v203, %v464
  %v466 = vmul.f32 %v454, 3.8918573e-05
  %v467 = vadd.f32 %v466, 0.001143296
  %v468 = vmul.f32 %v454, %v467
  %v469 = vadd.f32 %v468, 0.014752088
  %v470 = vmul.f32 %v454, %v469
  %v471 = vadd.f32 %v470, 0.112945676
  %v472 = vmul.f32 %v454, %v471
  %v473 = vadd.f32 %v472, 0.4994258
  %v474 = vmul.f32 %v454, %v473
  %v475 = vadd.f32 %v474, 1.0
  %v476 = vrcp.pop %v475
  %v477 = vmul.f32 %v475, %v476
  %v478 = vsub.f32 1.0, %v477
  %v479 = vmul.f32 %v476, %v478
  %v480 = vadd.f32 %v476, %v479
  %vm481 = vweird.f32 %v475
  %vm482 = vweird.f32 %v476
  %vm483 = vmor %vm481, %vm482
  %v484 = vsel %vm483, %v476, %v480
  %v485 = vand.u32 2147483647, %v475
  %vm486 = vcmp.eq.f32.partialorder %v485, 8.507059e+37
  %v487 = vand.u32 %v475, 2147483648
  %v488 = vor.u32 1.1754944e-38, %v487
  %v489 = vsel %vm486, %v488, %v484
  %v490 = vmul.f32 %v465, %v489
  %v491 = vmin.f32 %v490, 1.0
  %v492 = vmax.f32 %v491, -1.0
  %v493 = vmul.f32 %v204, %v204
  %v494 = vmin.f32 16.0, %v493
  %v495 = vmul.f32 %v494, 2.1237322e-06
  %v496 = vadd.f32 %v495, 0.00028619796
  %v497 = vmul.f32 %v494, %v496
  %v498 = vadd.f32 %v497, 0.0036580483
  %v499 = vmul.f32 %v494, %v498
  %v500 = vadd.f32 %v499, 0.05243302
  %v501 = vmul.f32 %v494, %v500
  %v502 = vadd.f32 %v501, 0.18741608
  %v503 = vmul.f32 %v494, %v502
  %v504 = vadd.f32 %v503, 1.1283791
  %v505 = vmul.f32 %v204, %v504
  %v506 = vmul.f32 %v494, 3.8918573e-05
  %v507 = vadd.f32 %v506, 0.001143296
  %v508 = vmul.f32 %v494, %v507
  %v509 = vadd.f32 %v508, 0.014752088
  %v510 = vmul.f32 %v494, %v509
  %v511 = vadd.f32 %v510, 0.112945676
  %v512 = vmul.f32 %v494, %v511
  %v513 = vadd.f32 %v512, 0.4994258
  %v514 = vmul.f32 %v494, %v513
  %v515 = vadd.f32 %v514, 1.0
  %v516 = vrcp.pop %v515
  %v517 = vmul.f32 %v515, %v516
  %v518 = vsub.f32 1.0, %v517
  %v519 = vmul.f32 %v516, %v518
  %v520 = vadd.f32 %v516, %v519
  %vm521 = vweird.f32 %v515
  %vm522 = vweird.f32 %v516
  %vm523 = vmor %vm521, %vm522
  %v524 = vsel %vm523, %v516, %v520
  %v525 = vand.u32 2147483647, %v515
  %vm526 = vcmp.eq.f32.partialorder %v525, 8.507059e+37
  %v527 = vand.u32 %v515, 2147483648
  %v528 = vor.u32 1.1754944e-38, %v527
  %v529 = vsel %vm526, %v528, %v524
  %v530 = vmul.f32 %v505, %v529
  %v531 = vmin.f32 %v530, 1.0
  %v532 = vmax.f32 %v531, -1.0
  %v533 = vmul.f32 %v205, %v205
  %v534 = vmin.f32 16.0, %v533
  %v535 = vmul.f32 %v534, 2.1237322e-06
  %v536 = vadd.f32 %v535, 0.00028619796
  %v537 = vmul.f32 %v534, %v536
  %v538 = vadd.f32 %v537, 0.0036580483
  %v539 = vmul.f32 %v534, %v538
  %v540 = vadd.f32 %v539, 0.05243302
  %v541 = vmul.f32 %v534, %v540
  %v542 = vadd.f32 %v541, 0.18741608
  %v543 = vmul.f32 %v534, %v542
  %v544 = vadd.f32 %v543, 1.1283791
  %v545 = vmul.f32 %v205, %v544
  %v546 = vmul.f32 %v534, 3.8918573e-05
  %v547 = vadd.f32 %v546, 0.001143296
  %v548 = vmul.f32 %v534, %v547
  %v549 = vadd.f32 %v548, 0.014752088
  %v550 = vmul.f32 %v534, %v549
  %v551 = vadd.f32 %v550, 0.112945676
  %v552 = vmul.f32 %v534, %v551
  %v553 = vadd.f32 %v552, 0.4994258
  %v554 = vmul.f32 %v534, %v553
  %v555 = vadd.f32 %v554, 1.0
  %v556 = vrcp.pop %v555
  %v557 = vmul.f32 %v555, %v556
  %v558 = vsub.f32 1.0, %v557
  %v559 = vmul.f32 %v556, %v558
  %v560 = vadd.f32 %v556, %v559
  %vm561 = vweird.f32 %v555
  %vm562 = vweird.f32 %v556
  %vm563 = vmor %vm561, %vm562
  %v564 = vsel %vm563, %v556, %v560
  %v565 = vand.u32 2147483647, %v555
  %vm566 = vcmp.eq.f32.partialorder %v565, 8.507059e+37
  %v567 = vand.u32 %v555, 2147483648
  %v568 = vor.u32 1.1754944e-38, %v567
  %v569 = vsel %vm566, %v568, %v564
  %v570 = vmul.f32 %v545, %v569
  %v571 = vmin.f32 %v570, 1.0
  %v572 = vmax.f32 %v571, -1.0
  %v573 = vmul.f32 %v206, %v206
  %v574 = vmin.f32 16.0, %v573
  %v575 = vmul.f32 %v574, 2.1237322e-06
  %v576 = vadd.f32 %v575, 0.00028619796
  %v577 = vmul.f32 %v574, %v576
  %v578 = vadd.f32 %v577, 0.0036580483
  %v579 = vmul.f32 %v574, %v578
  %v580 = vadd.f32 %v579, 0.05243302
  %v581 = vmul.f32 %v574, %v580
  %v582 = vadd.f32 %v581, 0.18741608
  %v583 = vmul.f32 %v574, %v582
  %v584 = vadd.f32 %v583, 1.1283791
  %v585 = vmul.f32 %v206, %v584
  %v586 = vmul.f32 %v574, 3.8918573e-05
  %v587 = vadd.f32 %v586, 0.001143296
  %v588 = vmul.f32 %v574, %v587
  %v589 = vadd.f32 %v588, 0.014752088
  %v590 = vmul.f32 %v574, %v589
  %v591 = vadd.f32 %v590, 0.112945676
  %v592 = vmul.f32 %v574, %v591
  %v593 = vadd.f32 %v592, 0.4994258
  %v594 = vmul.f32 %v574, %v593
  %v595 = vadd.f32 %v594, 1.0
  %v596 = vrcp.pop %v595
  %v597 = vmul.f32 %v595, %v596
  %v598 = vsub.f32 1.0, %v597
  %v599 = vmul.f32 %v596, %v598
  %v600 = vadd.f32 %v596, %v599
  %vm601 = vweird.f32 %v595
  %vm602 = vweird.f32 %v596
  %vm603 = vmor %vm601, %vm602
  %v604 = vsel %vm603, %v596, %v600
  %v605 = vand.u32 2147483647, %v595
  %vm606 = vcmp.eq.f32.partialorder %v605, 8.507059e+37
  %v607 = vand.u32 %v595, 2147483648
  %v608 = vor.u32 1.1754944e-38, %v607
  %v609 = vsel %vm606, %v608, %v604
  %v610 = vmul.f32 %v585, %v609
  %v611 = vmin.f32 %v610, 1.0
  %v612 = vmax.f32 %v611, -1.0
  %v613 = vmul.f32 %v207, %v207
  %v614 = vmin.f32 16.0, %v613
  %v615 = vmul.f32 %v614, 2.1237322e-06
  %v616 = vadd.f32 %v615, 0.00028619796
  %v617 = vmul.f32 %v614, %v616
  %v618 = vadd.f32 %v617, 0.0036580483
  %v619 = vmul.f32 %v614, %v618
  %v620 = vadd.f32 %v619, 0.05243302
  %v621 = vmul.f32 %v614, %v620
  %v622 = vadd.f32 %v621, 0.18741608
  %v623 = vmul.f32 %v614, %v622
  %v624 = vadd.f32 %v623, 1.1283791
  %v625 = vmul.f32 %v207, %v624
  %v626 = vmul.f32 %v614, 3.8918573e-05
  %v627 = vadd.f32 %v626, 0.001143296
  %v628 = vmul.f32 %v614, %v627
  %v629 = vadd.f32 %v628, 0.014752088
  %v630 = vmul.f32 %v614, %v629
  %v631 = vadd.f32 %v630, 0.112945676
  %v632 = vmul.f32 %v614, %v631
  %v633 = vadd.f32 %v632, 0.4994258
  %v634 = vmul.f32 %v614, %v633
  %v635 = vadd.f32 %v634, 1.0
  %v636 = vrcp.pop %v635
  %v637 = vmul.f32 %v635, %v636
  %v638 = vsub.f32 1.0, %v637
  %v639 = vmul.f32 %v636, %v638
  %v640 = vadd.f32 %v636, %v639
  %vm641 = vweird.f32 %v635
  %vm642 = vweird.f32 %v636
  %vm643 = vmor %vm641, %vm642
  %v644 = vsel %vm643, %v636, %v640
  %v645 = vand.u32 2147483647, %v635
  %vm646 = vcmp.eq.f32.partialorder %v645, 8.507059e+37
  %v647 = vand.u32 %v635, 2147483648
  %v648 = vor.u32 1.1754944e-38, %v647
  %v649 = vsel %vm646, %v648, %v644
  %v650 = vmul.f32 %v625, %v649
  %v651 = vmin.f32 %v650, 1.0
  %v652 = vmax.f32 %v651, -1.0
  %v653 = vmul.f32 %v208, %v208
  %v654 = vmin.f32 16.0, %v653
  %v655 = vmul.f32 %v654, 2.1237322e-06
  %v656 = vadd.f32 %v655, 0.00028619796
  %v657 = vmul.f32 %v654, %v656
  %v658 = vadd.f32 %v657, 0.0036580483
  %v659 = vmul.f32 %v654, %v658
  %v660 = vadd.f32 %v659, 0.05243302
  %v661 = vmul.f32 %v654, %v660
  %v662 = vadd.f32 %v661, 0.18741608
  %v663 = vmul.f32 %v654, %v662
  %v664 = vadd.f32 %v663, 1.1283791
  %v665 = vmul.f32 %v208, %v664
  %v666 = vmul.f32 %v654, 3.8918573e-05
  %v667 = vadd.f32 %v666, 0.001143296
  %v668 = vmul.f32 %v654, %v667
  %v669 = vadd.f32 %v668, 0.014752088
  %v670 = vmul.f32 %v654, %v669
  %v671 = vadd.f32 %v670, 0.112945676
  %v672 = vmul.f32 %v654, %v671
  %v673 = vadd.f32 %v672, 0.4994258
  %v674 = vmul.f32 %v654, %v673
  %v675 = vadd.f32 %v674, 1.0
  %v676 = vrcp.pop %v675
  %v677 = vmul.f32 %v675, %v676
  %v678 = vsub.f32 1.0, %v677
  %v679 = vmul.f32 %v676, %v678
  %v680 = vadd.f32 %v676, %v679
  %vm681 = vweird.f32 %v675
  %vm682 = vweird.f32 %v676
  %vm683 = vmor %vm681, %vm682
  %v684 = vsel %vm683, %v676, %v680
  %v685 = vand.u32 2147483647, %v675
  %vm686 = vcmp.eq.f32.partialorder %v685, 8.507059e+37
  %v687 = vand.u32 %v675, 2147483648
  %v688 = vor.u32 1.1754944e-38, %v687
  %v689 = vsel %vm686, %v688, %v684
  %v690 = vmul.f32 %v665, %v689
  %v691 = vmin.f32 %v690, 1.0
  %v692 = vmax.f32 %v691, -1.0
  %v693 = vmul.f32 %v209, %v209
  %v694 = vmin.f32 16.0, %v693
  %v695 = vmul.f32 %v694, 2.1237322e-06
  %v696 = vadd.f32 %v695, 0.00028619796
  %v697 = vmul.f32 %v694, %v696
  %v698 = vadd.f32 %v697, 0.0036580483
  %v699 = vmul.f32 %v694, %v698
  %v700 = vadd.f32 %v699, 0.05243302
  %v701 = vmul.f32 %v694, %v700
  %v702 = vadd.f32 %v701, 0.18741608
  %v703 = vmul.f32 %v694, %v702
  %v704 = vadd.f32 %v703, 1.1283791
  %v705 = vmul.f32 %v209, %v704
  %v706 = vmul.f32 %v694, 3.8918573e-05
  %v707 = vadd.f32 %v706, 0.001143296
  %v708 = vmul.f32 %v694, %v707
  %v709 = vadd.f32 %v708, 0.014752088
  %v710 = vmul.f32 %v694, %v709
  %v711 = vadd.f32 %v710, 0.112945676
  %v712 = vmul.f32 %v694, %v711
  %v713 = vadd.f32 %v712, 0.4994258
  %v714 = vmul.f32 %v694, %v713
  %v715 = vadd.f32 %v714, 1.0
  %v716 = vrcp.pop %v715
  %v717 = vmul.f32 %v715, %v716
  %v718 = vsub.f32 1.0, %v717
  %v719 = vmul.f32 %v716, %v718
  %v720 = vadd.f32 %v716, %v719
  %vm721 = vweird.f32 %v715
  %vm722 = vweird.f32 %v716
  %vm723 = vmor %vm721, %vm722
  %v724 = vsel %vm723, %v716, %v720
  %v725 = vand.u32 2147483647, %v715
  %vm726 = vcmp.eq.f32.partialorder %v725, 8.507059e+37
  %v727 = vand.u32 %v715, 2147483648
  %v728 = vor.u32 1.1754944e-38, %v727
  %v729 = vsel %vm726, %v728, %v724
  %v730 = vmul.f32 %v705, %v729
  %v731 = vmin.f32 %v730, 1.0
  %v732 = vmax.f32 %v731, -1.0
  %v733 = vmul.f32 %v210, %v210
  %v734 = vmin.f32 16.0, %v733
  %v735 = vmul.f32 %v734, 2.1237322e-06
  %v736 = vadd.f32 %v735, 0.00028619796
  %v737 = vmul.f32 %v734, %v736
  %v738 = vadd.f32 %v737, 0.0036580483
  %v739 = vmul.f32 %v734, %v738
  %v740 = vadd.f32 %v739, 0.05243302
  %v741 = vmul.f32 %v734, %v740
  %v742 = vadd.f32 %v741, 0.18741608
  %v743 = vmul.f32 %v734, %v742
  %v744 = vadd.f32 %v743, 1.1283791
  %v745 = vmul.f32 %v210, %v744
  %v746 = vmul.f32 %v734, 3.8918573e-05
  %v747 = vadd.f32 %v746, 0.001143296
  %v748 = vmul.f32 %v734, %v747
  %v749 = vadd.f32 %v748, 0.014752088
  %v750 = vmul.f32 %v734, %v749
  %v751 = vadd.f32 %v750, 0.112945676
  %v752 = vmul.f32 %v734, %v751
  %v753 = vadd.f32 %v752, 0.4994258
  %v754 = vmul.f32 %v734, %v753
  %v755 = vadd.f32 %v754, 1.0
  %v756 = vrcp.pop %v755
  %v757 = vmul.f32 %v755, %v756
  %v758 = vsub.f32 1.0, %v757
  %v759 = vmul.f32 %v756, %v758
  %v760 = vadd.f32 %v756, %v759
  %vm761 = vweird.f32 %v755
  %vm762 = vweird.f32 %v756
  %vm763 = vmor %vm761, %vm762
  %v764 = vsel %vm763, %v756, %v760
  %v765 = vand.u32 2147483647, %v755
  %vm766 = vcmp.eq.f32.partialorder %v765, 8.507059e+37
  %v767 = vand.u32 %v755, 2147483648
  %v768 = vor.u32 1.1754944e-38, %v767
  %v769 = vsel %vm766, %v768, %v764
  %v770 = vmul.f32 %v745, %v769
  %v771 = vmin.f32 %v770, 1.0
  %v772 = vmax.f32 %v771, -1.0
  %v773 = vmul.f32 %v211, %v211
  %v774 = vmin.f32 16.0, %v773
  %v775 = vmul.f32 %v774, 2.1237322e-06
  %v776 = vadd.f32 %v775, 0.00028619796
  %v777 = vmul.f32 %v774, %v776
  %v778 = vadd.f32 %v777, 0.0036580483
  %v779 = vmul.f32 %v774, %v778
  %v780 = vadd.f32 %v779, 0.05243302
  %v781 = vmul.f32 %v774, %v780
  %v782 = vadd.f32 %v781, 0.18741608
  %v783 = vmul.f32 %v774, %v782
  %v784 = vadd.f32 %v783, 1.1283791
  %v785 = vmul.f32 %v211, %v784
  %v786 = vmul.f32 %v774, 3.8918573e-05
  %v787 = vadd.f32 %v786, 0.001143296
  %v788 = vmul.f32 %v774, %v787
  %v789 = vadd.f32 %v788, 0.014752088
  %v790 = vmul.f32 %v774, %v789
  %v791 = vadd.f32 %v790, 0.112945676
  %v792 = vmul.f32 %v774, %v791
  %v793 = vadd.f32 %v792, 0.4994258
  %v794 = vmul.f32 %v774, %v793
  %v795 = vadd.f32 %v794, 1.0
  %v796 = vrcp.pop %v795
  %v797 = vmul.f32 %v795, %v796
  %v798 = vsub.f32 1.0, %v797
  %v799 = vmul.f32 %v796, %v798
  %v800 = vadd.f32 %v796, %v799
  %vm801 = vweird.f32 %v795
  %vm802 = vweird.f32 %v796
  %vm803 = vmor %vm801, %vm802
  %v804 = vsel %vm803, %v796, %v800
  %v805 = vand.u32 2147483647, %v795
  %vm806 = vcmp.eq.f32.partialorder %v805, 8.507059e+37
  %v807 = vand.u32 %v795, 2147483648
  %v808 = vor.u32 1.1754944e-38, %v807
  %v809 = vsel %vm806, %v808, %v804
  %v810 = vmul.f32 %v785, %v809
  %v811 = vmin.f32 %v810, 1.0
  %v812 = vmax.f32 %v811, -1.0
  %v813 = vmul.f32 %v212, %v212
  %v814 = vmin.f32 16.0, %v813
  %v815 = vmul.f32 %v814, 2.1237322e-06
  %v816 = vadd.f32 %v815, 0.00028619796
  %v817 = vmul.f32 %v814, %v816
  %v818 = vadd.f32 %v817, 0.0036580483
  %v819 = vmul.f32 %v814, %v818
  %v820 = vadd.f32 %v819, 0.05243302
  %v821 = vmul.f32 %v814, %v820
  %v822 = vadd.f32 %v821, 0.18741608
  %v823 = vmul.f32 %v814, %v822
  %v824 = vadd.f32 %v823, 1.1283791
  %v825 = vmul.f32 %v212, %v824
  %v826 = vmul.f32 %v814, 3.8918573e-05
  %v827 = vadd.f32 %v826, 0.001143296
  %v828 = vmul.f32 %v814, %v827
  %v829 = vadd.f32 %v828, 0.014752088
  %v830 = vmul.f32 %v814, %v829
  %v831 = vadd.f32 %v830, 0.112945676
  %v832 = vmul.f32 %v814, %v831
  %v833 = vadd.f32 %v832, 0.4994258
  %v834 = vmul.f32 %v814, %v833
  %v835 = vadd.f32 %v834, 1.0
  %v836 = vrcp.pop %v835
  %v837 = vmul.f32 %v835, %v836
  %v838 = vsub.f32 1.0, %v837
  %v839 = vmul.f32 %v836, %v838
  %v840 = vadd.f32 %v836, %v839
  %vm841 = vweird.f32 %v835
  %vm842 = vweird.f32 %v836
  %vm843 = vmor %vm841, %vm842
  %v844 = vsel %vm843, %v836, %v840
  %v845 = vand.u32 2147483647, %v835
  %vm846 = vcmp.eq.f32.partialorder %v845, 8.507059e+37
  %v847 = vand.u32 %v835, 2147483648
  %v848 = vor.u32 1.1754944e-38, %v847
  %v849 = vsel %vm846, %v848, %v844
  %v850 = vmul.f32 %v825, %v849
  %v851 = vmin.f32 %v850, 1.0
  %v852 = vmax.f32 %v851, -1.0
  %v853 = vadd.f32 %v252, 1.0
  %v854 = vadd.f32 %v292, 1.0
  %v855 = vadd.f32 %v332, 1.0
  %v856 = vadd.f32 %v372, 1.0
  %v857 = vadd.f32 %v412, 1.0
  %v858 = vadd.f32 %v452, 1.0
  %v859 = vadd.f32 %v492, 1.0
  %v860 = vadd.f32 %v532, 1.0
  %v861 = vadd.f32 %v572, 1.0
  %v862 = vadd.f32 %v612, 1.0
  %v863 = vadd.f32 %v652, 1.0
  %v864 = vadd.f32 %v692, 1.0
  %v865 = vadd.f32 %v732, 1.0
  %v866 = vadd.f32 %v772, 1.0
  %v867 = vadd.f32 %v812, 1.0
  %v868 = vadd.f32 %v852, 1.0
  %v869 = vmul.f32 %v181, %v853
  %v870 = vmul.f32 %v182, %v854
  %v871 = vmul.f32 %v183, %v855
  %v872 = vmul.f32 %v184, %v856
  %v873 = vmul.f32 %v185, %v857
  %v874 = vmul.f32 %v186, %v858
  %v875 = vmul.f32 %v187, %v859
  %v876 = vmul.f32 %v188, %v860
  %v877 = vmul.f32 %v189, %v861
  %v878 = vmul.f32 %v190, %v862
  %v879 = vmul.f32 %v191, %v863
  %v880 = vmul.f32 %v192, %v864
  %v881 = vmul.f32 %v193, %v865
  %v882 = vmul.f32 %v194, %v866
  %v883 = vmul.f32 %v195, %v867
  %v884 = vmul.f32 %v196, %v868
  %v885 = vld [vmem:[#allocation2] sm:$0xff]
  %v886 = vld [vmem:[#allocation2 + $0x8] sm:$0xff]
  %v887 = vld [vmem:[#allocation2 + $0x10] sm:$0xff]
  %v888 = vld [vmem:[#allocation2 + $0x18] sm:$0xff]
  %v889 = vld [vmem:[#allocation2 + $0x20] sm:$0xff]
  %v890 = vld [vmem:[#allocation2 + $0x28] sm:$0xff]
  %v891 = vld [vmem:[#allocation2 + $0x30] sm:$0xff]
  %v892 = vld [vmem:[#allocation2 + $0x38] sm:$0xff]
  %v893 = vld [vmem:[#allocation2 + $0x40] sm:$0xff]
  %v894 = vld [vmem:[#allocation2 + $0x48] sm:$0xff]
  %v895 = vld [vmem:[#allocation2 + $0x50] sm:$0xff]
  %v896 = vld [vmem:[#allocation2 + $0x58] sm:$0xff]
  %v897 = vld [vmem:[#allocation2 + $0x60] sm:$0xff]
  %v898 = vld [vmem:[#allocation2 + $0x68] sm:$0xff]
  %v899 = vld [vmem:[#allocation2 + $0x70] sm:$0xff]
  %v900 = vld [vmem:[#allocation2 + $0x78] sm:$0xff]
  %v901 = vpack.c.bf16 %v870, %v869
  %v902 = vpack.c.bf16 %v872, %v871
  %v903 = vpack.c.bf16 %v874, %v873
  %v904 = vpack.c.bf16 %v876, %v875
  %v905 = vpack.c.bf16 %v878, %v877
  %v906 = vpack.c.bf16 %v880, %v879
  %v907 = vpack.c.bf16 %v882, %v881
  %v908 = vpack.c.bf16 %v884, %v883
  %v909 = vld [vmem:[%s3] sm:$0xf]
  %v910 = vld [vmem:[%s3 + $0x4] sm:$0xf]
  %v911 = vld [vmem:[%s3 + $0x8] sm:$0xf]
  %v912 = vld [vmem:[%s3 + $0xc] sm:$0xf]
  %v913 = vld [vmem:[%s3 + $0x10] sm:$0xf]
  %v914 = vld [vmem:[%s3 + $0x14] sm:$0xf]
  %v915 = vld [vmem:[%s3 + $0x18] sm:$0xf]
  %v916 = vld [vmem:[%s3 + $0x1c] sm:$0xf]
  %v917 = vld [vmem:[%s3 + $0x20] sm:$0xf]
  %v918 = vld [vmem:[%s3 + $0x24] sm:$0xf]
  %v919 = vld [vmem:[%s3 + $0x28] sm:$0xf]
  %v920 = vld [vmem:[%s3 + $0x2c] sm:$0xf]
  %v921 = vld [vmem:[%s3 + $0x30] sm:$0xf]
  %v922 = vld [vmem:[%s3 + $0x34] sm:$0xf]
  %v923 = vld [vmem:[%s3 + $0x38] sm:$0xf]
  %v924 = vld [vmem:[%s3 + $0x3c] sm:$0xf]
  %v941 = vunpack.c.l.b16 %v909
  %v942 = vunpack.c.l.b16 %v910
  %v943 = vunpack.c.l.b16 %v911
  %v944 = vunpack.c.l.b16 %v912
  %v945 = vunpack.c.l.b16 %v913
  %v946 = vunpack.c.l.b16 %v914
  %v947 = vunpack.c.l.b16 %v915
  %v948 = vunpack.c.l.b16 %v916
  %v949 = vunpack.c.l.b16 %v917
  %v950 = vunpack.c.l.b16 %v918
  %v951 = vunpack.c.l.b16 %v919
  %v952 = vunpack.c.l.b16 %v920
  %v953 = vunpack.c.l.b16 %v921
  %v954 = vunpack.c.l.b16 %v922
  %v955 = vunpack.c.l.b16 %v923
  %v956 = vunpack.c.l.b16 %v924
  %v957 = vpack.c.b16 %v942, %v941
  %v958 = vpack.c.b16 %v944, %v943
  %v959 = vpack.c.b16 %v946, %v945
  %v960 = vpack.c.b16 %v948, %v947
  %v961 = vpack.c.b16 %v950, %v949
  %v962 = vpack.c.b16 %v952, %v951
  %v963 = vpack.c.b16 %v954, %v953
  %v964 = vpack.c.b16 %v956, %v955
  %973 = vmatpush.bf16.msra.mxu0 %v964
  %974 = vmatpush.bf16.msra.mxu0 %v963
  %975 = vmatpush.bf16.msra.mxu0 %v962
  %976 = vmatpush.bf16.msra.mxu0 %v961
  %977 = vmatpush.bf16.msra.mxu0 %v960
  %978 = vmatpush.bf16.msra.mxu0 %v959
  %979 = vmatpush.bf16.msra.mxu0 %v958
  %980 = vmatpush.bf16.msra.mxu0 %v957
  %981 = vmatmul.bf16.gmra.mxu0 %v901
  %v982 = vpop.f32.mrf.mxu0
  %v983 = vadd.f32 0.0, %v982
  %v984 = vpop.f32.mrf.mxu0
  %v985 = vadd.f32 0.0, %v984
  %986 = vmatmul.bf16.gmra.mxu0 %v902
  %v987 = vpop.f32.mrf.mxu0
  %v988 = vadd.f32 0.0, %v987
  %v989 = vpop.f32.mrf.mxu0
  %v990 = vadd.f32 0.0, %v989
  %991 = vmatmul.bf16.gmra.mxu0 %v903
  %v992 = vpop.f32.mrf.mxu0
  %v993 = vadd.f32 0.0, %v992
  %v994 = vpop.f32.mrf.mxu0
  %v995 = vadd.f32 0.0, %v994
  %996 = vmatmul.bf16.gmra.mxu0 %v904
  %v997 = vpop.f32.mrf.mxu0
  %v998 = vadd.f32 0.0, %v997
  %v999 = vpop.f32.mrf.mxu0
  %v1000 = vadd.f32 0.0, %v999
  %1001 = vmatmul.bf16.gmra.mxu0 %v905
  %v1002 = vpop.f32.mrf.mxu0
  %v1003 = vadd.f32 0.0, %v1002
  %v1004 = vpop.f32.mrf.mxu0
  %v1005 = vadd.f32 0.0, %v1004
  %1006 = vmatmul.bf16.gmra.mxu0 %v906
  %v1007 = vpop.f32.mrf.mxu0
  %v1008 = vadd.f32 0.0, %v1007
  %v1009 = vpop.f32.mrf.mxu0
  %v1010 = vadd.f32 0.0, %v1009
  %1011 = vmatmul.bf16.gmra.mxu0 %v907
  %v1012 = vpop.f32.mrf.mxu0
  %v1013 = vadd.f32 0.0, %v1012
  %v1014 = vpop.f32.mrf.mxu0
  %v1015 = vadd.f32 0.0, %v1014
  %1016 = vmatmul.bf16.gmra.mxu0 %v908
  %v1017 = vpop.f32.mrf.mxu0
  %v1018 = vadd.f32 0.0, %v1017
  %v1019 = vpop.f32.mrf.mxu0
  %v1020 = vadd.f32 0.0, %v1019
  %1021 = vdwg.mxu0
  %v1022 = vadd.f32 %v885, %v983
  %v1023 = vadd.f32 %v886, %v985
  %v1024 = vadd.f32 %v887, %v988
  %v1025 = vadd.f32 %v888, %v990
  %v1026 = vadd.f32 %v889, %v993
  %v1027 = vadd.f32 %v890, %v995
  %v1028 = vadd.f32 %v891, %v998
  %v1029 = vadd.f32 %v892, %v1000
  %v1030 = vadd.f32 %v893, %v1003
  %v1031 = vadd.f32 %v894, %v1005
  %v1032 = vadd.f32 %v895, %v1008
  %v1033 = vadd.f32 %v896, %v1010
  %v1034 = vadd.f32 %v897, %v1013
  %v1035 = vadd.f32 %v898, %v1015
  %v1036 = vadd.f32 %v899, %v1018
  %v1037 = vadd.f32 %v900, %v1020
  %1038 = vst [vmem:[#allocation2] sm:$0xff] %v1022
  %1039 = vst [vmem:[#allocation2 + $0x8] sm:$0xff] %v1023
  %1040 = vst [vmem:[#allocation2 + $0x10] sm:$0xff] %v1024
  %1041 = vst [vmem:[#allocation2 + $0x18] sm:$0xff] %v1025
  %1042 = vst [vmem:[#allocation2 + $0x20] sm:$0xff] %v1026
  %1043 = vst [vmem:[#allocation2 + $0x28] sm:$0xff] %v1027
  %1044 = vst [vmem:[#allocation2 + $0x30] sm:$0xff] %v1028
  %1045 = vst [vmem:[#allocation2 + $0x38] sm:$0xff] %v1029
  %1046 = vst [vmem:[#allocation2 + $0x40] sm:$0xff] %v1030
  %1047 = vst [vmem:[#allocation2 + $0x48] sm:$0xff] %v1031
  %1048 = vst [vmem:[#allocation2 + $0x50] sm:$0xff] %v1032
  %1049 = vst [vmem:[#allocation2 + $0x58] sm:$0xff] %v1033
  %1050 = vst [vmem:[#allocation2 + $0x60] sm:$0xff] %v1034
  %1051 = vst [vmem:[#allocation2 + $0x68] sm:$0xff] %v1035
  %1052 = vst [vmem:[#allocation2 + $0x70] sm:$0xff] %v1036
  %1053 = vst [vmem:[#allocation2 + $0x78] sm:$0xff] %v1037
  // Predicated region
  $region26: #{transformer_layer.5} parent=0 // pred_check
    %p1054 = pneg %p20
  $region27: #{transformer_layer.5} parent=0 // pred_check_branch
    %1056 = sbr.rel (%p1054) target = $region29
  $region28: #{transformer_layer.5} parent=0 // pred_region
    %v1057 = vld [vmem:[#allocation2] sm:$0xff]
    %v1058 = vld [vmem:[#allocation2 + $0x8] sm:$0xff]
    %v1059 = vld [vmem:[#allocation2 + $0x10] sm:$0xff]
    %v1060 = vld [vmem:[#allocation2 + $0x18] sm:$0xff]
    %v1061 = vld [vmem:[#allocation2 + $0x20] sm:$0xff]
    %v1062 = vld [vmem:[#allocation2 + $0x28] sm:$0xff]
    %v1063 = vld [vmem:[#allocation2 + $0x30] sm:$0xff]
    %v1064 = vld [vmem:[#allocation2 + $0x38] sm:$0xff]
    %v1065 = vld [vmem:[#allocation2 + $0x40] sm:$0xff]
    %v1066 = vld [vmem:[#allocation2 + $0x48] sm:$0xff]
    %v1067 = vld [vmem:[#allocation2 + $0x50] sm:$0xff]
    %v1068 = vld [vmem:[#allocation2 + $0x58] sm:$0xff]
    %v1069 = vld [vmem:[#allocation2 + $0x60] sm:$0xff]
    %v1070 = vld [vmem:[#allocation2 + $0x68] sm:$0xff]
    %v1071 = vld [vmem:[#allocation2 + $0x70] sm:$0xff]
    %v1072 = vld [vmem:[#allocation2 + $0x78] sm:$0xff]
    %v1073 = vld [vmem:[%s4] sm:$0x1]
    %v1075 = vperm.slane %v1073, 0
    %v1077 = vadd.f32 %v1057, %v1075
    %v1078 = vadd.f32 %v1058, %v1075
    %v1079 = vadd.f32 %v1059, %v1075
    %v1080 = vadd.f32 %v1060, %v1075
    %v1081 = vadd.f32 %v1061, %v1075
    %v1082 = vadd.f32 %v1062, %v1075
    %v1083 = vadd.f32 %v1063, %v1075
    %v1084 = vadd.f32 %v1064, %v1075
    %v1085 = vadd.f32 %v1065, %v1075
    %v1086 = vadd.f32 %v1066, %v1075
    %v1087 = vadd.f32 %v1067, %v1075
    %v1088 = vadd.f32 %v1068, %v1075
    %v1089 = vadd.f32 %v1069, %v1075
    %v1090 = vadd.f32 %v1070, %v1075
    %v1091 = vadd.f32 %v1071, %v1075
    %v1092 = vadd.f32 %v1072, %v1075
    %v1093 = vadd.f32 %v1077, %v40
    %v1094 = vadd.f32 %v1078, %v41
    %v1095 = vadd.f32 %v1079, %v42
    %v1096 = vadd.f32 %v1080, %v43
    %v1097 = vadd.f32 %v1081, %v44
    %v1098 = vadd.f32 %v1082, %v45
    %v1099 = vadd.f32 %v1083, %v46
    %v1100 = vadd.f32 %v1084, %v47
    %v1101 = vadd.f32 %v1085, %v48
    %v1102 = vadd.f32 %v1086, %v49
    %v1103 = vadd.f32 %v1087, %v50
    %v1104 = vadd.f32 %v1088, %v51
    %v1105 = vadd.f32 %v1089, %v52
    %v1106 = vadd.f32 %v1090, %v53
    %v1107 = vadd.f32 %v1091, %v54
    %v1108 = vadd.f32 %v1092, %v55
    %1109 = vst [vmem:[%s5] sm:$0xff] %v1093
    %1110 = vst [vmem:[%s5 + $0x8] sm:$0xff] %v1094
    %1111 = vst [vmem:[%s5 + $0x10] sm:$0xff] %v1095
    %1112 = vst [vmem:[%s5 + $0x18] sm:$0xff] %v1096
    %1113 = vst [vmem:[%s5 + $0x20] sm:$0xff] %v1097
    %1114 = vst [vmem:[%s5 + $0x28] sm:$0xff] %v1098
    %1115 = vst [vmem:[%s5 + $0x30] sm:$0xff] %v1099
    %1116 = vst [vmem:[%s5 + $0x38] sm:$0xff] %v1100
    %1117 = vst [vmem:[%s5 + $0x40] sm:$0xff] %v1101
    %1118 = vst [vmem:[%s5 + $0x48] sm:$0xff] %v1102
    %1119 = vst [vmem:[%s5 + $0x50] sm:$0xff] %v1103
    %1120 = vst [vmem:[%s5 + $0x58] sm:$0xff] %v1104
    %1121 = vst [vmem:[%s5 + $0x60] sm:$0xff] %v1105
    %1122 = vst [vmem:[%s5 + $0x68] sm:$0xff] %v1106
    %1123 = vst [vmem:[%s5 + $0x70] sm:$0xff] %v1107
    %1124 = vst [vmem:[%s5 + $0x78] sm:$0xff] %v1108
  $region29: #{transformer_layer.5} parent=0 // pred_fallthru
    _
  // Predicated region
  $region30: #{transformer_layer.5} parent=0 // pred_check
    _
  $region31: #{transformer_layer.5} parent=0 // pred_check_branch
    %1126 = sbr.rel (0) target = $region33
  $region32: #{transformer_layer.5} parent=0 // pred_region
    _
  $region33: #{transformer_layer.5} parent=0 // pred_fallthru
    _
  // Predicated region
  $region34: #{transformer_layer.5} parent=0 // pred_check
    _
  $region35: #{transformer_layer.5} parent=0 // pred_check_branch
    %1128 = sbr.rel (0) target = $region37
  $region36: #{transformer_layer.5} parent=0 // pred_region
    _
  $region37: #{transformer_layer.5} parent=0 // pred_fallthru
    _

// kernel: transformer_layer.4
$region0: #{transformer_layer.4}
  #allocation0 [shape = 'u32[]', space=smem, size = 0x4, offset = 0x4, fixed_abs, tag = 'smem constant byte address 0x4 - core index']
  #allocation1 [shape = 'u32[72,128]{1,0:T(1,128)}', space=vmem, size = 0x9000, scoped, tag = 'internal scratch']
  #allocation2 [shape = 'f32[128,1]{1,0:T(8,128)}', space=vmem, size = 0x10000, scoped, tag = 'scratch operand']
  #allocation3 [shape = 'f32[128,1]{1,0:T(8,128)}', space=vmem, size = 0x10000, scoped, tag = 'scratch operand']
  #allocation4 [shape = 'f32[128,128]{1,0:T(8,128)}', space=vmem, size = 0x10000, scoped, tag = 'scratch operand']
  #allocation5 [shape = 'bf16[1,128,128]{2,1,0:T(8,128)(2,1)}', space=vmem, size = 0x8000, scoped, tag = 'scratch operand']
  #allocation6 [shape = 'f32[1,128,1]{2,1,0:T(8,128)}', space=vmem, size = 0x10000, scoped, tag = 'scratch operand']
  %s0 = inlined_call_operand.vmem [shape: bf16[128,128], index: 0, kind: input, shape index: {}]
  %s1 = inlined_call_operand.vmem [shape: bf16[128,128], index: 1, kind: input, shape index: {}]
  %s2 = inlined_call_operand.vmem [shape: bf16[128,128], index: 2, kind: input, shape index: {}]
  %s3 = inlined_call_operand.vmem [shape: f32[128,128], index: 3, kind: input, shape index: {}]
  %s4 = inlined_call_operand.vmem [shape: f32[1,128], index: 4, kind: input, shape index: {}]
  %s5 = inlined_call_operand.vmem [shape: f32[128,128], index: 5, kind: output, shape index: {0}]
  %s6 = inlined_call_operand.vmem [shape: f32[128,128], index: 6, kind: output, shape index: {1}]
  %7 = xla_tuple %s5, %s6
  %s8 = sld [smem:[#allocation0]]
  $region46: #{transformer_layer.4} parent=0
    _
  %s10 = ssub.s32 1, %s8
  %s11 = scalar_select 0, %s10, %s8
  // Predicated region
  $region2: #{transformer_layer.4} parent=0 // pred_check
    _
  $region3: #{transformer_layer.4} parent=0 // pred_check_branch
    %13 = sbr.rel (0) target = $region5
  $region4: #{transformer_layer.4} parent=0 // pred_region
    _
  $region5: #{transformer_layer.4} parent=0 // pred_fallthru
    _
  // Predicated region
  $region6: #{transformer_layer.4} parent=0 // pred_check
    _
  $region7: #{transformer_layer.4} parent=0 // pred_check_branch
    %15 = sbr.rel (0) target = $region9
  $region8: #{transformer_layer.4} parent=0 // pred_region
    _
  $region9: #{transformer_layer.4} parent=0 // pred_fallthru
    _
  // Predicated region
  $region10: #{transformer_layer.4} parent=0 // pred_check
    _
  $region11: #{transformer_layer.4} parent=0 // pred_check_branch
    %17 = sbr.rel (0) target = $region13
  $region12: #{transformer_layer.4} parent=0 // pred_region
    _
  $region13: #{transformer_layer.4} parent=0 // pred_fallthru
    _
  // Predicated region
  $region14: #{transformer_layer.4} parent=0 // pred_check
    _
  $region15: #{transformer_layer.4} parent=0 // pred_check_branch
    %19 = sbr.rel (0) target = $region17
  $region16: #{transformer_layer.4} parent=0 // pred_region
    _
  $region17: #{transformer_layer.4} parent=0 // pred_fallthru
    _
  // Predicated region
  $region18: #{transformer_layer.4} parent=0 // pred_check
    _
  $region19: #{transformer_layer.4} parent=0 // pred_check_branch
    %21 = sbr.rel (0) target = $region21
  $region20: #{transformer_layer.4} parent=0 // pred_region
    _
  $region21: #{transformer_layer.4} parent=0 // pred_fallthru
    _
  %p22 = scmp.eq.s32.totalorder 0, 0
  // Predicated region
  $region22: #{transformer_layer.4} parent=0 // pred_check
    %p23 = pneg %p22
  $region23: #{transformer_layer.4} parent=0 // pred_check_branch
    %25 = sbr.rel (%p23) target = $region25
  $region24: #{transformer_layer.4} parent=0 // pred_region
    %vm26 = vcmask 7168
    %27 = vst.msk [vmem:[#allocation2] sm:$0xff] %vm26, -1e+30
    %28 = vst.msk [vmem:[#allocation2 + $0x8] sm:$0xff] %vm26, -1e+30
    %29 = vst.msk [vmem:[#allocation2 + $0x10] sm:$0xff] %vm26, -1e+30
    %30 = vst.msk [vmem:[#allocation2 + $0x18] sm:$0xff] %vm26, -1e+30
    %31 = vst.msk [vmem:[#allocation2 + $0x20] sm:$0xff] %vm26, -1e+30
    %32 = vst.msk [vmem:[#allocation2 + $0x28] sm:$0xff] %vm26, -1e+30
    %33 = vst.msk [vmem:[#allocation2 + $0x30] sm:$0xff] %vm26, -1e+30
    %34 = vst.msk [vmem:[#allocation2 + $0x38] sm:$0xff] %vm26, -1e+30
    %35 = vst.msk [vmem:[#allocation2 + $0x40] sm:$0xff] %vm26, -1e+30
    %36 = vst.msk [vmem:[#allocation2 + $0x48] sm:$0xff] %vm26, -1e+30
    %37 = vst.msk [vmem:[#allocation2 + $0x50] sm:$0xff] %vm26, -1e+30
    %38 = vst.msk [vmem:[#allocation2 + $0x58] sm:$0xff] %vm26, -1e+30
    %39 = vst.msk [vmem:[#allocation2 + $0x60] sm:$0xff] %vm26, -1e+30
    %40 = vst.msk [vmem:[#allocation2 + $0x68] sm:$0xff] %vm26, -1e+30
    %41 = vst.msk [vmem:[#allocation2 + $0x70] sm:$0xff] %vm26, -1e+30
    %42 = vst.msk [vmem:[#allocation2 + $0x78] sm:$0xff] %vm26, -1e+30
    %43 = vst.msk [vmem:[#allocation3] sm:$0xff] %vm26, 0.0
    %44 = vst.msk [vmem:[#allocation3 + $0x8] sm:$0xff] %vm26, 0.0
    %45 = vst.msk [vmem:[#allocation3 + $0x10] sm:$0xff] %vm26, 0.0
    %46 = vst.msk [vmem:[#allocation3 + $0x18] sm:$0xff] %vm26, 0.0
    %47 = vst.msk [vmem:[#allocation3 + $0x20] sm:$0xff] %vm26, 0.0
    %48 = vst.msk [vmem:[#allocation3 + $0x28] sm:$0xff] %vm26, 0.0
    %49 = vst.msk [vmem:[#allocation3 + $0x30] sm:$0xff] %vm26, 0.0
    %50 = vst.msk [vmem:[#allocation3 + $0x38] sm:$0xff] %vm26, 0.0
    %51 = vst.msk [vmem:[#allocation3 + $0x40] sm:$0xff] %vm26, 0.0
    %52 = vst.msk [vmem:[#allocation3 + $0x48] sm:$0xff] %vm26, 0.0
    %53 = vst.msk [vmem:[#allocation3 + $0x50] sm:$0xff] %vm26, 0.0
    %54 = vst.msk [vmem:[#allocation3 + $0x58] sm:$0xff] %vm26, 0.0
    %55 = vst.msk [vmem:[#allocation3 + $0x60] sm:$0xff] %vm26, 0.0
    %56 = vst.msk [vmem:[#allocation3 + $0x68] sm:$0xff] %vm26, 0.0
    %57 = vst.msk [vmem:[#allocation3 + $0x70] sm:$0xff] %vm26, 0.0
    %58 = vst.msk [vmem:[#allocation3 + $0x78] sm:$0xff] %vm26, 0.0
    %59 = vst [vmem:[#allocation4] sm:$0xff] 0.0
    %60 = vst [vmem:[#allocation4 + $0x8] sm:$0xff] 0.0
    %61 = vst [vmem:[#allocation4 + $0x10] sm:$0xff] 0.0
    %62 = vst [vmem:[#allocation4 + $0x18] sm:$0xff] 0.0
    %63 = vst [vmem:[#allocation4 + $0x20] sm:$0xff] 0.0
    %64 = vst [vmem:[#allocation4 + $0x28] sm:$0xff] 0.0
    %65 = vst [vmem:[#allocation4 + $0x30] sm:$0xff] 0.0
    %66 = vst [vmem:[#allocation4 + $0x38] sm:$0xff] 0.0
    %67 = vst [vmem:[#allocation4 + $0x40] sm:$0xff] 0.0
    %68 = vst [vmem:[#allocation4 + $0x48] sm:$0xff] 0.0
    %69 = vst [vmem:[#allocation4 + $0x50] sm:$0xff] 0.0
    %70 = vst [vmem:[#allocation4 + $0x58] sm:$0xff] 0.0
    %71 = vst [vmem:[#allocation4 + $0x60] sm:$0xff] 0.0
    %72 = vst [vmem:[#allocation4 + $0x68] sm:$0xff] 0.0
    %73 = vst [vmem:[#allocation4 + $0x70] sm:$0xff] 0.0
    %74 = vst [vmem:[#allocation4 + $0x78] sm:$0xff] 0.0
  $region25: #{transformer_layer.4} parent=0 // pred_fallthru
    _
  %v75 = vld [vmem:[%s0] sm:$0xf]
  %v76 = vld [vmem:[%s0 + $0x4] sm:$0xf]
  %v77 = vld [vmem:[%s0 + $0x8] sm:$0xf]
  %v78 = vld [vmem:[%s0 + $0xc] sm:$0xf]
  %v79 = vld [vmem:[%s0 + $0x10] sm:$0xf]
  %v80 = vld [vmem:[%s0 + $0x14] sm:$0xf]
  %v81 = vld [vmem:[%s0 + $0x18] sm:$0xf]
  %v82 = vld [vmem:[%s0 + $0x1c] sm:$0xf]
  %v83 = vld [vmem:[%s0 + $0x20] sm:$0xf]
  %v84 = vld [vmem:[%s0 + $0x24] sm:$0xf]
  %v85 = vld [vmem:[%s0 + $0x28] sm:$0xf]
  %v86 = vld [vmem:[%s0 + $0x2c] sm:$0xf]
  %v87 = vld [vmem:[%s0 + $0x30] sm:$0xf]
  %v88 = vld [vmem:[%s0 + $0x34] sm:$0xf]
  %v89 = vld [vmem:[%s0 + $0x38] sm:$0xf]
  %v90 = vld [vmem:[%s0 + $0x3c] sm:$0xf]
  %v91 = vld [vmem:[%s1] sm:$0xf]
  %v92 = vld [vmem:[%s1 + $0x4] sm:$0xf]
  %v93 = vld [vmem:[%s1 + $0x8] sm:$0xf]
  %v94 = vld [vmem:[%s1 + $0xc] sm:$0xf]
  %v95 = vld [vmem:[%s1 + $0x10] sm:$0xf]
  %v96 = vld [vmem:[%s1 + $0x14] sm:$0xf]
  %v97 = vld [vmem:[%s1 + $0x18] sm:$0xf]
  %v98 = vld [vmem:[%s1 + $0x1c] sm:$0xf]
  %v99 = vld [vmem:[%s1 + $0x20] sm:$0xf]
  %v100 = vld [vmem:[%s1 + $0x24] sm:$0xf]
  %v101 = vld [vmem:[%s1 + $0x28] sm:$0xf]
  %v102 = vld [vmem:[%s1 + $0x2c] sm:$0xf]
  %v103 = vld [vmem:[%s1 + $0x30] sm:$0xf]
  %v104 = vld [vmem:[%s1 + $0x34] sm:$0xf]
  %v105 = vld [vmem:[%s1 + $0x38] sm:$0xf]
  %v106 = vld [vmem:[%s1 + $0x3c] sm:$0xf]
  %v107 = vld [vmem:[%s4] sm:$0x1]
  %v109 = vperm.slane %v107, 0
  %v127 = vunpack.c.l.b16 %v75
  %v128 = vunpack.c.l.b16 %v76
  %v129 = vunpack.c.l.b16 %v77
  %v130 = vunpack.c.l.b16 %v78
  %v131 = vunpack.c.l.b16 %v79
  %v132 = vunpack.c.l.b16 %v80
  %v133 = vunpack.c.l.b16 %v81
  %v134 = vunpack.c.l.b16 %v82
  %v135 = vunpack.c.l.b16 %v83
  %v136 = vunpack.c.l.b16 %v84
  %v137 = vunpack.c.l.b16 %v85
  %v138 = vunpack.c.l.b16 %v86
  %v139 = vunpack.c.l.b16 %v87
  %v140 = vunpack.c.l.b16 %v88
  %v141 = vunpack.c.l.b16 %v89
  %v142 = vunpack.c.l.b16 %v90
  %v143 = vpack.c.b16 %v128, %v127
  %v144 = vpack.c.b16 %v130, %v129
  %v145 = vpack.c.b16 %v132, %v131
  %v146 = vpack.c.b16 %v134, %v133
  %v147 = vpack.c.b16 %v136, %v135
  %v148 = vpack.c.b16 %v138, %v137
  %v149 = vpack.c.b16 %v140, %v139
  %v150 = vpack.c.b16 %v142, %v141
  %v175 = vunpack.c.l.b16 %v91
  %v176 = vunpack.c.l.b16 %v92
  %v177 = vunpack.c.l.b16 %v93
  %v178 = vunpack.c.l.b16 %v94
  %v179 = vunpack.c.l.b16 %v95
  %v180 = vunpack.c.l.b16 %v96
  %v181 = vunpack.c.l.b16 %v97
  %v182 = vunpack.c.l.b16 %v98
  %v183 = vunpack.c.l.b16 %v99
  %v184 = vunpack.c.l.b16 %v100
  %v185 = vunpack.c.l.b16 %v101
  %v186 = vunpack.c.l.b16 %v102
  %v187 = vunpack.c.l.b16 %v103
  %v188 = vunpack.c.l.b16 %v104
  %v189 = vunpack.c.l.b16 %v105
  %v190 = vunpack.c.l.b16 %v106
  %v191 = vpack.c.b16 %v176, %v175
  %v192 = vpack.c.b16 %v178, %v177
  %v193 = vpack.c.b16 %v180, %v179
  %v194 = vpack.c.b16 %v182, %v181
  %v195 = vpack.c.b16 %v184, %v183
  %v196 = vpack.c.b16 %v186, %v185
  %v197 = vpack.c.b16 %v188, %v187
  %v198 = vpack.c.b16 %v190, %v189
  %207 = vmatpush.bf16.xpose.msra.mxu0 %v198
  %208 = vmatpush.bf16.xpose.msra.mxu0 %v197
  %209 = vmatpush.bf16.xpose.msra.mxu0 %v196
  %210 = vmatpush.bf16.xpose.msra.mxu0 %v195
  %211 = vmatpush.bf16.xpose.msra.mxu0 %v194
  %212 = vmatpush.bf16.xpose.msra.mxu0 %v193
  %213 = vmatpush.bf16.xpose.msra.mxu0 %v192
  %214 = vmatpush.bf16.xpose.msra.mxu0 %v191
  %215 = vmatmul.bf16.gmra.mxu0 %v143
  %v216 = vpop.f32.mrf.mxu0
  %v217 = vadd.f32 %v109, %v216
  %v218 = vpop.f32.mrf.mxu0
  %v219 = vadd.f32 %v109, %v218
  %220 = vmatmul.bf16.gmra.mxu0 %v144
  %v221 = vpop.f32.mrf.mxu0
  %v222 = vadd.f32 %v109, %v221
  %v223 = vpop.f32.mrf.mxu0
  %v224 = vadd.f32 %v109, %v223
  %225 = vmatmul.bf16.gmra.mxu0 %v145
  %v226 = vpop.f32.mrf.mxu0
  %v227 = vadd.f32 %v109, %v226
  %v228 = vpop.f32.mrf.mxu0
  %v229 = vadd.f32 %v109, %v228
  %230 = vmatmul.bf16.gmra.mxu0 %v146
  %v231 = vpop.f32.mrf.mxu0
  %v232 = vadd.f32 %v109, %v231
  %v233 = vpop.f32.mrf.mxu0
  %v234 = vadd.f32 %v109, %v233
  %235 = vmatmul.bf16.gmra.mxu0 %v147
  %v236 = vpop.f32.mrf.mxu0
  %v237 = vadd.f32 %v109, %v236
  %v238 = vpop.f32.mrf.mxu0
  %v239 = vadd.f32 %v109, %v238
  %240 = vmatmul.bf16.gmra.mxu0 %v148
  %v241 = vpop.f32.mrf.mxu0
  %v242 = vadd.f32 %v109, %v241
  %v243 = vpop.f32.mrf.mxu0
  %v244 = vadd.f32 %v109, %v243
  %245 = vmatmul.bf16.gmra.mxu0 %v149
  %v246 = vpop.f32.mrf.mxu0
  %v247 = vadd.f32 %v109, %v246
  %v248 = vpop.f32.mrf.mxu0
  %v249 = vadd.f32 %v109, %v248
  %250 = vmatmul.bf16.gmra.mxu0 %v150
  %v251 = vpop.f32.mrf.mxu0
  %v252 = vadd.f32 %v109, %v251
  %v253 = vpop.f32.mrf.mxu0
  %v254 = vadd.f32 %v109, %v253
  %255 = vdwg.mxu0
  %v256 = vld [vmem:[#allocation2] sm:$0xff]
  %v257 = vld [vmem:[#allocation2 + $0x8] sm:$0xff]
  %v258 = vld [vmem:[#allocation2 + $0x10] sm:$0xff]
  %v259 = vld [vmem:[#allocation2 + $0x18] sm:$0xff]
  %v260 = vld [vmem:[#allocation2 + $0x20] sm:$0xff]
  %v261 = vld [vmem:[#allocation2 + $0x28] sm:$0xff]
  %v262 = vld [vmem:[#allocation2 + $0x30] sm:$0xff]
  %v263 = vld [vmem:[#allocation2 + $0x38] sm:$0xff]
  %v264 = vld [vmem:[#allocation2 + $0x40] sm:$0xff]
  %v265 = vld [vmem:[#allocation2 + $0x48] sm:$0xff]
  %v266 = vld [vmem:[#allocation2 + $0x50] sm:$0xff]
  %v267 = vld [vmem:[#allocation2 + $0x58] sm:$0xff]
  %v268 = vld [vmem:[#allocation2 + $0x60] sm:$0xff]
  %v269 = vld [vmem:[#allocation2 + $0x68] sm:$0xff]
  %v270 = vld [vmem:[#allocation2 + $0x70] sm:$0xff]
  %v271 = vld [vmem:[#allocation2 + $0x78] sm:$0xff]
  %272 = vmax.xlane.f32.xlu0 %v217
  %v273 = vpop.xlane.xlu0 %272
  %274 = vmax.xlane.f32.xlu0 %v219
  %v275 = vpop.xlane.xlu0 %274
  %276 = vmax.xlane.f32.xlu0 %v222
  %v277 = vpop.xlane.xlu0 %276
  %278 = vmax.xlane.f32.xlu0 %v224
  %v279 = vpop.xlane.xlu0 %278
  %280 = vmax.xlane.f32.xlu0 %v227
  %v281 = vpop.xlane.xlu0 %280
  %282 = vmax.xlane.f32.xlu0 %v229
  %v283 = vpop.xlane.xlu0 %282
  %284 = vmax.xlane.f32.xlu0 %v232
  %v285 = vpop.xlane.xlu0 %284
  %286 = vmax.xlane.f32.xlu0 %v234
  %v287 = vpop.xlane.xlu0 %286
  %288 = vmax.xlane.f32.xlu0 %v237
  %v289 = vpop.xlane.xlu0 %288
  %290 = vmax.xlane.f32.xlu0 %v239
  %v291 = vpop.xlane.xlu0 %290
  %292 = vmax.xlane.f32.xlu0 %v242
  %v293 = vpop.xlane.xlu0 %292
  %294 = vmax.xlane.f32.xlu0 %v244
  %v295 = vpop.xlane.xlu0 %294
  %296 = vmax.xlane.f32.xlu0 %v247
  %v297 = vpop.xlane.xlu0 %296
  %298 = vmax.xlane.f32.xlu0 %v249
  %v299 = vpop.xlane.xlu0 %298
  %300 = vmax.xlane.f32.xlu0 %v252
  %v301 = vpop.xlane.xlu0 %300
  %302 = vmax.xlane.f32.xlu0 %v254
  %v303 = vpop.xlane.xlu0 %302
  %v304 = vmax.f32 %v256, %v273
  %v305 = vmax.f32 %v257, %v275
  %v306 = vmax.f32 %v258, %v277
  %v307 = vmax.f32 %v259, %v279
  %v308 = vmax.f32 %v260, %v281
  %v309 = vmax.f32 %v261, %v283
  %v310 = vmax.f32 %v262, %v285
  %v311 = vmax.f32 %v263, %v287
  %v312 = vmax.f32 %v264, %v289
  %v313 = vmax.f32 %v265, %v291
  %v314 = vmax.f32 %v266, %v293
  %v315 = vmax.f32 %v267, %v295
  %v316 = vmax.f32 %v268, %v297
  %v317 = vmax.f32 %v269, %v299
  %v318 = vmax.f32 %v270, %v301
  %v319 = vmax.f32 %v271, %v303
  %v320 = vsub.f32 %v256, %v304
  %v321 = vsub.f32 %v257, %v305
  %v322 = vsub.f32 %v258, %v306
  %v323 = vsub.f32 %v259, %v307
  %v324 = vsub.f32 %v260, %v308
  %v325 = vsub.f32 %v261, %v309
  %v326 = vsub.f32 %v262, %v310
  %v327 = vsub.f32 %v263, %v311
  %v328 = vsub.f32 %v264, %v312
  %v329 = vsub.f32 %v265, %v313
  %v330 = vsub.f32 %v266, %v314
  %v331 = vsub.f32 %v267, %v315
  %v332 = vsub.f32 %v268, %v316
  %v333 = vsub.f32 %v269, %v317
  %v334 = vsub.f32 %v270, %v318
  %v335 = vsub.f32 %v271, %v319
  %v336 = vmul.f32 %v320, 1.442695
  %v337 = vpow.pop %v336
  %v338 = vmul.f32 %v321, 1.442695
  %v339 = vpow.pop %v338
  %v340 = vmul.f32 %v322, 1.442695
  %v341 = vpow.pop %v340
  %v342 = vmul.f32 %v323, 1.442695
  %v343 = vpow.pop %v342
  %v344 = vmul.f32 %v324, 1.442695
  %v345 = vpow.pop %v344
  %v346 = vmul.f32 %v325, 1.442695
  %v347 = vpow.pop %v346
  %v348 = vmul.f32 %v326, 1.442695
  %v349 = vpow.pop %v348
  %v350 = vmul.f32 %v327, 1.442695
  %v351 = vpow.pop %v350
  %v352 = vmul.f32 %v328, 1.442695
  %v353 = vpow.pop %v352
  %v354 = vmul.f32 %v329, 1.442695
  %v355 = vpow.pop %v354
  %v356 = vmul.f32 %v330, 1.442695
  %v357 = vpow.pop %v356
  %v358 = vmul.f32 %v331, 1.442695
  %v359 = vpow.pop %v358
  %v360 = vmul.f32 %v332, 1.442695
  %v361 = vpow.pop %v360
  %v362 = vmul.f32 %v333, 1.442695
  %v363 = vpow.pop %v362
  %v364 = vmul.f32 %v334, 1.442695
  %v365 = vpow.pop %v364
  %v366 = vmul.f32 %v335, 1.442695
  %v367 = vpow.pop %v366
  %369 = vset.pattern.permute.xlu0 0
  %370 = vperm.xlu0 %369, %v304
  %v371 = vpop.permute.xlu0 %370
  %374 = vset.pattern.permute.xlu0 0
  %375 = vperm.xlu0 %374, %v305
  %v376 = vpop.permute.xlu0 %375
  %379 = vset.pattern.permute.xlu0 0
  %380 = vperm.xlu0 %379, %v306
  %v381 = vpop.permute.xlu0 %380
  %384 = vset.pattern.permute.xlu0 0
  %385 = vperm.xlu0 %384, %v307
  %v386 = vpop.permute.xlu0 %385
  %389 = vset.pattern.permute.xlu0 0
  %390 = vperm.xlu0 %389, %v308
  %v391 = vpop.permute.xlu0 %390
  %394 = vset.pattern.permute.xlu0 0
  %395 = vperm.xlu0 %394, %v309
  %v396 = vpop.permute.xlu0 %395
  %399 = vset.pattern.permute.xlu0 0
  %400 = vperm.xlu0 %399, %v310
  %v401 = vpop.permute.xlu0 %400
  %404 = vset.pattern.permute.xlu0 0
  %405 = vperm.xlu0 %404, %v311
  %v406 = vpop.permute.xlu0 %405
  %409 = vset.pattern.permute.xlu0 0
  %410 = vperm.xlu0 %409, %v312
  %v411 = vpop.permute.xlu0 %410
  %414 = vset.pattern.permute.xlu0 0
  %415 = vperm.xlu0 %414, %v313
  %v416 = vpop.permute.xlu0 %415
  %419 = vset.pattern.permute.xlu0 0
  %420 = vperm.xlu0 %419, %v314
  %v421 = vpop.permute.xlu0 %420
  %424 = vset.pattern.permute.xlu0 0
  %425 = vperm.xlu0 %424, %v315
  %v426 = vpop.permute.xlu0 %425
  %429 = vset.pattern.permute.xlu0 0
  %430 = vperm.xlu0 %429, %v316
  %v431 = vpop.permute.xlu0 %430
  %434 = vset.pattern.permute.xlu0 0
  %435 = vperm.xlu0 %434, %v317
  %v436 = vpop.permute.xlu0 %435
  %439 = vset.pattern.permute.xlu0 0
  %440 = vperm.xlu0 %439, %v318
  %v441 = vpop.permute.xlu0 %440
  %444 = vset.pattern.permute.xlu0 0
  %445 = vperm.xlu0 %444, %v319
  %v446 = vpop.permute.xlu0 %445
  %v448 = vsub.f32 %v217, %v371
  %v449 = vsub.f32 %v219, %v376
  %v450 = vsub.f32 %v222, %v381
  %v451 = vsub.f32 %v224, %v386
  %v452 = vsub.f32 %v227, %v391
  %v453 = vsub.f32 %v229, %v396
  %v454 = vsub.f32 %v232, %v401
  %v455 = vsub.f32 %v234, %v406
  %v456 = vsub.f32 %v237, %v411
  %v457 = vsub.f32 %v239, %v416
  %v458 = vsub.f32 %v242, %v421
  %v459 = vsub.f32 %v244, %v426
  %v460 = vsub.f32 %v247, %v431
  %v461 = vsub.f32 %v249, %v436
  %v462 = vsub.f32 %v252, %v441
  %v463 = vsub.f32 %v254, %v446
  %v464 = vmul.f32 %v448, 1.442695
  %v465 = vpow.pop %v464
  %v466 = vmul.f32 %v449, 1.442695
  %v467 = vpow.pop %v466
  %v468 = vmul.f32 %v450, 1.442695
  %v469 = vpow.pop %v468
  %v470 = vmul.f32 %v451, 1.442695
  %v471 = vpow.pop %v470
  %v472 = vmul.f32 %v452, 1.442695
  %v473 = vpow.pop %v472
  %v474 = vmul.f32 %v453, 1.442695
  %v475 = vpow.pop %v474
  %v476 = vmul.f32 %v454, 1.442695
  %v477 = vpow.pop %v476
  %v478 = vmul.f32 %v455, 1.442695
  %v479 = vpow.pop %v478
  %v480 = vmul.f32 %v456, 1.442695
  %v481 = vpow.pop %v480
  %v482 = vmul.f32 %v457, 1.442695
  %v483 = vpow.pop %v482
  %v484 = vmul.f32 %v458, 1.442695
  %v485 = vpow.pop %v484
  %v486 = vmul.f32 %v459, 1.442695
  %v487 = vpow.pop %v486
  %v488 = vmul.f32 %v460, 1.442695
  %v489 = vpow.pop %v488
  %v490 = vmul.f32 %v461, 1.442695
  %v491 = vpow.pop %v490
  %v492 = vmul.f32 %v462, 1.442695
  %v493 = vpow.pop %v492
  %v494 = vmul.f32 %v463, 1.442695
  %v495 = vpow.pop %v494
  %v496 = vld [vmem:[#allocation3] sm:$0xff]
  %v497 = vld [vmem:[#allocation3 + $0x8] sm:$0xff]
  %v498 = vld [vmem:[#allocation3 + $0x10] sm:$0xff]
  %v499 = vld [vmem:[#allocation3 + $0x18] sm:$0xff]
  %v500 = vld [vmem:[#allocation3 + $0x20] sm:$0xff]
  %v501 = vld [vmem:[#allocation3 + $0x28] sm:$0xff]
  %v502 = vld [vmem:[#allocation3 + $0x30] sm:$0xff]
  %v503 = vld [vmem:[#allocation3 + $0x38] sm:$0xff]
  %v504 = vld [vmem:[#allocation3 + $0x40] sm:$0xff]
  %v505 = vld [vmem:[#allocation3 + $0x48] sm:$0xff]
  %v506 = vld [vmem:[#allocation3 + $0x50] sm:$0xff]
  %v507 = vld [vmem:[#allocation3 + $0x58] sm:$0xff]
  %v508 = vld [vmem:[#allocation3 + $0x60] sm:$0xff]
  %v509 = vld [vmem:[#allocation3 + $0x68] sm:$0xff]
  %v510 = vld [vmem:[#allocation3 + $0x70] sm:$0xff]
  %v511 = vld [vmem:[#allocation3 + $0x78] sm:$0xff]
  %v512 = vmul.f32 %v337, %v496
  %v513 = vmul.f32 %v339, %v497
  %v514 = vmul.f32 %v341, %v498
  %v515 = vmul.f32 %v343, %v499
  %v516 = vmul.f32 %v345, %v500
  %v517 = vmul.f32 %v347, %v501
  %v518 = vmul.f32 %v349, %v502
  %v519 = vmul.f32 %v351, %v503
  %v520 = vmul.f32 %v353, %v504
  %v521 = vmul.f32 %v355, %v505
  %v522 = vmul.f32 %v357, %v506
  %v523 = vmul.f32 %v359, %v507
  %v524 = vmul.f32 %v361, %v508
  %v525 = vmul.f32 %v363, %v509
  %v526 = vmul.f32 %v365, %v510
  %v527 = vmul.f32 %v367, %v511
  %528 = vadd.xlane.f32.xlu0 %v465
  %v529 = vpop.xlane.xlu0 %528
  %530 = vadd.xlane.f32.xlu0 %v467
  %v531 = vpop.xlane.xlu0 %530
  %532 = vadd.xlane.f32.xlu0 %v469
  %v533 = vpop.xlane.xlu0 %532
  %534 = vadd.xlane.f32.xlu0 %v471
  %v535 = vpop.xlane.xlu0 %534
  %536 = vadd.xlane.f32.xlu0 %v473
  %v537 = vpop.xlane.xlu0 %536
  %538 = vadd.xlane.f32.xlu0 %v475
  %v539 = vpop.xlane.xlu0 %538
  %540 = vadd.xlane.f32.xlu0 %v477
  %v541 = vpop.xlane.xlu0 %540
  %542 = vadd.xlane.f32.xlu0 %v479
  %v543 = vpop.xlane.xlu0 %542
  %544 = vadd.xlane.f32.xlu0 %v481
  %v545 = vpop.xlane.xlu0 %544
  %546 = vadd.xlane.f32.xlu0 %v483
  %v547 = vpop.xlane.xlu0 %546
  %548 = vadd.xlane.f32.xlu0 %v485
  %v549 = vpop.xlane.xlu0 %548
  %550 = vadd.xlane.f32.xlu0 %v487
  %v551 = vpop.xlane.xlu0 %550
  %552 = vadd.xlane.f32.xlu0 %v489
  %v553 = vpop.xlane.xlu0 %552
  %554 = vadd.xlane.f32.xlu0 %v491
  %v555 = vpop.xlane.xlu0 %554
  %556 = vadd.xlane.f32.xlu0 %v493
  %v557 = vpop.xlane.xlu0 %556
  %558 = vadd.xlane.f32.xlu0 %v495
  %v559 = vpop.xlane.xlu0 %558
  %v560 = vadd.f32 %v512, %v529
  %v561 = vadd.f32 %v513, %v531
  %v562 = vadd.f32 %v514, %v533
  %v563 = vadd.f32 %v515, %v535
  %v564 = vadd.f32 %v516, %v537
  %v565 = vadd.f32 %v517, %v539
  %v566 = vadd.f32 %v518, %v541
  %v567 = vadd.f32 %v519, %v543
  %v568 = vadd.f32 %v520, %v545
  %v569 = vadd.f32 %v521, %v547
  %v570 = vadd.f32 %v522, %v549
  %v571 = vadd.f32 %v523, %v551
  %v572 = vadd.f32 %v524, %v553
  %v573 = vadd.f32 %v525, %v555
  %v574 = vadd.f32 %v526, %v557
  %v575 = vadd.f32 %v527, %v559
  %v576 = vld [vmem:[#allocation4] sm:$0xff]
  %v577 = vld [vmem:[#allocation4 + $0x8] sm:$0xff]
  %v578 = vld [vmem:[#allocation4 + $0x10] sm:$0xff]
  %v579 = vld [vmem:[#allocation4 + $0x18] sm:$0xff]
  %v580 = vld [vmem:[#allocation4 + $0x20] sm:$0xff]
  %v581 = vld [vmem:[#allocation4 + $0x28] sm:$0xff]
  %v582 = vld [vmem:[#allocation4 + $0x30] sm:$0xff]
  %v583 = vld [vmem:[#allocation4 + $0x38] sm:$0xff]
  %v584 = vld [vmem:[#allocation4 + $0x40] sm:$0xff]
  %v585 = vld [vmem:[#allocation4 + $0x48] sm:$0xff]
  %v586 = vld [vmem:[#allocation4 + $0x50] sm:$0xff]
  %v587 = vld [vmem:[#allocation4 + $0x58] sm:$0xff]
  %v588 = vld [vmem:[#allocation4 + $0x60] sm:$0xff]
  %v589 = vld [vmem:[#allocation4 + $0x68] sm:$0xff]
  %v590 = vld [vmem:[#allocation4 + $0x70] sm:$0xff]
  %v591 = vld [vmem:[#allocation4 + $0x78] sm:$0xff]
  %593 = vset.pattern.permute.xlu0 0
  %594 = vperm.xlu0 %593, %v337
  %v595 = vpop.permute.xlu0 %594
  %598 = vset.pattern.permute.xlu0 0
  %599 = vperm.xlu0 %598, %v339
  %v600 = vpop.permute.xlu0 %599
  %603 = vset.pattern.permute.xlu0 0
  %604 = vperm.xlu0 %603, %v341
  %v605 = vpop.permute.xlu0 %604
  %608 = vset.pattern.permute.xlu0 0
  %609 = vperm.xlu0 %608, %v343
  %v610 = vpop.permute.xlu0 %609
  %613 = vset.pattern.permute.xlu0 0
  %614 = vperm.xlu0 %613, %v345
  %v615 = vpop.permute.xlu0 %614
  %618 = vset.pattern.permute.xlu0 0
  %619 = vperm.xlu0 %618, %v347
  %v620 = vpop.permute.xlu0 %619
  %623 = vset.pattern.permute.xlu0 0
  %624 = vperm.xlu0 %623, %v349
  %v625 = vpop.permute.xlu0 %624
  %628 = vset.pattern.permute.xlu0 0
  %629 = vperm.xlu0 %628, %v351
  %v630 = vpop.permute.xlu0 %629
  %633 = vset.pattern.permute.xlu0 0
  %634 = vperm.xlu0 %633, %v353
  %v635 = vpop.permute.xlu0 %634
  %638 = vset.pattern.permute.xlu0 0
  %639 = vperm.xlu0 %638, %v355
  %v640 = vpop.permute.xlu0 %639
  %643 = vset.pattern.permute.xlu0 0
  %644 = vperm.xlu0 %643, %v357
  %v645 = vpop.permute.xlu0 %644
  %648 = vset.pattern.permute.xlu0 0
  %649 = vperm.xlu0 %648, %v359
  %v650 = vpop.permute.xlu0 %649
  %653 = vset.pattern.permute.xlu0 0
  %654 = vperm.xlu0 %653, %v361
  %v655 = vpop.permute.xlu0 %654
  %658 = vset.pattern.permute.xlu0 0
  %659 = vperm.xlu0 %658, %v363
  %v660 = vpop.permute.xlu0 %659
  %663 = vset.pattern.permute.xlu0 0
  %664 = vperm.xlu0 %663, %v365
  %v665 = vpop.permute.xlu0 %664
  %668 = vset.pattern.permute.xlu0 0
  %669 = vperm.xlu0 %668, %v367
  %v670 = vpop.permute.xlu0 %669
  %v672 = vmul.f32 %v595, %v576
  %v673 = vmul.f32 %v600, %v577
  %v674 = vmul.f32 %v605, %v578
  %v675 = vmul.f32 %v610, %v579
  %v676 = vmul.f32 %v615, %v580
  %v677 = vmul.f32 %v620, %v581
  %v678 = vmul.f32 %v625, %v582
  %v679 = vmul.f32 %v630, %v583
  %v680 = vmul.f32 %v635, %v584
  %v681 = vmul.f32 %v640, %v585
  %v682 = vmul.f32 %v645, %v586
  %v683 = vmul.f32 %v650, %v587
  %v684 = vmul.f32 %v655, %v588
  %v685 = vmul.f32 %v660, %v589
  %v686 = vmul.f32 %v665, %v590
  %v687 = vmul.f32 %v670, %v591
  %v688 = vpack.c.bf16 %v465, %v465
  %v689 = vpack.c.bf16 %v467, %v467
  %v690 = vpack.c.bf16 %v469, %v469
  %v691 = vpack.c.bf16 %v471, %v471
  %v692 = vpack.c.bf16 %v473, %v473
  %v693 = vpack.c.bf16 %v475, %v475
  %v694 = vpack.c.bf16 %v477, %v477
  %v695 = vpack.c.bf16 %v479, %v479
  %v696 = vpack.c.bf16 %v481, %v481
  %v697 = vpack.c.bf16 %v483, %v483
  %v698 = vpack.c.bf16 %v485, %v485
  %v699 = vpack.c.bf16 %v487, %v487
  %v700 = vpack.c.bf16 %v489, %v489
  %v701 = vpack.c.bf16 %v491, %v491
  %v702 = vpack.c.bf16 %v493, %v493
  %v703 = vpack.c.bf16 %v495, %v495
  %v704 = vld [vmem:[%s2] sm:$0xf]
  %v705 = vld [vmem:[%s2 + $0x4] sm:$0xf]
  %v706 = vld [vmem:[%s2 + $0x8] sm:$0xf]
  %v707 = vld [vmem:[%s2 + $0xc] sm:$0xf]
  %v708 = vld [vmem:[%s2 + $0x10] sm:$0xf]
  %v709 = vld [vmem:[%s2 + $0x14] sm:$0xf]
  %v710 = vld [vmem:[%s2 + $0x18] sm:$0xf]
  %v711 = vld [vmem:[%s2 + $0x1c] sm:$0xf]
  %v712 = vld [vmem:[%s2 + $0x20] sm:$0xf]
  %v713 = vld [vmem:[%s2 + $0x24] sm:$0xf]
  %v714 = vld [vmem:[%s2 + $0x28] sm:$0xf]
  %v715 = vld [vmem:[%s2 + $0x2c] sm:$0xf]
  %v716 = vld [vmem:[%s2 + $0x30] sm:$0xf]
  %v717 = vld [vmem:[%s2 + $0x34] sm:$0xf]
  %v718 = vld [vmem:[%s2 + $0x38] sm:$0xf]
  %v719 = vld [vmem:[%s2 + $0x3c] sm:$0xf]
  %v736 = vunpack.c.l.b16 %v688
  %v737 = vunpack.c.l.b16 %v689
  %v738 = vunpack.c.l.b16 %v690
  %v739 = vunpack.c.l.b16 %v691
  %v740 = vunpack.c.l.b16 %v692
  %v741 = vunpack.c.l.b16 %v693
  %v742 = vunpack.c.l.b16 %v694
  %v743 = vunpack.c.l.b16 %v695
  %v744 = vunpack.c.l.b16 %v696
  %v745 = vunpack.c.l.b16 %v697
  %v746 = vunpack.c.l.b16 %v698
  %v747 = vunpack.c.l.b16 %v699
  %v748 = vunpack.c.l.b16 %v700
  %v749 = vunpack.c.l.b16 %v701
  %v750 = vunpack.c.l.b16 %v702
  %v751 = vunpack.c.l.b16 %v703
  %v752 = vpack.c.b16 %v737, %v736
  %v753 = vpack.c.b16 %v739, %v738
  %v754 = vpack.c.b16 %v741, %v740
  %v755 = vpack.c.b16 %v743, %v742
  %v756 = vpack.c.b16 %v745, %v744
  %v757 = vpack.c.b16 %v747, %v746
  %v758 = vpack.c.b16 %v749, %v748
  %v759 = vpack.c.b16 %v751, %v750
  %v784 = vunpack.c.l.b16 %v704
  %v785 = vunpack.c.l.b16 %v705
  %v786 = vunpack.c.l.b16 %v706
  %v787 = vunpack.c.l.b16 %v707
  %v788 = vunpack.c.l.b16 %v708
  %v789 = vunpack.c.l.b16 %v709
  %v790 = vunpack.c.l.b16 %v710
  %v791 = vunpack.c.l.b16 %v711
  %v792 = vunpack.c.l.b16 %v712
  %v793 = vunpack.c.l.b16 %v713
  %v794 = vunpack.c.l.b16 %v714
  %v795 = vunpack.c.l.b16 %v715
  %v796 = vunpack.c.l.b16 %v716
  %v797 = vunpack.c.l.b16 %v717
  %v798 = vunpack.c.l.b16 %v718
  %v799 = vunpack.c.l.b16 %v719
  %v800 = vpack.c.b16 %v785, %v784
  %v801 = vpack.c.b16 %v787, %v786
  %v802 = vpack.c.b16 %v789, %v788
  %v803 = vpack.c.b16 %v791, %v790
  %v804 = vpack.c.b16 %v793, %v792
  %v805 = vpack.c.b16 %v795, %v794
  %v806 = vpack.c.b16 %v797, %v796
  %v807 = vpack.c.b16 %v799, %v798
  %816 = vmatpush.bf16.msra.mxu0 %v807
  %817 = vmatpush.bf16.msra.mxu0 %v806
  %818 = vmatpush.bf16.msra.mxu0 %v805
  %819 = vmatpush.bf16.msra.mxu0 %v804
  %820 = vmatpush.bf16.msra.mxu0 %v803
  %821 = vmatpush.bf16.msra.mxu0 %v802
  %822 = vmatpush.bf16.msra.mxu0 %v801
  %823 = vmatpush.bf16.msra.mxu0 %v800
  %824 = vmatmul.bf16.gmra.mxu0 %v752
  %v825 = vpop.f32.mrf.mxu0
  %v826 = vadd.f32 0.0, %v825
  %v827 = vpop.f32.mrf.mxu0
  %v828 = vadd.f32 0.0, %v827
  %829 = vmatmul.bf16.gmra.mxu0 %v753
  %v830 = vpop.f32.mrf.mxu0
  %v831 = vadd.f32 0.0, %v830
  %v832 = vpop.f32.mrf.mxu0
  %v833 = vadd.f32 0.0, %v832
  %834 = vmatmul.bf16.gmra.mxu0 %v754
  %v835 = vpop.f32.mrf.mxu0
  %v836 = vadd.f32 0.0, %v835
  %v837 = vpop.f32.mrf.mxu0
  %v838 = vadd.f32 0.0, %v837
  %839 = vmatmul.bf16.gmra.mxu0 %v755
  %v840 = vpop.f32.mrf.mxu0
  %v841 = vadd.f32 0.0, %v840
  %v842 = vpop.f32.mrf.mxu0
  %v843 = vadd.f32 0.0, %v842
  %844 = vmatmul.bf16.gmra.mxu0 %v756
  %v845 = vpop.f32.mrf.mxu0
  %v846 = vadd.f32 0.0, %v845
  %v847 = vpop.f32.mrf.mxu0
  %v848 = vadd.f32 0.0, %v847
  %849 = vmatmul.bf16.gmra.mxu0 %v757
  %v850 = vpop.f32.mrf.mxu0
  %v851 = vadd.f32 0.0, %v850
  %v852 = vpop.f32.mrf.mxu0
  %v853 = vadd.f32 0.0, %v852
  %854 = vmatmul.bf16.gmra.mxu0 %v758
  %v855 = vpop.f32.mrf.mxu0
  %v856 = vadd.f32 0.0, %v855
  %v857 = vpop.f32.mrf.mxu0
  %v858 = vadd.f32 0.0, %v857
  %859 = vmatmul.bf16.gmra.mxu0 %v759
  %v860 = vpop.f32.mrf.mxu0
  %v861 = vadd.f32 0.0, %v860
  %v862 = vpop.f32.mrf.mxu0
  %v863 = vadd.f32 0.0, %v862
  %864 = vdwg.mxu0
  %v865 = vadd.f32 %v672, %v826
  %v866 = vadd.f32 %v673, %v828
  %v867 = vadd.f32 %v674, %v831
  %v868 = vadd.f32 %v675, %v833
  %v869 = vadd.f32 %v676, %v836
  %v870 = vadd.f32 %v677, %v838
  %v871 = vadd.f32 %v678, %v841
  %v872 = vadd.f32 %v679, %v843
  %v873 = vadd.f32 %v680, %v846
  %v874 = vadd.f32 %v681, %v848
  %v875 = vadd.f32 %v682, %v851
  %v876 = vadd.f32 %v683, %v853
  %v877 = vadd.f32 %v684, %v856
  %v878 = vadd.f32 %v685, %v858
  %v879 = vadd.f32 %v686, %v861
  %v880 = vadd.f32 %v687, %v863
  %vm881 = vcmask 7168
  %882 = vst.msk [vmem:[#allocation2] sm:$0xff] %vm881, %v304
  %883 = vst.msk [vmem:[#allocation2 + $0x8] sm:$0xff] %vm881, %v305
  %884 = vst.msk [vmem:[#allocation2 + $0x10] sm:$0xff] %vm881, %v306
  %885 = vst.msk [vmem:[#allocation2 + $0x18] sm:$0xff] %vm881, %v307
  %886 = vst.msk [vmem:[#allocation2 + $0x20] sm:$0xff] %vm881, %v308
  %887 = vst.msk [vmem:[#allocation2 + $0x28] sm:$0xff] %vm881, %v309
  %888 = vst.msk [vmem:[#allocation2 + $0x30] sm:$0xff] %vm881, %v310
  %889 = vst.msk [vmem:[#allocation2 + $0x38] sm:$0xff] %vm881, %v311
  %890 = vst.msk [vmem:[#allocation2 + $0x40] sm:$0xff] %vm881, %v312
  %891 = vst.msk [vmem:[#allocation2 + $0x48] sm:$0xff] %vm881, %v313
  %892 = vst.msk [vmem:[#allocation2 + $0x50] sm:$0xff] %vm881, %v314
  %893 = vst.msk [vmem:[#allocation2 + $0x58] sm:$0xff] %vm881, %v315
  %894 = vst.msk [vmem:[#allocation2 + $0x60] sm:$0xff] %vm881, %v316
  %895 = vst.msk [vmem:[#allocation2 + $0x68] sm:$0xff] %vm881, %v317
  %896 = vst.msk [vmem:[#allocation2 + $0x70] sm:$0xff] %vm881, %v318
  %897 = vst.msk [vmem:[#allocation2 + $0x78] sm:$0xff] %vm881, %v319
  %898 = vst.msk [vmem:[#allocation3] sm:$0xff] %vm881, %v560
  %899 = vst.msk [vmem:[#allocation3 + $0x8] sm:$0xff] %vm881, %v561
  %900 = vst.msk [vmem:[#allocation3 + $0x10] sm:$0xff] %vm881, %v562
  %901 = vst.msk [vmem:[#allocation3 + $0x18] sm:$0xff] %vm881, %v563
  %902 = vst.msk [vmem:[#allocation3 + $0x20] sm:$0xff] %vm881, %v564
  %903 = vst.msk [vmem:[#allocation3 + $0x28] sm:$0xff] %vm881, %v565
  %904 = vst.msk [vmem:[#allocation3 + $0x30] sm:$0xff] %vm881, %v566
  %905 = vst.msk [vmem:[#allocation3 + $0x38] sm:$0xff] %vm881, %v567
  %906 = vst.msk [vmem:[#allocation3 + $0x40] sm:$0xff] %vm881, %v568
  %907 = vst.msk [vmem:[#allocation3 + $0x48] sm:$0xff] %vm881, %v569
  %908 = vst.msk [vmem:[#allocation3 + $0x50] sm:$0xff] %vm881, %v570
  %909 = vst.msk [vmem:[#allocation3 + $0x58] sm:$0xff] %vm881, %v571
  %910 = vst.msk [vmem:[#allocation3 + $0x60] sm:$0xff] %vm881, %v572
  %911 = vst.msk [vmem:[#allocation3 + $0x68] sm:$0xff] %vm881, %v573
  %912 = vst.msk [vmem:[#allocation3 + $0x70] sm:$0xff] %vm881, %v574
  %913 = vst.msk [vmem:[#allocation3 + $0x78] sm:$0xff] %vm881, %v575
  %914 = vst [vmem:[#allocation4] sm:$0xff] %v865
  %915 = vst [vmem:[#allocation4 + $0x8] sm:$0xff] %v866
  %916 = vst [vmem:[#allocation4 + $0x10] sm:$0xff] %v867
  %917 = vst [vmem:[#allocation4 + $0x18] sm:$0xff] %v868
  %918 = vst [vmem:[#allocation4 + $0x20] sm:$0xff] %v869
  %919 = vst [vmem:[#allocation4 + $0x28] sm:$0xff] %v870
  %920 = vst [vmem:[#allocation4 + $0x30] sm:$0xff] %v871
  %921 = vst [vmem:[#allocation4 + $0x38] sm:$0xff] %v872
  %922 = vst [vmem:[#allocation4 + $0x40] sm:$0xff] %v873
  %923 = vst [vmem:[#allocation4 + $0x48] sm:$0xff] %v874
  %924 = vst [vmem:[#allocation4 + $0x50] sm:$0xff] %v875
  %925 = vst [vmem:[#allocation4 + $0x58] sm:$0xff] %v876
  %926 = vst [vmem:[#allocation4 + $0x60] sm:$0xff] %v877
  %927 = vst [vmem:[#allocation4 + $0x68] sm:$0xff] %v878
  %928 = vst [vmem:[#allocation4 + $0x70] sm:$0xff] %v879
  %929 = vst [vmem:[#allocation4 + $0x78] sm:$0xff] %v880
  %s930 = smul.u32 0, 16
  %s931 = smul.addr %s930, 4
  %s932 = scalar_lea.vmem [#allocation5], %s931
  %933 = vst [vmem:[%s932] sm:$0xf] %v688
  %934 = vst [vmem:[%s932 + $0x4] sm:$0xf] %v689
  %935 = vst [vmem:[%s932 + $0x8] sm:$0xf] %v690
  %936 = vst [vmem:[%s932 + $0xc] sm:$0xf] %v691
  %937 = vst [vmem:[%s932 + $0x10] sm:$0xf] %v692
  %938 = vst [vmem:[%s932 + $0x14] sm:$0xf] %v693
  %939 = vst [vmem:[%s932 + $0x18] sm:$0xf] %v694
  %940 = vst [vmem:[%s932 + $0x1c] sm:$0xf] %v695
  %941 = vst [vmem:[%s932 + $0x20] sm:$0xf] %v696
  %942 = vst [vmem:[%s932 + $0x24] sm:$0xf] %v697
  %943 = vst [vmem:[%s932 + $0x28] sm:$0xf] %v698
  %944 = vst [vmem:[%s932 + $0x2c] sm:$0xf] %v699
  %945 = vst [vmem:[%s932 + $0x30] sm:$0xf] %v700
  %946 = vst [vmem:[%s932 + $0x34] sm:$0xf] %v701
  %947 = vst [vmem:[%s932 + $0x38] sm:$0xf] %v702
  %948 = vst [vmem:[%s932 + $0x3c] sm:$0xf] %v703
  %s949 = smul.u32 0, 128
  %s950 = scalar_lea.vmem [#allocation6], %s949
  %951 = vst.msk [vmem:[%s950] sm:$0xff] %vm881, %v304
  %952 = vst.msk [vmem:[%s950 + $0x8] sm:$0xff] %vm881, %v305
  %953 = vst.msk [vmem:[%s950 + $0x10] sm:$0xff] %vm881, %v306
  %954 = vst.msk [vmem:[%s950 + $0x18] sm:$0xff] %vm881, %v307
  %955 = vst.msk [vmem:[%s950 + $0x20] sm:$0xff] %vm881, %v308
  %956 = vst.msk [vmem:[%s950 + $0x28] sm:$0xff] %vm881, %v309
  %957 = vst.msk [vmem:[%s950 + $0x30] sm:$0xff] %vm881, %v310
  %958 = vst.msk [vmem:[%s950 + $0x38] sm:$0xff] %vm881, %v311
  %959 = vst.msk [vmem:[%s950 + $0x40] sm:$0xff] %vm881, %v312
  %960 = vst.msk [vmem:[%s950 + $0x48] sm:$0xff] %vm881, %v313
  %961 = vst.msk [vmem:[%s950 + $0x50] sm:$0xff] %vm881, %v314
  %962 = vst.msk [vmem:[%s950 + $0x58] sm:$0xff] %vm881, %v315
  %963 = vst.msk [vmem:[%s950 + $0x60] sm:$0xff] %vm881, %v316
  %964 = vst.msk [vmem:[%s950 + $0x68] sm:$0xff] %vm881, %v317
  %965 = vst.msk [vmem:[%s950 + $0x70] sm:$0xff] %vm881, %v318
  %966 = vst.msk [vmem:[%s950 + $0x78] sm:$0xff] %vm881, %v319
  // Predicated region
  $region26: #{transformer_layer.4} parent=0 // pred_check
    %p967 = pneg %p22
  $region27: #{transformer_layer.4} parent=0 // pred_check_branch
    %969 = sbr.rel (%p967) target = $region29
  $region28: #{transformer_layer.4} parent=0 // pred_region
    %v970 = vrcp.pop %v560
    %v971 = vrcp.pop %v561
    %v972 = vrcp.pop %v562
    %v973 = vrcp.pop %v563
    %v974 = vrcp.pop %v564
    %v975 = vrcp.pop %v565
    %v976 = vrcp.pop %v566
    %v977 = vrcp.pop %v567
    %v978 = vrcp.pop %v568
    %v979 = vrcp.pop %v569
    %v980 = vrcp.pop %v570
    %v981 = vrcp.pop %v571
    %v982 = vrcp.pop %v572
    %v983 = vrcp.pop %v573
    %v984 = vrcp.pop %v574
    %v985 = vrcp.pop %v575
    %v986 = vmul.f32 %v560, %v970
    %v987 = vmul.f32 %v561, %v971
    %v988 = vmul.f32 %v562, %v972
    %v989 = vmul.f32 %v563, %v973
    %v990 = vmul.f32 %v564, %v974
    %v991 = vmul.f32 %v565, %v975
    %v992 = vmul.f32 %v566, %v976
    %v993 = vmul.f32 %v567, %v977
    %v994 = vmul.f32 %v568, %v978
    %v995 = vmul.f32 %v569, %v979
    %v996 = vmul.f32 %v570, %v980
    %v997 = vmul.f32 %v571, %v981
    %v998 = vmul.f32 %v572, %v982
    %v999 = vmul.f32 %v573, %v983
    %v1000 = vmul.f32 %v574, %v984
    %v1001 = vmul.f32 %v575, %v985
    %v1002 = vsub.f32 2.0, %v986
    %v1003 = vsub.f32 2.0, %v987
    %v1004 = vsub.f32 2.0, %v988
    %v1005 = vsub.f32 2.0, %v989
    %v1006 = vsub.f32 2.0, %v990
    %v1007 = vsub.f32 2.0, %v991
    %v1008 = vsub.f32 2.0, %v992
    %v1009 = vsub.f32 2.0, %v993
    %v1010 = vsub.f32 2.0, %v994
    %v1011 = vsub.f32 2.0, %v995
    %v1012 = vsub.f32 2.0, %v996
    %v1013 = vsub.f32 2.0, %v997
    %v1014 = vsub.f32 2.0, %v998
    %v1015 = vsub.f32 2.0, %v999
    %v1016 = vsub.f32 2.0, %v1000
    %v1017 = vsub.f32 2.0, %v1001
    %v1018 = vmul.f32 %v970, %v1002
    %v1019 = vmul.f32 %v971, %v1003
    %v1020 = vmul.f32 %v972, %v1004
    %v1021 = vmul.f32 %v973, %v1005
    %v1022 = vmul.f32 %v974, %v1006
    %v1023 = vmul.f32 %v975, %v1007
    %v1024 = vmul.f32 %v976, %v1008
    %v1025 = vmul.f32 %v977, %v1009
    %v1026 = vmul.f32 %v978, %v1010
    %v1027 = vmul.f32 %v979, %v1011
    %v1028 = vmul.f32 %v980, %v1012
    %v1029 = vmul.f32 %v981, %v1013
    %v1030 = vmul.f32 %v982, %v1014
    %v1031 = vmul.f32 %v983, %v1015
    %v1032 = vmul.f32 %v984, %v1016
    %v1033 = vmul.f32 %v985, %v1017
    %v1034 = vld [vmem:[%s3] sm:$0xff]
    %v1035 = vld [vmem:[%s3 + $0x8] sm:$0xff]
    %v1036 = vld [vmem:[%s3 + $0x10] sm:$0xff]
    %v1037 = vld [vmem:[%s3 + $0x18] sm:$0xff]
    %v1038 = vld [vmem:[%s3 + $0x20] sm:$0xff]
    %v1039 = vld [vmem:[%s3 + $0x28] sm:$0xff]
    %v1040 = vld [vmem:[%s3 + $0x30] sm:$0xff]
    %v1041 = vld [vmem:[%s3 + $0x38] sm:$0xff]
    %v1042 = vld [vmem:[%s3 + $0x40] sm:$0xff]
    %v1043 = vld [vmem:[%s3 + $0x48] sm:$0xff]
    %v1044 = vld [vmem:[%s3 + $0x50] sm:$0xff]
    %v1045 = vld [vmem:[%s3 + $0x58] sm:$0xff]
    %v1046 = vld [vmem:[%s3 + $0x60] sm:$0xff]
    %v1047 = vld [vmem:[%s3 + $0x68] sm:$0xff]
    %v1048 = vld [vmem:[%s3 + $0x70] sm:$0xff]
    %v1049 = vld [vmem:[%s3 + $0x78] sm:$0xff]
    %1051 = vset.pattern.permute.xlu0 0
    %1052 = vperm.xlu0 %1051, %v1018
    %v1053 = vpop.permute.xlu0 %1052
    %1056 = vset.pattern.permute.xlu0 0
    %1057 = vperm.xlu0 %1056, %v1019
    %v1058 = vpop.permute.xlu0 %1057
    %1061 = vset.pattern.permute.xlu0 0
    %1062 = vperm.xlu0 %1061, %v1020
    %v1063 = vpop.permute.xlu0 %1062
    %1066 = vset.pattern.permute.xlu0 0
    %1067 = vperm.xlu0 %1066, %v1021
    %v1068 = vpop.permute.xlu0 %1067
    %1071 = vset.pattern.permute.xlu0 0
    %1072 = vperm.xlu0 %1071, %v1022
    %v1073 = vpop.permute.xlu0 %1072
    %1076 = vset.pattern.permute.xlu0 0
    %1077 = vperm.xlu0 %1076, %v1023
    %v1078 = vpop.permute.xlu0 %1077
    %1081 = vset.pattern.permute.xlu0 0
    %1082 = vperm.xlu0 %1081, %v1024
    %v1083 = vpop.permute.xlu0 %1082
    %1086 = vset.pattern.permute.xlu0 0
    %1087 = vperm.xlu0 %1086, %v1025
    %v1088 = vpop.permute.xlu0 %1087
    %1091 = vset.pattern.permute.xlu0 0
    %1092 = vperm.xlu0 %1091, %v1026
    %v1093 = vpop.permute.xlu0 %1092
    %1096 = vset.pattern.permute.xlu0 0
    %1097 = vperm.xlu0 %1096, %v1027
    %v1098 = vpop.permute.xlu0 %1097
    %1101 = vset.pattern.permute.xlu0 0
    %1102 = vperm.xlu0 %1101, %v1028
    %v1103 = vpop.permute.xlu0 %1102
    %1106 = vset.pattern.permute.xlu0 0
    %1107 = vperm.xlu0 %1106, %v1029
    %v1108 = vpop.permute.xlu0 %1107
    %1111 = vset.pattern.permute.xlu0 0
    %1112 = vperm.xlu0 %1111, %v1030
    %v1113 = vpop.permute.xlu0 %1112
    %1116 = vset.pattern.permute.xlu0 0
    %1117 = vperm.xlu0 %1116, %v1031
    %v1118 = vpop.permute.xlu0 %1117
    %1121 = vset.pattern.permute.xlu0 0
    %1122 = vperm.xlu0 %1121, %v1032
    %v1123 = vpop.permute.xlu0 %1122
    %1126 = vset.pattern.permute.xlu0 0
    %1127 = vperm.xlu0 %1126, %v1033
    %v1128 = vpop.permute.xlu0 %1127
    %v1130 = vmul.f32 %v865, %v1053
    %v1131 = vmul.f32 %v866, %v1058
    %v1132 = vmul.f32 %v867, %v1063
    %v1133 = vmul.f32 %v868, %v1068
    %v1134 = vmul.f32 %v869, %v1073
    %v1135 = vmul.f32 %v870, %v1078
    %v1136 = vmul.f32 %v871, %v1083
    %v1137 = vmul.f32 %v872, %v1088
    %v1138 = vmul.f32 %v873, %v1093
    %v1139 = vmul.f32 %v874, %v1098
    %v1140 = vmul.f32 %v875, %v1103
    %v1141 = vmul.f32 %v876, %v1108
    %v1142 = vmul.f32 %v877, %v1113
    %v1143 = vmul.f32 %v878, %v1118
    %v1144 = vmul.f32 %v879, %v1123
    %v1145 = vmul.f32 %v880, %v1128
    %v1146 = vadd.f32 %v1034, %v1130
    %v1147 = vadd.f32 %v1035, %v1131
    %v1148 = vadd.f32 %v1036, %v1132
    %v1149 = vadd.f32 %v1037, %v1133
    %v1150 = vadd.f32 %v1038, %v1134
    %v1151 = vadd.f32 %v1039, %v1135
    %v1152 = vadd.f32 %v1040, %v1136
    %v1153 = vadd.f32 %v1041, %v1137
    %v1154 = vadd.f32 %v1042, %v1138
    %v1155 = vadd.f32 %v1043, %v1139
    %v1156 = vadd.f32 %v1044, %v1140
    %v1157 = vadd.f32 %v1045, %v1141
    %v1158 = vadd.f32 %v1046, %v1142
    %v1159 = vadd.f32 %v1047, %v1143
    %v1160 = vadd.f32 %v1048, %v1144
    %v1161 = vadd.f32 %v1049, %v1145
    %1162 = vst [vmem:[%s5] sm:$0xff] %v1146
    %1163 = vst [vmem:[%s5 + $0x8] sm:$0xff] %v1147
    %1164 = vst [vmem:[%s5 + $0x10] sm:$0xff] %v1148
    %1165 = vst [vmem:[%s5 + $0x18] sm:$0xff] %v1149
    %1166 = vst [vmem:[%s5 + $0x20] sm:$0xff] %v1150
    %1167 = vst [vmem:[%s5 + $0x28] sm:$0xff] %v1151
    %1168 = vst [vmem:[%s5 + $0x30] sm:$0xff] %v1152
    %1169 = vst [vmem:[%s5 + $0x38] sm:$0xff] %v1153
    %1170 = vst [vmem:[%s5 + $0x40] sm:$0xff] %v1154
    %1171 = vst [vmem:[%s5 + $0x48] sm:$0xff] %v1155
    %1172 = vst [vmem:[%s5 + $0x50] sm:$0xff] %v1156
    %1173 = vst [vmem:[%s5 + $0x58] sm:$0xff] %v1157
    %1174 = vst [vmem:[%s5 + $0x60] sm:$0xff] %v1158
    %1175 = vst [vmem:[%s5 + $0x68] sm:$0xff] %v1159
    %1176 = vst [vmem:[%s5 + $0x70] sm:$0xff] %v1160
    %1177 = vst [vmem:[%s5 + $0x78] sm:$0xff] %v1161
    %v1178 = vld [vmem:[#allocation6] sm:$0xff]
    %v1179 = vld [vmem:[#allocation6 + $0x8] sm:$0xff]
    %v1180 = vld [vmem:[#allocation6 + $0x10] sm:$0xff]
    %v1181 = vld [vmem:[#allocation6 + $0x18] sm:$0xff]
    %v1182 = vld [vmem:[#allocation6 + $0x20] sm:$0xff]
    %v1183 = vld [vmem:[#allocation6 + $0x28] sm:$0xff]
    %v1184 = vld [vmem:[#allocation6 + $0x30] sm:$0xff]
    %v1185 = vld [vmem:[#allocation6 + $0x38] sm:$0xff]
    %v1186 = vld [vmem:[#allocation6 + $0x40] sm:$0xff]
    %v1187 = vld [vmem:[#allocation6 + $0x48] sm:$0xff]
    %v1188 = vld [vmem:[#allocation6 + $0x50] sm:$0xff]
    %v1189 = vld [vmem:[#allocation6 + $0x58] sm:$0xff]
    %v1190 = vld [vmem:[#allocation6 + $0x60] sm:$0xff]
    %v1191 = vld [vmem:[#allocation6 + $0x68] sm:$0xff]
    %v1192 = vld [vmem:[#allocation6 + $0x70] sm:$0xff]
    %v1193 = vld [vmem:[#allocation6 + $0x78] sm:$0xff]
    %v1194 = vsub.f32 %v1178, %v304
    %v1195 = vsub.f32 %v1179, %v305
    %v1196 = vsub.f32 %v1180, %v306
    %v1197 = vsub.f32 %v1181, %v307
    %v1198 = vsub.f32 %v1182, %v308
    %v1199 = vsub.f32 %v1183, %v309
    %v1200 = vsub.f32 %v1184, %v310
    %v1201 = vsub.f32 %v1185, %v311
    %v1202 = vsub.f32 %v1186, %v312
    %v1203 = vsub.f32 %v1187, %v313
    %v1204 = vsub.f32 %v1188, %v314
    %v1205 = vsub.f32 %v1189, %v315
    %v1206 = vsub.f32 %v1190, %v316
    %v1207 = vsub.f32 %v1191, %v317
    %v1208 = vsub.f32 %v1192, %v318
    %v1209 = vsub.f32 %v1193, %v319
    %v1210 = vmul.f32 %v1194, 1.442695
    %v1211 = vpow.pop %v1210
    %v1212 = vmul.f32 %v1195, 1.442695
    %v1213 = vpow.pop %v1212
    %v1214 = vmul.f32 %v1196, 1.442695
    %v1215 = vpow.pop %v1214
    %v1216 = vmul.f32 %v1197, 1.442695
    %v1217 = vpow.pop %v1216
    %v1218 = vmul.f32 %v1198, 1.442695
    %v1219 = vpow.pop %v1218
    %v1220 = vmul.f32 %v1199, 1.442695
    %v1221 = vpow.pop %v1220
    %v1222 = vmul.f32 %v1200, 1.442695
    %v1223 = vpow.pop %v1222
    %v1224 = vmul.f32 %v1201, 1.442695
    %v1225 = vpow.pop %v1224
    %v1226 = vmul.f32 %v1202, 1.442695
    %v1227 = vpow.pop %v1226
    %v1228 = vmul.f32 %v1203, 1.442695
    %v1229 = vpow.pop %v1228
    %v1230 = vmul.f32 %v1204, 1.442695
    %v1231 = vpow.pop %v1230
    %v1232 = vmul.f32 %v1205, 1.442695
    %v1233 = vpow.pop %v1232
    %v1234 = vmul.f32 %v1206, 1.442695
    %v1235 = vpow.pop %v1234
    %v1236 = vmul.f32 %v1207, 1.442695
    %v1237 = vpow.pop %v1236
    %v1238 = vmul.f32 %v1208, 1.442695
    %v1239 = vpow.pop %v1238
    %v1240 = vmul.f32 %v1209, 1.442695
    %v1241 = vpow.pop %v1240
    %v1242 = vmul.f32 %v1211, %v1018
    %v1243 = vmul.f32 %v1213, %v1019
    %v1244 = vmul.f32 %v1215, %v1020
    %v1245 = vmul.f32 %v1217, %v1021
    %v1246 = vmul.f32 %v1219, %v1022
    %v1247 = vmul.f32 %v1221, %v1023
    %v1248 = vmul.f32 %v1223, %v1024
    %v1249 = vmul.f32 %v1225, %v1025
    %v1250 = vmul.f32 %v1227, %v1026
    %v1251 = vmul.f32 %v1229, %v1027
    %v1252 = vmul.f32 %v1231, %v1028
    %v1253 = vmul.f32 %v1233, %v1029
    %v1254 = vmul.f32 %v1235, %v1030
    %v1255 = vmul.f32 %v1237, %v1031
    %v1256 = vmul.f32 %v1239, %v1032
    %v1257 = vmul.f32 %v1241, %v1033
    %v1258 = vld [vmem:[#allocation5] sm:$0xf]
    %v1259 = vld [vmem:[#allocation5 + $0x4] sm:$0xf]
    %v1260 = vld [vmem:[#allocation5 + $0x8] sm:$0xf]
    %v1261 = vld [vmem:[#allocation5 + $0xc] sm:$0xf]
    %v1262 = vld [vmem:[#allocation5 + $0x10] sm:$0xf]
    %v1263 = vld [vmem:[#allocation5 + $0x14] sm:$0xf]
    %v1264 = vld [vmem:[#allocation5 + $0x18] sm:$0xf]
    %v1265 = vld [vmem:[#allocation5 + $0x1c] sm:$0xf]
    %v1266 = vld [vmem:[#allocation5 + $0x20] sm:$0xf]
    %v1267 = vld [vmem:[#allocation5 + $0x24] sm:$0xf]
    %v1268 = vld [vmem:[#allocation5 + $0x28] sm:$0xf]
    %v1269 = vld [vmem:[#allocation5 + $0x2c] sm:$0xf]
    %v1270 = vld [vmem:[#allocation5 + $0x30] sm:$0xf]
    %v1271 = vld [vmem:[#allocation5 + $0x34] sm:$0xf]
    %v1272 = vld [vmem:[#allocation5 + $0x38] sm:$0xf]
    %v1273 = vld [vmem:[#allocation5 + $0x3c] sm:$0xf]
    %v1274 = vunpack.c.l.bf16 %v1258
    %v1275 = vunpack.c.l.bf16 %v1259
    %v1276 = vunpack.c.l.bf16 %v1260
    %v1277 = vunpack.c.l.bf16 %v1261
    %v1278 = vunpack.c.l.bf16 %v1262
    %v1279 = vunpack.c.l.bf16 %v1263
    %v1280 = vunpack.c.l.bf16 %v1264
    %v1281 = vunpack.c.l.bf16 %v1265
    %v1282 = vunpack.c.l.bf16 %v1266
    %v1283 = vunpack.c.l.bf16 %v1267
    %v1284 = vunpack.c.l.bf16 %v1268
    %v1285 = vunpack.c.l.bf16 %v1269
    %v1286 = vunpack.c.l.bf16 %v1270
    %v1287 = vunpack.c.l.bf16 %v1271
    %v1288 = vunpack.c.l.bf16 %v1272
    %v1289 = vunpack.c.l.bf16 %v1273
    %1291 = vset.pattern.permute.xlu0 0
    %1292 = vperm.xlu0 %1291, %v1242
    %v1293 = vpop.permute.xlu0 %1292
    %1296 = vset.pattern.permute.xlu0 0
    %1297 = vperm.xlu0 %1296, %v1243
    %v1298 = vpop.permute.xlu0 %1297
    %1301 = vset.pattern.permute.xlu0 0
    %1302 = vperm.xlu0 %1301, %v1244
    %v1303 = vpop.permute.xlu0 %1302
    %1306 = vset.pattern.permute.xlu0 0
    %1307 = vperm.xlu0 %1306, %v1245
    %v1308 = vpop.permute.xlu0 %1307
    %1311 = vset.pattern.permute.xlu0 0
    %1312 = vperm.xlu0 %1311, %v1246
    %v1313 = vpop.permute.xlu0 %1312
    %1316 = vset.pattern.permute.xlu0 0
    %1317 = vperm.xlu0 %1316, %v1247
    %v1318 = vpop.permute.xlu0 %1317
    %1321 = vset.pattern.permute.xlu0 0
    %1322 = vperm.xlu0 %1321, %v1248
    %v1323 = vpop.permute.xlu0 %1322
    %1326 = vset.pattern.permute.xlu0 0
    %1327 = vperm.xlu0 %1326, %v1249
    %v1328 = vpop.permute.xlu0 %1327
    %1331 = vset.pattern.permute.xlu0 0
    %1332 = vperm.xlu0 %1331, %v1250
    %v1333 = vpop.permute.xlu0 %1332
    %1336 = vset.pattern.permute.xlu0 0
    %1337 = vperm.xlu0 %1336, %v1251
    %v1338 = vpop.permute.xlu0 %1337
    %1341 = vset.pattern.permute.xlu0 0
    %1342 = vperm.xlu0 %1341, %v1252
    %v1343 = vpop.permute.xlu0 %1342
    %1346 = vset.pattern.permute.xlu0 0
    %1347 = vperm.xlu0 %1346, %v1253
    %v1348 = vpop.permute.xlu0 %1347
    %1351 = vset.pattern.permute.xlu0 0
    %1352 = vperm.xlu0 %1351, %v1254
    %v1353 = vpop.permute.xlu0 %1352
    %1356 = vset.pattern.permute.xlu0 0
    %1357 = vperm.xlu0 %1356, %v1255
    %v1358 = vpop.permute.xlu0 %1357
    %1361 = vset.pattern.permute.xlu0 0
    %1362 = vperm.xlu0 %1361, %v1256
    %v1363 = vpop.permute.xlu0 %1362
    %1366 = vset.pattern.permute.xlu0 0
    %1367 = vperm.xlu0 %1366, %v1257
    %v1368 = vpop.permute.xlu0 %1367
    %v1370 = vmul.f32 %v1274, %v1293
    %v1371 = vmul.f32 %v1275, %v1298
    %v1372 = vmul.f32 %v1276, %v1303
    %v1373 = vmul.f32 %v1277, %v1308
    %v1374 = vmul.f32 %v1278, %v1313
    %v1375 = vmul.f32 %v1279, %v1318
    %v1376 = vmul.f32 %v1280, %v1323
    %v1377 = vmul.f32 %v1281, %v1328
    %v1378 = vmul.f32 %v1282, %v1333
    %v1379 = vmul.f32 %v1283, %v1338
    %v1380 = vmul.f32 %v1284, %v1343
    %v1381 = vmul.f32 %v1285, %v1348
    %v1382 = vmul.f32 %v1286, %v1353
    %v1383 = vmul.f32 %v1287, %v1358
    %v1384 = vmul.f32 %v1288, %v1363
    %v1385 = vmul.f32 %v1289, %v1368
    %1386 = vst [vmem:[%s6] sm:$0xff] %v1370
    %1387 = vst [vmem:[%s6 + $0x8] sm:$0xff] %v1371
    %1388 = vst [vmem:[%s6 + $0x10] sm:$0xff] %v1372
    %1389 = vst [vmem:[%s6 + $0x18] sm:$0xff] %v1373
    %1390 = vst [vmem:[%s6 + $0x20] sm:$0xff] %v1374
    %1391 = vst [vmem:[%s6 + $0x28] sm:$0xff] %v1375
    %1392 = vst [vmem:[%s6 + $0x30] sm:$0xff] %v1376
    %1393 = vst [vmem:[%s6 + $0x38] sm:$0xff] %v1377
    %1394 = vst [vmem:[%s6 + $0x40] sm:$0xff] %v1378
    %1395 = vst [vmem:[%s6 + $0x48] sm:$0xff] %v1379
    %1396 = vst [vmem:[%s6 + $0x50] sm:$0xff] %v1380
    %1397 = vst [vmem:[%s6 + $0x58] sm:$0xff] %v1381
    %1398 = vst [vmem:[%s6 + $0x60] sm:$0xff] %v1382
    %1399 = vst [vmem:[%s6 + $0x68] sm:$0xff] %v1383
    %1400 = vst [vmem:[%s6 + $0x70] sm:$0xff] %v1384
    %1401 = vst [vmem:[%s6 + $0x78] sm:$0xff] %v1385
  $region29: #{transformer_layer.4} parent=0 // pred_fallthru
    _
  // Predicated region
  $region30: #{transformer_layer.4} parent=0 // pred_check
    _
  $region31: #{transformer_layer.4} parent=0 // pred_check_branch
    %1403 = sbr.rel (0) target = $region33
  $region32: #{transformer_layer.4} parent=0 // pred_region
    _
  $region33: #{transformer_layer.4} parent=0 // pred_fallthru
    _
  // Predicated region
  $region34: #{transformer_layer.4} parent=0 // pred_check
    _
  $region35: #{transformer_layer.4} parent=0 // pred_check_branch
    %1405 = sbr.rel (0) target = $region37
  $region36: #{transformer_layer.4} parent=0 // pred_region
    _
  $region37: #{transformer_layer.4} parent=0 // pred_fallthru
    _
  // Predicated region
  $region38: #{transformer_layer.4} parent=0 // pred_check
    _
  $region39: #{transformer_layer.4} parent=0 // pred_check_branch
    %1407 = sbr.rel (0) target = $region41
  $region40: #{transformer_layer.4} parent=0 // pred_region
    _
  $region41: #{transformer_layer.4} parent=0 // pred_fallthru
    _
  // Predicated region
  $region42: #{transformer_layer.4} parent=0 // pred_check
    _
  $region43: #{transformer_layer.4} parent=0 // pred_check_branch
    %1409 = sbr.rel (0) target = $region45
  $region44: #{transformer_layer.4} parent=0 // pred_region
    _
  $region45: #{transformer_layer.4} parent=0 // pred_fallthru
    _

</llo_original>
